<compile_context>
chip_gen: v7x
topology: tpu7x:2x2x1
jax: 0.10.0
libtpu: 0.0.40
codegen_flags: <defaults>
</compile_context>

<pallas_src>
import functools

import jax
import jax.numpy as jnp
from jax import lax
from jax.experimental import pallas as pl
from jax.experimental.pallas import tpu as pltpu


# ----------------------------------------------------------------------------
# Activations
# ----------------------------------------------------------------------------
def _act(name, x):
    if name == "sin":
        return jnp.sin(x)
    if name == "tanh":
        return jnp.tanh(x)
    if name == "gelu":
        return jax.nn.gelu(x, approximate=False)  # matches torch.nn.GELU default
    raise ValueError(name)


# ----------------------------------------------------------------------------
# Kernel  (features-on-sublanes, batch-on-lanes, vreg-resident column chunks)
# ----------------------------------------------------------------------------
def _pinn_ff_kernel(num_layer, init_act, subseq_act, chunk_n, num_chunks,
                    mxu_dtype, *refs):
    # refs = (x_ref, t_ref, rho_ref, w0, b0, w1, b1, ..., out_ref)
    x_ref, t_ref, rho_ref = refs[0], refs[1], refs[2]
    out_ref = refs[-1]
    param_refs = refs[3:-1]
    out_dim = out_ref.shape[0]

    # -- Hoisted weight loads/casts: once per grid step, NOT per chunk --------
    w0 = param_refs[0][...].astype(jnp.float32)     # (hidden, 3)
    b0 = param_refs[1][...].astype(jnp.float32)     # (hidden, 1)
    w0x, w0t, w0r = w0[:, 0:1], w0[:, 1:2], w0[:, 2:3]

    hidden_weights = []
    for layer in range(1, num_layer):
        w = param_refs[2 * layer][...]
        b = param_refs[2 * layer + 1][...].astype(jnp.float32)
        is_last = layer == num_layer - 1
        if is_last and out_dim == 1:
            # final 1-row layer stays f32: handled on the VPU/XLU (no MXU push)
            hidden_weights.append((jnp.reshape(w.astype(jnp.float32), (-1, 1)), b))
        else:
            # MXU operands in mxu_dtype (bf16 by default), f32 accumulation
            hidden_weights.append((w.astype(mxu_dtype), b))

    def chunk_body(c, carry):
        col0 = pl.multiple_of(c * chunk_n, chunk_n)
        cols = pl.ds(col0, chunk_n)

        xv = x_ref[:, cols].astype(jnp.float32)     # (1, chunk_n)
        tv = t_ref[:, cols].astype(jnp.float32)
        rv = rho_ref[:, cols].astype(jnp.float32)

        # Layer 0: fused "concat + Linear" as rank-1 VPU products (K=3 << MXU).
        h = w0x * xv + w0t * tv + w0r * rv + b0     # (hidden, chunk_n), f32
        if num_layer > 1:
            h = _act(init_act, h)

        # Remaining layers: W @ h + b.
        for layer in range(1, num_layer):
            wv, bv = hidden_weights[layer - 1]
            is_last = layer == num_layer - 1
            if is_last and out_dim == 1:
                # (1,hidden)@(hidden,chunk): weighted sublane reduction on
                # VPU/XLU instead of a 1-row MXU matmul.
                h = jnp.sum(wv * h, axis=0, keepdims=True) + bv
            else:
                h = jnp.dot(wv, h.astype(mxu_dtype),
                            preferred_element_type=jnp.float32) + bv
            if not is_last:                         # final layer has no activation
                h = _act(subseq_act, h)

        out_ref[:, cols] = h.astype(out_ref.dtype)  # lane-dense store
        return carry

    lax.fori_loop(0, num_chunks, chunk_body, 0, unroll=True)


# ----------------------------------------------------------------------------
# Tile / chunk selection
# ----------------------------------------------------------------------------
def _select_tiling(n, tile_n, chunk_n):
    """Pick (tile, chunk): multiples of 128, chunk divides tile, and keep at
    least two grid steps when N allows it (v7x has 2 TCs on the parallel axis)."""
    tile = max(128, (int(tile_n) // 128) * 128)
    if n >= 256:
        half = (((n + 1) // 2) + 127) // 128 * 128   # balanced 2-way split
        tile = min(tile, half)
    else:
        tile = min(tile, 128)
    chunk = max(128, min((int(chunk_n) // 128) * 128, tile))
    while tile % chunk != 0:
        chunk -= 128
    return tile, chunk


# ----------------------------------------------------------------------------
# Wrapper
# ----------------------------------------------------------------------------
def pinn_ff_forward(x, t, rho, params, *, init_act="sin", subseq_act="tanh",
                    tile_n=4096, chunk_n=512, mxu_dtype=jnp.bfloat16):
    """Run the PINNff forward pass with a fused Pallas kernel.

    x, t, rho: (N, 1) (or (N,)) arrays.
    params: list of (W, b) pairs in PyTorch layout: W (out, in), b (out, 1).
    mxu_dtype: operand dtype for the hidden-layer MXU matmuls (accumulation is
               always f32). Use jnp.float32 for bit-conservative numerics.
    Returns (N, out_dim).
    """
    num_layer = len(params)
    assert params[0][0].shape[1] == 3, "first layer expects concat(x, t, rho)"
    out_dim = params[-1][0].shape[0]
    dtype = x.dtype

    # Lane-dense layout: batch along the lane axis. (N,1) -> (1,N) is a reshape.
    xr = jnp.reshape(x, (1, -1))
    tr = jnp.reshape(t, (1, -1))
    rr = jnp.reshape(rho, (1, -1))
    N = xr.shape[1]

    tile, chunk = _select_tiling(N, tile_n, chunk_n)
    num_chunks = tile // chunk

    # cdiv grid + zero padding for ragged batch sizes (padded cols sliced off).
    grid_n = pl.cdiv(N, tile)
    n_pad = grid_n * tile
    if n_pad != N:
        pad = ((0, 0), (0, n_pad - N))
        xr = jnp.pad(xr, pad)
        tr = jnp.pad(tr, pad)
        rr = jnp.pad(rr, pad)

    kernel = functools.partial(_pinn_ff_kernel, num_layer, init_act, subseq_act,
                               chunk, num_chunks, mxu_dtype)

    # Flatten params; grid-invariant blocks (index (0,0) every step) so Mosaic
    # keeps them resident in VMEM instead of re-streaming per grid step.
    flat_params = []
    param_specs = []
    for (w, b) in params:
        flat_params.extend([w, b])
        param_specs.append(pl.BlockSpec(w.shape, lambda i: (0, 0)))
        param_specs.append(pl.BlockSpec(b.shape, lambda i: (0, 0)))

    in_specs = (
        [pl.BlockSpec((1, tile), lambda i: (0, i))] * 3   # x, t, rho rows
        + param_specs
    )
    out_spec = pl.BlockSpec((out_dim, tile), lambda i: (0, i))

    # Advisory cost estimate for the XLA scheduler.
    dims = [params[0][0].shape[1]] + [w.shape[0] for (w, _) in params]
    flops = int(2 * n_pad * sum(dims[i] * dims[i + 1] for i in range(num_layer)))
    transcendentals = int(n_pad * sum(dims[1:num_layer]))
    bytes_accessed = int(
        4 * n_pad * (3 + out_dim)
        + sum(int(w.size) * 4 + int(b.size) * 4 for (w, b) in params)
    )

    out = pl.pallas_call(
        kernel,
        out_shape=jax.ShapeDtypeStruct((out_dim, n_pad), dtype),
        grid_spec=pltpu.PrefetchScalarGridSpec(
            num_scalar_prefetch=0,
            grid=(grid_n,),
            in_specs=in_specs,
            out_specs=out_spec,
        ),
        compiler_params=pltpu.CompilerParams(
            dimension_semantics=("parallel",),   # batch axis -> megacore on v7x
        ),
        cost_estimate=pl.CostEstimate(
            flops=flops,
            transcendentals=transcendentals,
            bytes_accessed=bytes_accessed,
        ),
    )(xr, tr, rr, *flat_params)

    return out[:, :N].T  # back to (N, out_dim); cheap (out_dim is tiny)


# ----------------------------------------------------------------------------
# Deterministic parameter init (mimics nn.Linear's U(-1/sqrt(fan_in), +..)),
# PyTorch-native layout: W (out, in), b (out, 1).
# ----------------------------------------------------------------------------
def init_params(key, in_dim, hidden_dim, out_dim, num_layer):
    dims = [in_dim] + [hidden_dim] * (num_layer - 1) + [out_dim]
    params = []
    for li in range(num_layer):
        fan_in, fan_out = dims[li], dims[li + 1]
        key, kw, kb = jax.random.split(key, 3)
        bound = 1.0 / jnp.sqrt(fan_in)
        w = jax.random.uniform(kw, (fan_out, fan_in), jnp.float32, -bound, bound)
        b = jax.random.uniform(kb, (fan_out, 1), jnp.float32, -bound, bound)
        params.append((w, b))
    return params


# ----------------------------------------------------------------------------
# Pure-JAX reference (matches the PyTorch module).  mxu_dtype mirrors the
# kernel's operand cast (layer 0 and the 1-row final layer stay f32).
# ----------------------------------------------------------------------------
def pinn_ff_ref(x, t, rho, params, init_act="sin", subseq_act="tanh",
                mxu_dtype=jnp.float32):
    h = jnp.concatenate(
        (jnp.reshape(x, (-1, 1)), jnp.reshape(t, (-1, 1)), jnp.reshape(rho, (-1, 1))),
        axis=-1).astype(jnp.float32)                          # (N, 3)
    num_layer = len(params)
    out_dim = params[-1][0].shape[0]
    for li, (w, b) in enumerate(params):
        is_last = li == num_layer - 1
        keep_f32 = (li == 0) or (is_last and out_dim == 1)
        cdt = jnp.float32 if keep_f32 else mxu_dtype
        h = jnp.dot(h.astype(cdt), w.T.astype(cdt),
                    preferred_element_type=jnp.float32) + b.reshape(1, -1)
        if not is_last:
            h = _act(init_act if li == 0 else subseq_act, h)
    return h


if __name__ == "__main__":
    # Small config: in_dim=3 (x, t, rho), hidden=32, out_dim=1, num_layer=4.
    in_dim, hidden_dim, out_dim, num_layer = 3, 32, 1, 4
    N = 1000  # deliberately NOT a multiple of the tile to exercise cdiv/pad

    key = jax.random.PRNGKey(0)
    kx, kt, kr, kp = jax.random.split(key, 4)
    x = jax.random.normal(kx, (N, 1), jnp.float32)
    t = jax.random.normal(kt, (N, 1), jnp.float32)
    rho = jax.random.normal(kr, (N, 1), jnp.float32)

    params = init_params(kp, in_dim, hidden_dim, out_dim, num_layer)

    ref_f32 = pinn_ff_ref(x, t, rho, params)

    # (1) f32-MXU path: exercises multi-chunk inner loop + 2-step grid; tight check.
    out_f32 = pinn_ff_forward(x, t, rho, params, tile_n=512, chunk_n=128,
                              mxu_dtype=jnp.float32)
    out_f32 = jax.block_until_ready(out_f32)
    assert out_f32.shape == (N, out_dim)
    assert jnp.allclose(out_f32, ref_f32, atol=1e-4, rtol=1e-4), "f32 mismatch"

    # (2) default path: bf16 MXU operands + f32 accumulation, big tile.
    out_bf16 = pinn_ff_forward(x, t, rho, params)   # tile_n=4096 (capped), bf16
    out_bf16 = jax.block_until_ready(out_bf16)
    assert out_bf16.shape == (N, out_dim)
    ref_bf16 = pinn_ff_ref(x, t, rho, params, mxu_dtype=jnp.bfloat16)
    assert jnp.allclose(out_bf16, ref_bf16, atol=2e-3, rtol=2e-3), "bf16 kernel mismatch"
    # sanity vs full-f32 reference (PINNs are precision-sensitive; keep coarse)
    assert jnp.allclose(out_bf16, ref_f32, atol=5e-2, rtol=5e-2), "bf16 drift too large"

    print("KERNEL_OK")
</pallas_src>

<mosaic_0001>
module attributes {stable_mosaic.version = 11 : i64} {
  func.func @_pinn_ff_kernel(%arg0: i32, %arg1: memref<1x512xf32, #tpu.memory_space<vmem>>, %arg2: memref<1x512xf32, #tpu.memory_space<vmem>>, %arg3: memref<1x512xf32, #tpu.memory_space<vmem>>, %arg4: memref<32x3xf32, #tpu.memory_space<vmem>>, %arg5: memref<32x1xf32, #tpu.memory_space<vmem>>, %arg6: memref<32x32xf32, #tpu.memory_space<vmem>>, %arg7: memref<32x1xf32, #tpu.memory_space<vmem>>, %arg8: memref<32x32xf32, #tpu.memory_space<vmem>>, %arg9: memref<32x1xf32, #tpu.memory_space<vmem>>, %arg10: memref<1x32xf32, #tpu.memory_space<vmem>>, %arg11: memref<1x1xf32, #tpu.memory_space<vmem>>, %arg12: memref<1x512xf32, #tpu.memory_space<vmem>>) attributes {dimension_semantics = [#tpu.dimension_semantics<parallel>], iteration_bounds = array<i64: 2>, scalar_prefetch = 0 : i64, scratch_operands = 0 : i64, tpu.core_type = #tpu.core_type<tc>, window_params = [{transform_indices = @transform_0, window_bounds = array<i64: 1, 512>}, {transform_indices = @transform_1, window_bounds = array<i64: 1, 512>}, {transform_indices = @transform_2, window_bounds = array<i64: 1, 512>}, {pipeline_mode = #tpu.pipeline_mode<synchronous>, transform_indices = @transform_3, window_bounds = array<i64: 32, 3>}, {pipeline_mode = #tpu.pipeline_mode<synchronous>, transform_indices = @transform_4, window_bounds = array<i64: 32, 1>}, {pipeline_mode = #tpu.pipeline_mode<synchronous>, transform_indices = @transform_5, window_bounds = array<i64: 32, 32>}, {pipeline_mode = #tpu.pipeline_mode<synchronous>, transform_indices = @transform_6, window_bounds = array<i64: 32, 1>}, {pipeline_mode = #tpu.pipeline_mode<synchronous>, transform_indices = @transform_7, window_bounds = array<i64: 32, 32>}, {pipeline_mode = #tpu.pipeline_mode<synchronous>, transform_indices = @transform_8, window_bounds = array<i64: 32, 1>}, {pipeline_mode = #tpu.pipeline_mode<synchronous>, transform_indices = @transform_9, window_bounds = array<i64: 1, 32>}, {pipeline_mode = #tpu.pipeline_mode<synchronous>, transform_indices = @transform_10, window_bounds = array<i64: 1, 1>}, {transform_indices = @transform_11, window_bounds = array<i64: 1, 512>}]} {
    %c0 = arith.constant 0 : index
    %c0_0 = arith.constant 0 : index
    %0 = vector.load %arg4[%c0, %c0_0] : memref<32x3xf32, #tpu.memory_space<vmem>>, vector<32x3xf32>
    %c0_1 = arith.constant 0 : index
    %c0_2 = arith.constant 0 : index
    %1 = vector.load %arg5[%c0_1, %c0_2] : memref<32x1xf32, #tpu.memory_space<vmem>>, vector<32x1xf32>
    %2 = vector.extract_strided_slice %0 {offsets = [0, 0], sizes = [32, 1], strides = [1, 1]} : vector<32x3xf32> to vector<32x1xf32>
    %3 = vector.extract_strided_slice %0 {offsets = [0, 1], sizes = [32, 1], strides = [1, 1]} : vector<32x3xf32> to vector<32x1xf32>
    %4 = vector.extract_strided_slice %0 {offsets = [0, 2], sizes = [32, 1], strides = [1, 1]} : vector<32x3xf32> to vector<32x1xf32>
    %c0_3 = arith.constant 0 : index
    %c0_4 = arith.constant 0 : index
    %5 = vector.load %arg6[%c0_3, %c0_4] : memref<32x32xf32, #tpu.memory_space<vmem>>, vector<32x32xf32>
    %c0_5 = arith.constant 0 : index
    %c0_6 = arith.constant 0 : index
    %6 = vector.load %arg7[%c0_5, %c0_6] : memref<32x1xf32, #tpu.memory_space<vmem>>, vector<32x1xf32>
    %c0_7 = arith.constant 0 : index
    %c0_8 = arith.constant 0 : index
    %7 = vector.load %arg8[%c0_7, %c0_8] : memref<32x32xf32, #tpu.memory_space<vmem>>, vector<32x32xf32>
    %c0_9 = arith.constant 0 : index
    %c0_10 = arith.constant 0 : index
    %8 = vector.load %arg9[%c0_9, %c0_10] : memref<32x1xf32, #tpu.memory_space<vmem>>, vector<32x1xf32>
    %c0_11 = arith.constant 0 : index
    %c0_12 = arith.constant 0 : index
    %9 = vector.load %arg10[%c0_11, %c0_12] : memref<1x32xf32, #tpu.memory_space<vmem>>, vector<1x32xf32>
    %c0_13 = arith.constant 0 : index
    %c0_14 = arith.constant 0 : index
    %10 = vector.load %arg11[%c0_13, %c0_14] : memref<1x1xf32, #tpu.memory_space<vmem>>, vector<1x1xf32>
    %11 = vector.shape_cast %9 : vector<1x32xf32> to vector<32x1xf32>
    %c0_i32 = arith.constant 0 : i32
    %c128_i32 = arith.constant 128 : i32
    %12 = arith.muli %c0_i32, %c128_i32 : i32
    %13 = tpu.assume_multiple %12, 128 : i32
    %c0_15 = arith.constant 0 : index
    %14 = arith.index_cast %13 : i32 to index
    %15 = vector.load %arg1[%c0_15, %14] : memref<1x512xf32, #tpu.memory_space<vmem>>, vector<1x128xf32>
    %c0_16 = arith.constant 0 : index
    %16 = arith.index_cast %13 : i32 to index
    %17 = vector.load %arg2[%c0_16, %16] : memref<1x512xf32, #tpu.memory_space<vmem>>, vector<1x128xf32>
    %c0_17 = arith.constant 0 : index
    %18 = arith.index_cast %13 : i32 to index
    %19 = vector.load %arg3[%c0_17, %18] : memref<1x512xf32, #tpu.memory_space<vmem>>, vector<1x128xf32>
    %20 = vector.broadcast %2 : vector<32x1xf32> to vector<32x128xf32>
    %21 = vector.broadcast %15 : vector<1x128xf32> to vector<32x128xf32>
    %22 = arith.mulf %20, %21 : vector<32x128xf32>
    %23 = vector.broadcast %3 : vector<32x1xf32> to vector<32x128xf32>
    %24 = vector.broadcast %17 : vector<1x128xf32> to vector<32x128xf32>
    %25 = arith.mulf %23, %24 : vector<32x128xf32>
    %26 = arith.addf %22, %25 : vector<32x128xf32>
    %27 = vector.broadcast %4 : vector<32x1xf32> to vector<32x128xf32>
    %28 = vector.broadcast %19 : vector<1x128xf32> to vector<32x128xf32>
    %29 = arith.mulf %27, %28 : vector<32x128xf32>
    %30 = arith.addf %26, %29 : vector<32x128xf32>
    %31 = vector.broadcast %1 : vector<32x1xf32> to vector<32x128xf32>
    %32 = arith.addf %30, %31 : vector<32x128xf32>
    %33 = math.sin %32 : vector<32x128xf32>
    %cst = arith.constant dense<0.000000e+00> : vector<32x128xf32>
    %34 = tpu.matmul %5, %33, %cst {dimension_numbers = #tpu.dot_dimension_numbers<[1], [0], [0], [1], [0, 0, 1, 1], [], []>} : vector<32x32xf32>, vector<32x128xf32>, vector<32x128xf32> -> vector<32x128xf32>
    %35 = vector.broadcast %6 : vector<32x1xf32> to vector<32x128xf32>
    %36 = arith.addf %34, %35 : vector<32x128xf32>
    %37 = math.tanh %36 : vector<32x128xf32>
    %cst_18 = arith.constant dense<0.000000e+00> : vector<32x128xf32>
    %38 = tpu.matmul %7, %37, %cst_18 {dimension_numbers = #tpu.dot_dimension_numbers<[1], [0], [0], [1], [0, 0, 1, 1], [], []>} : vector<32x32xf32>, vector<32x128xf32>, vector<32x128xf32> -> vector<32x128xf32>
    %39 = vector.broadcast %8 : vector<32x1xf32> to vector<32x128xf32>
    %40 = arith.addf %38, %39 : vector<32x128xf32>
    %41 = math.tanh %40 : vector<32x128xf32>
    %42 = vector.broadcast %11 : vector<32x1xf32> to vector<32x128xf32>
    %43 = arith.mulf %42, %41 : vector<32x128xf32>
    %cst_19 = arith.constant dense<0.000000e+00> : vector<128xf32>
    %44 = vector.multi_reduction <add>, %43, %cst_19 [0] : vector<32x128xf32> to vector<128xf32>
    %45 = vector.shape_cast %44 : vector<128xf32> to vector<1x128xf32>
    %46 = vector.broadcast %10 : vector<1x1xf32> to vector<1x128xf32>
    %47 = arith.addf %45, %46 : vector<1x128xf32>
    %c0_20 = arith.constant 0 : index
    %48 = arith.index_cast %13 : i32 to index
    %49 = vector.load %arg12[%c0_20, %48] : memref<1x512xf32, #tpu.memory_space<vmem>>, vector<1x128xf32>
    tpu.vector_store %arg12[%c0_20, %48], %47 {strides = array<i32>} : memref<1x512xf32, #tpu.memory_space<vmem>>, vector<1x128xf32>,
    %c1_i32 = arith.constant 1 : i32
    %c128_i32_21 = arith.constant 128 : i32
    %50 = arith.muli %c1_i32, %c128_i32_21 : i32
    %51 = tpu.assume_multiple %50, 128 : i32
    %c0_22 = arith.constant 0 : index
    %52 = arith.index_cast %51 : i32 to index
    %53 = vector.load %arg1[%c0_22, %52] : memref<1x512xf32, #tpu.memory_space<vmem>>, vector<1x128xf32>
    %c0_23 = arith.constant 0 : index
    %54 = arith.index_cast %51 : i32 to index
    %55 = vector.load %arg2[%c0_23, %54] : memref<1x512xf32, #tpu.memory_space<vmem>>, vector<1x128xf32>
    %c0_24 = arith.constant 0 : index
    %56 = arith.index_cast %51 : i32 to index
    %57 = vector.load %arg3[%c0_24, %56] : memref<1x512xf32, #tpu.memory_space<vmem>>, vector<1x128xf32>
    %58 = vector.broadcast %2 : vector<32x1xf32> to vector<32x128xf32>
    %59 = vector.broadcast %53 : vector<1x128xf32> to vector<32x128xf32>
    %60 = arith.mulf %58, %59 : vector<32x128xf32>
    %61 = vector.broadcast %3 : vector<32x1xf32> to vector<32x128xf32>
    %62 = vector.broadcast %55 : vector<1x128xf32> to vector<32x128xf32>
    %63 = arith.mulf %61, %62 : vector<32x128xf32>
    %64 = arith.addf %60, %63 : vector<32x128xf32>
    %65 = vector.broadcast %4 : vector<32x1xf32> to vector<32x128xf32>
    %66 = vector.broadcast %57 : vector<1x128xf32> to vector<32x128xf32>
    %67 = arith.mulf %65, %66 : vector<32x128xf32>
    %68 = arith.addf %64, %67 : vector<32x128xf32>
    %69 = vector.broadcast %1 : vector<32x1xf32> to vector<32x128xf32>
    %70 = arith.addf %68, %69 : vector<32x128xf32>
    %71 = math.sin %70 : vector<32x128xf32>
    %cst_25 = arith.constant dense<0.000000e+00> : vector<32x128xf32>
    %72 = tpu.matmul %5, %71, %cst_25 {dimension_numbers = #tpu.dot_dimension_numbers<[1], [0], [0], [1], [0, 0, 1, 1], [], []>} : vector<32x32xf32>, vector<32x128xf32>, vector<32x128xf32> -> vector<32x128xf32>
    %73 = vector.broadcast %6 : vector<32x1xf32> to vector<32x128xf32>
    %74 = arith.addf %72, %73 : vector<32x128xf32>
    %75 = math.tanh %74 : vector<32x128xf32>
    %cst_26 = arith.constant dense<0.000000e+00> : vector<32x128xf32>
    %76 = tpu.matmul %7, %75, %cst_26 {dimension_numbers = #tpu.dot_dimension_numbers<[1], [0], [0], [1], [0, 0, 1, 1], [], []>} : vector<32x32xf32>, vector<32x128xf32>, vector<32x128xf32> -> vector<32x128xf32>
    %77 = vector.broadcast %8 : vector<32x1xf32> to vector<32x128xf32>
    %78 = arith.addf %76, %77 : vector<32x128xf32>
    %79 = math.tanh %78 : vector<32x128xf32>
    %80 = vector.broadcast %11 : vector<32x1xf32> to vector<32x128xf32>
    %81 = arith.mulf %80, %79 : vector<32x128xf32>
    %cst_27 = arith.constant dense<0.000000e+00> : vector<128xf32>
    %82 = vector.multi_reduction <add>, %81, %cst_27 [0] : vector<32x128xf32> to vector<128xf32>
    %83 = vector.shape_cast %82 : vector<128xf32> to vector<1x128xf32>
    %84 = vector.broadcast %10 : vector<1x1xf32> to vector<1x128xf32>
    %85 = arith.addf %83, %84 : vector<1x128xf32>
    %c0_28 = arith.constant 0 : index
    %86 = arith.index_cast %51 : i32 to index
    %87 = vector.load %arg12[%c0_28, %86] : memref<1x512xf32, #tpu.memory_space<vmem>>, vector<1x128xf32>
    tpu.vector_store %arg12[%c0_28, %86], %85 {strides = array<i32>} : memref<1x512xf32, #tpu.memory_space<vmem>>, vector<1x128xf32>,
    %c2_i32 = arith.constant 2 : i32
    %c128_i32_29 = arith.constant 128 : i32
    %88 = arith.muli %c2_i32, %c128_i32_29 : i32
    %89 = tpu.assume_multiple %88, 128 : i32
    %c0_30 = arith.constant 0 : index
    %90 = arith.index_cast %89 : i32 to index
    %91 = vector.load %arg1[%c0_30, %90] : memref<1x512xf32, #tpu.memory_space<vmem>>, vector<1x128xf32>
    %c0_31 = arith.constant 0 : index
    %92 = arith.index_cast %89 : i32 to index
    %93 = vector.load %arg2[%c0_31, %92] : memref<1x512xf32, #tpu.memory_space<vmem>>, vector<1x128xf32>
    %c0_32 = arith.constant 0 : index
    %94 = arith.index_cast %89 : i32 to index
    %95 = vector.load %arg3[%c0_32, %94] : memref<1x512xf32, #tpu.memory_space<vmem>>, vector<1x128xf32>
    %96 = vector.broadcast %2 : vector<32x1xf32> to vector<32x128xf32>
    %97 = vector.broadcast %91 : vector<1x128xf32> to vector<32x128xf32>
    %98 = arith.mulf %96, %97 : vector<32x128xf32>
    %99 = vector.broadcast %3 : vector<32x1xf32> to vector<32x128xf32>
    %100 = vector.broadcast %93 : vector<1x128xf32> to vector<32x128xf32>
    %101 = arith.mulf %99, %100 : vector<32x128xf32>
    %102 = arith.addf %98, %101 : vector<32x128xf32>
    %103 = vector.broadcast %4 : vector<32x1xf32> to vector<32x128xf32>
    %104 = vector.broadcast %95 : vector<1x128xf32> to vector<32x128xf32>
    %105 = arith.mulf %103, %104 : vector<32x128xf32>
    %106 = arith.addf %102, %105 : vector<32x128xf32>
    %107 = vector.broadcast %1 : vector<32x1xf32> to vector<32x128xf32>
    %108 = arith.addf %106, %107 : vector<32x128xf32>
    %109 = math.sin %108 : vector<32x128xf32>
    %cst_33 = arith.constant dense<0.000000e+00> : vector<32x128xf32>
    %110 = tpu.matmul %5, %109, %cst_33 {dimension_numbers = #tpu.dot_dimension_numbers<[1], [0], [0], [1], [0, 0, 1, 1], [], []>} : vector<32x32xf32>, vector<32x128xf32>, vector<32x128xf32> -> vector<32x128xf32>
    %111 = vector.broadcast %6 : vector<32x1xf32> to vector<32x128xf32>
    %112 = arith.addf %110, %111 : vector<32x128xf32>
    %113 = math.tanh %112 : vector<32x128xf32>
    %cst_34 = arith.constant dense<0.000000e+00> : vector<32x128xf32>
    %114 = tpu.matmul %7, %113, %cst_34 {dimension_numbers = #tpu.dot_dimension_numbers<[1], [0], [0], [1], [0, 0, 1, 1], [], []>} : vector<32x32xf32>, vector<32x128xf32>, vector<32x128xf32> -> vector<32x128xf32>
    %115 = vector.broadcast %8 : vector<32x1xf32> to vector<32x128xf32>
    %116 = arith.addf %114, %115 : vector<32x128xf32>
    %117 = math.tanh %116 : vector<32x128xf32>
    %118 = vector.broadcast %11 : vector<32x1xf32> to vector<32x128xf32>
    %119 = arith.mulf %118, %117 : vector<32x128xf32>
    %cst_35 = arith.constant dense<0.000000e+00> : vector<128xf32>
    %120 = vector.multi_reduction <add>, %119, %cst_35 [0] : vector<32x128xf32> to vector<128xf32>
    %121 = vector.shape_cast %120 : vector<128xf32> to vector<1x128xf32>
    %122 = vector.broadcast %10 : vector<1x1xf32> to vector<1x128xf32>
    %123 = arith.addf %121, %122 : vector<1x128xf32>
    %c0_36 = arith.constant 0 : index
    %124 = arith.index_cast %89 : i32 to index
    %125 = vector.load %arg12[%c0_36, %124] : memref<1x512xf32, #tpu.memory_space<vmem>>, vector<1x128xf32>
    tpu.vector_store %arg12[%c0_36, %124], %123 {strides = array<i32>} : memref<1x512xf32, #tpu.memory_space<vmem>>, vector<1x128xf32>,
    %c3_i32 = arith.constant 3 : i32
    %c128_i32_37 = arith.constant 128 : i32
    %126 = arith.muli %c3_i32, %c128_i32_37 : i32
    %127 = tpu.assume_multiple %126, 128 : i32
    %c0_38 = arith.constant 0 : index
    %128 = arith.index_cast %127 : i32 to index
    %129 = vector.load %arg1[%c0_38, %128] : memref<1x512xf32, #tpu.memory_space<vmem>>, vector<1x128xf32>
    %c0_39 = arith.constant 0 : index
    %130 = arith.index_cast %127 : i32 to index
    %131 = vector.load %arg2[%c0_39, %130] : memref<1x512xf32, #tpu.memory_space<vmem>>, vector<1x128xf32>
    %c0_40 = arith.constant 0 : index
    %132 = arith.index_cast %127 : i32 to index
    %133 = vector.load %arg3[%c0_40, %132] : memref<1x512xf32, #tpu.memory_space<vmem>>, vector<1x128xf32>
    %134 = vector.broadcast %2 : vector<32x1xf32> to vector<32x128xf32>
    %135 = vector.broadcast %129 : vector<1x128xf32> to vector<32x128xf32>
    %136 = arith.mulf %134, %135 : vector<32x128xf32>
    %137 = vector.broadcast %3 : vector<32x1xf32> to vector<32x128xf32>
    %138 = vector.broadcast %131 : vector<1x128xf32> to vector<32x128xf32>
    %139 = arith.mulf %137, %138 : vector<32x128xf32>
    %140 = arith.addf %136, %139 : vector<32x128xf32>
    %141 = vector.broadcast %4 : vector<32x1xf32> to vector<32x128xf32>
    %142 = vector.broadcast %133 : vector<1x128xf32> to vector<32x128xf32>
    %143 = arith.mulf %141, %142 : vector<32x128xf32>
    %144 = arith.addf %140, %143 : vector<32x128xf32>
    %145 = vector.broadcast %1 : vector<32x1xf32> to vector<32x128xf32>
    %146 = arith.addf %144, %145 : vector<32x128xf32>
    %147 = math.sin %146 : vector<32x128xf32>
    %cst_41 = arith.constant dense<0.000000e+00> : vector<32x128xf32>
    %148 = tpu.matmul %5, %147, %cst_41 {dimension_numbers = #tpu.dot_dimension_numbers<[1], [0], [0], [1], [0, 0, 1, 1], [], []>} : vector<32x32xf32>, vector<32x128xf32>, vector<32x128xf32> -> vector<32x128xf32>
    %149 = vector.broadcast %6 : vector<32x1xf32> to vector<32x128xf32>
    %150 = arith.addf %148, %149 : vector<32x128xf32>
    %151 = math.tanh %150 : vector<32x128xf32>
    %cst_42 = arith.constant dense<0.000000e+00> : vector<32x128xf32>
    %152 = tpu.matmul %7, %151, %cst_42 {dimension_numbers = #tpu.dot_dimension_numbers<[1], [0], [0], [1], [0, 0, 1, 1], [], []>} : vector<32x32xf32>, vector<32x128xf32>, vector<32x128xf32> -> vector<32x128xf32>
    %153 = vector.broadcast %8 : vector<32x1xf32> to vector<32x128xf32>
    %154 = arith.addf %152, %153 : vector<32x128xf32>
    %155 = math.tanh %154 : vector<32x128xf32>
    %156 = vector.broadcast %11 : vector<32x1xf32> to vector<32x128xf32>
    %157 = arith.mulf %156, %155 : vector<32x128xf32>
    %cst_43 = arith.constant dense<0.000000e+00> : vector<128xf32>
    %158 = vector.multi_reduction <add>, %157, %cst_43 [0] : vector<32x128xf32> to vector<128xf32>
    %159 = vector.shape_cast %158 : vector<128xf32> to vector<1x128xf32>
    %160 = vector.broadcast %10 : vector<1x1xf32> to vector<1x128xf32>
    %161 = arith.addf %159, %160 : vector<1x128xf32>
    %c0_44 = arith.constant 0 : index
    %162 = arith.index_cast %127 : i32 to index
    %163 = vector.load %arg12[%c0_44, %162] : memref<1x512xf32, #tpu.memory_space<vmem>>, vector<1x128xf32>
    tpu.vector_store %arg12[%c0_44, %162], %161 {strides = array<i32>} : memref<1x512xf32, #tpu.memory_space<vmem>>, vector<1x128xf32>,
    %c4_i32 = arith.constant 4 : i32
    return
  }
  func.func @transform_0(%arg0: i32) -> (i32, i32) {
    %c0_i32 = arith.constant 0 : i32
    %c0_i32_0 = arith.constant 0 : i32
    return %c0_i32, %arg0 : i32, i32
  }
  func.func @transform_1(%arg0: i32) -> (i32, i32) {
    %c0_i32 = arith.constant 0 : i32
    %c0_i32_0 = arith.constant 0 : i32
    return %c0_i32, %arg0 : i32, i32
  }
  func.func @transform_2(%arg0: i32) -> (i32, i32) {
    %c0_i32 = arith.constant 0 : i32
    %c0_i32_0 = arith.constant 0 : i32
    return %c0_i32, %arg0 : i32, i32
  }
  func.func @transform_3(%arg0: i32) -> (i32, i32) {
    %c0_i32 = arith.constant 0 : i32
    %c0_i32_0 = arith.constant 0 : i32
    %c0_i32_1 = arith.constant 0 : i32
    return %c0_i32, %c0_i32_0 : i32, i32
  }
  func.func @transform_4(%arg0: i32) -> (i32, i32) {
    %c0_i32 = arith.constant 0 : i32
    %c0_i32_0 = arith.constant 0 : i32
    %c0_i32_1 = arith.constant 0 : i32
    return %c0_i32, %c0_i32_0 : i32, i32
  }
  func.func @transform_5(%arg0: i32) -> (i32, i32) {
    %c0_i32 = arith.constant 0 : i32
    %c0_i32_0 = arith.constant 0 : i32
    %c0_i32_1 = arith.constant 0 : i32
    return %c0_i32, %c0_i32_0 : i32, i32
  }
  func.func @transform_6(%arg0: i32) -> (i32, i32) {
    %c0_i32 = arith.constant 0 : i32
    %c0_i32_0 = arith.constant 0 : i32
    %c0_i32_1 = arith.constant 0 : i32
    return %c0_i32, %c0_i32_0 : i32, i32
  }
  func.func @transform_7(%arg0: i32) -> (i32, i32) {
    %c0_i32 = arith.constant 0 : i32
    %c0_i32_0 = arith.constant 0 : i32
    %c0_i32_1 = arith.constant 0 : i32
    return %c0_i32, %c0_i32_0 : i32, i32
  }
  func.func @transform_8(%arg0: i32) -> (i32, i32) {
    %c0_i32 = arith.constant 0 : i32
    %c0_i32_0 = arith.constant 0 : i32
    %c0_i32_1 = arith.constant 0 : i32
    return %c0_i32, %c0_i32_0 : i32, i32
  }
  func.func @transform_9(%arg0: i32) -> (i32, i32) {
    %c0_i32 = arith.constant 0 : i32
    %c0_i32_0 = arith.constant 0 : i32
    %c0_i32_1 = arith.constant 0 : i32
    return %c0_i32, %c0_i32_0 : i32, i32
  }
  func.func @transform_10(%arg0: i32) -> (i32, i32) {
    %c0_i32 = arith.constant 0 : i32
    %c0_i32_0 = arith.constant 0 : i32
    %c0_i32_1 = arith.constant 0 : i32
    return %c0_i32, %c0_i32_0 : i32, i32
  }
  func.func @transform_11(%arg0: i32) -> (i32, i32) {
    %c0_i32 = arith.constant 0 : i32
    %c0_i32_0 = arith.constant 0 : i32
    return %c0_i32, %arg0 : i32, i32
  }
}

</mosaic_0001>

<llo_original>
// kernel: tpu_custom_call.1
$region0: #{tpu_custom_call.1}
  #allocation0 [shape = 'u32[]', space=smem, size = 0x4, offset = 0x4, fixed_abs, tag = 'smem constant byte address 0x4 - core index']
  #allocation1 [shape = 'u32[144,128]{1,0:T(1,128)}', space=vmem, size = 0x12000, scoped, tag = 'internal scratch']
  #allocation2 [shape = 'f32[1,1]{1,0:T(1,128)S(1)}', space=vmem, size = 0x200, scoped, tag = 'scoped memory for tpu_custom_call.1']
  %s0 = inlined_call_operand.vmem [shape: f32[1,1024], index: 0, kind: input, shape index: {}]
  %s1 = inlined_call_operand.vmem [shape: f32[1,1024], index: 1, kind: input, shape index: {}]
  %s2 = inlined_call_operand.vmem [shape: f32[1,1024], index: 2, kind: input, shape index: {}]
  %s3 = inlined_call_operand.vmem [shape: f32[32,3], index: 3, kind: input, shape index: {}]
  %s4 = inlined_call_operand.vmem [shape: f32[32,1], index: 4, kind: input, shape index: {}]
  %s5 = inlined_call_operand.vmem [shape: f32[32,32], index: 5, kind: input, shape index: {}]
  %s6 = inlined_call_operand.vmem [shape: f32[32,1], index: 6, kind: input, shape index: {}]
  %s7 = inlined_call_operand.vmem [shape: f32[32,32], index: 7, kind: input, shape index: {}]
  %s8 = inlined_call_operand.vmem [shape: f32[32,1], index: 8, kind: input, shape index: {}]
  %s9 = inlined_call_operand.vmem [shape: f32[1,32], index: 9, kind: input, shape index: {}]
  %s10 = inlined_call_operand.<no memory space> [shape: f32[1,1], index: 10, kind: input, shape index: {}]
  %s11 = inlined_call_operand.hbm [shape: f32[1,1024], index: 11, kind: output, shape index: {}]
  %s12 = sld [smem:[#allocation0]]
  $region77: #{tpu_custom_call.1} parent=0
    _
  %s14 = ssub.s32 1, %s12
  %s15 = scalar_select 0, %s14, %s12
  %v16 = vstv %s10
  %17 = vst [vmem:[#allocation2] sm:$0x1] %v16
  $region1: #{tpu_custom_call.1} parent=0
    #allocation3 [shape = 'u8[4096]{0}', space=vmem, size = 0x1000, scoped, tag = 'output window, operand 0']
    #allocation4 [shape = 's32[2]{0}', space=sflag, size = 0x8, scoped, tag = 'scoped memory for tpu_custom_call.1']
    %18 = vsyncpa [#allocation4], 0
    %s19 = scalar_lea.sflag [#allocation4], 1
    %20 = vsyncpa %s19, 0
    loop: start=0, step=1, limit=4
    $region2: #{tpu_custom_call.1} parent=1 // loop_pre_header
      _
    $region3: #{tpu_custom_call.1} parent=1 // loop_header
      %s22 = sphi 0, %s26
      %p23 = scmp.ge.s32.totalorder %s22, 4
      %s32 = sphi 0, %s34
      %s35 = sphi 0, %s32
      %s36 = sphi 0, %s35
      %s52 = sphi 0, %s36
      %s58 = sphi 0, %s60
      %s61 = sphi 0, %s58
      %s62 = sphi 0, %s61
      %s78 = sphi 0, %s62
      %s84 = sphi 0, %s86
      %s87 = sphi 0, %s84
      %s88 = sphi 0, %s87
      %s104 = sphi 0, %s88
      %s108 = sphi 0, %s108
      %s110 = sphi 0, %s108
      %s111 = sphi 0, %s110
      %s125 = sphi 0, %s111
      %s129 = sphi 0, %s129
      %s131 = sphi 0, %s129
      %s132 = sphi 0, %s131
      %s146 = sphi 0, %s132
      %s150 = sphi 0, %s150
      %s152 = sphi 0, %s150
      %s153 = sphi 0, %s152
      %s167 = sphi 0, %s153
      %s171 = sphi 0, %s171
      %s173 = sphi 0, %s171
      %s174 = sphi 0, %s173
      %s188 = sphi 0, %s174
      %s192 = sphi 0, %s192
      %s194 = sphi 0, %s192
      %s195 = sphi 0, %s194
      %s209 = sphi 0, %s195
      %s213 = sphi 0, %s213
      %s215 = sphi 0, %s213
      %s216 = sphi 0, %s215
      %s230 = sphi 0, %s216
      %s234 = sphi 0, %s234
      %s236 = sphi 0, %s234
      %s237 = sphi 0, %s236
      %s251 = sphi 0, %s237
      %s255 = sphi 0, %s255
      %s257 = sphi 0, %s255
      %s258 = sphi 0, %s257
      %s272 = sphi 0, %s258
      %s278 = sphi 0, %s280
      %s281 = sphi 0, %s278
      %s282 = sphi 0, %s281
      %s298 = sphi 0, %s282
    $region4: #{tpu_custom_call.1} parent=1 // loop_header_branch
      %25 = sbr.rel (%p23) target = $region8
    $region5: #{tpu_custom_call.1} parent=1 // loop_body
      %s27 = ssub.s32 %s22, 1
      %s28 = ssub.s32 %s22, 2
      %s29 = sadd.s32 %s22, 1
      %s30 = ssub.s32 %s22, %s29
      %p31 = scmp.eq.s32.totalorder %s30, 0
      %s33 = sadd.s32 %s32, 1
      %s34 = scalar_select %p31, %s32, %s33
      %p37 = pneg %p31
      %p38 = scmp.eq.s32.totalorder %s22, 1
      %p39 = por %p37, %p38
      %p40 = scmp.ne.s32.totalorder %s32, %s35
      %p41 = scmp.eq.s32.totalorder %s22, 0
      %p42 = por %p40, %p41
      %p43 = scmp.ne.s32.totalorder %s32, %s35
      %p44 = scmp.eq.s32.totalorder %s27, 1
      %p45 = por %p43, %p44
      %p46 = scmp.ne.s32.totalorder %s35, %s36
      %p47 = scmp.eq.s32.totalorder %s27, 0
      %p48 = por %p46, %p47
      %p49 = scmp.ne.s32.totalorder %s35, %s36
      %p50 = scmp.eq.s32.totalorder %s28, 1
      %p51 = por %p49, %p50
      %p53 = scmp.ne.s32.totalorder %s36, %s52
      %p54 = scmp.eq.s32.totalorder %s28, 0
      %p55 = por %p53, %p54
      %s56 = ssub.s32 %s22, %s29
      %p57 = scmp.eq.s32.totalorder %s56, 0
      %s59 = sadd.s32 %s58, 1
      %s60 = scalar_select %p57, %s58, %s59
      %p63 = pneg %p57
      %p64 = scmp.eq.s32.totalorder %s22, 1
      %p65 = por %p63, %p64
      %p66 = scmp.ne.s32.totalorder %s58, %s61
      %p67 = scmp.eq.s32.totalorder %s22, 0
      %p68 = por %p66, %p67
      %p69 = scmp.ne.s32.totalorder %s58, %s61
      %p70 = scmp.eq.s32.totalorder %s27, 1
      %p71 = por %p69, %p70
      %p72 = scmp.ne.s32.totalorder %s61, %s62
      %p73 = scmp.eq.s32.totalorder %s27, 0
      %p74 = por %p72, %p73
      %p75 = scmp.ne.s32.totalorder %s61, %s62
      %p76 = scmp.eq.s32.totalorder %s28, 1
      %p77 = por %p75, %p76
      %p79 = scmp.ne.s32.totalorder %s62, %s78
      %p80 = scmp.eq.s32.totalorder %s28, 0
      %p81 = por %p79, %p80
      %s82 = ssub.s32 %s22, %s29
      %p83 = scmp.eq.s32.totalorder %s82, 0
      %s85 = sadd.s32 %s84, 1
      %s86 = scalar_select %p83, %s84, %s85
      %p89 = pneg %p83
      %p90 = scmp.eq.s32.totalorder %s22, 1
      %p91 = por %p89, %p90
      %p92 = scmp.ne.s32.totalorder %s84, %s87
      %p93 = scmp.eq.s32.totalorder %s22, 0
      %p94 = por %p92, %p93
      %p95 = scmp.ne.s32.totalorder %s84, %s87
      %p96 = scmp.eq.s32.totalorder %s27, 1
      %p97 = por %p95, %p96
      %p98 = scmp.ne.s32.totalorder %s87, %s88
      %p99 = scmp.eq.s32.totalorder %s27, 0
      %p100 = por %p98, %p99
      %p101 = scmp.ne.s32.totalorder %s87, %s88
      %p102 = scmp.eq.s32.totalorder %s28, 1
      %p103 = por %p101, %p102
      %p105 = scmp.ne.s32.totalorder %s88, %s104
      %p106 = scmp.eq.s32.totalorder %s28, 0
      %p107 = por %p105, %p106
      %s109 = sadd.s32 %s108, 1
      %p112 = scmp.eq.s32.totalorder %s22, 1
      %p113 = scmp.ne.s32.totalorder %s108, %s110
      %p114 = scmp.eq.s32.totalorder %s22, 0
      %p115 = por %p113, %p114
      %p116 = scmp.ne.s32.totalorder %s108, %s110
      %p117 = scmp.eq.s32.totalorder %s27, 1
      %p118 = por %p116, %p117
      %p119 = scmp.ne.s32.totalorder %s110, %s111
      %p120 = scmp.eq.s32.totalorder %s27, 0
      %p121 = por %p119, %p120
      %p122 = scmp.ne.s32.totalorder %s110, %s111
      %p123 = scmp.eq.s32.totalorder %s28, 1
      %p124 = por %p122, %p123
      %p126 = scmp.ne.s32.totalorder %s111, %s125
      %p127 = scmp.eq.s32.totalorder %s28, 0
      %p128 = por %p126, %p127
      %s130 = sadd.s32 %s129, 1
      %p133 = scmp.eq.s32.totalorder %s22, 1
      %p134 = scmp.ne.s32.totalorder %s129, %s131
      %p135 = scmp.eq.s32.totalorder %s22, 0
      %p136 = por %p134, %p135
      %p137 = scmp.ne.s32.totalorder %s129, %s131
      %p138 = scmp.eq.s32.totalorder %s27, 1
      %p139 = por %p137, %p138
      %p140 = scmp.ne.s32.totalorder %s131, %s132
      %p141 = scmp.eq.s32.totalorder %s27, 0
      %p142 = por %p140, %p141
      %p143 = scmp.ne.s32.totalorder %s131, %s132
      %p144 = scmp.eq.s32.totalorder %s28, 1
      %p145 = por %p143, %p144
      %p147 = scmp.ne.s32.totalorder %s132, %s146
      %p148 = scmp.eq.s32.totalorder %s28, 0
      %p149 = por %p147, %p148
      %s151 = sadd.s32 %s150, 1
      %p154 = scmp.eq.s32.totalorder %s22, 1
      %p155 = scmp.ne.s32.totalorder %s150, %s152
      %p156 = scmp.eq.s32.totalorder %s22, 0
      %p157 = por %p155, %p156
      %p158 = scmp.ne.s32.totalorder %s150, %s152
      %p159 = scmp.eq.s32.totalorder %s27, 1
      %p160 = por %p158, %p159
      %p161 = scmp.ne.s32.totalorder %s152, %s153
      %p162 = scmp.eq.s32.totalorder %s27, 0
      %p163 = por %p161, %p162
      %p164 = scmp.ne.s32.totalorder %s152, %s153
      %p165 = scmp.eq.s32.totalorder %s28, 1
      %p166 = por %p164, %p165
      %p168 = scmp.ne.s32.totalorder %s153, %s167
      %p169 = scmp.eq.s32.totalorder %s28, 0
      %p170 = por %p168, %p169
      %s172 = sadd.s32 %s171, 1
      %p175 = scmp.eq.s32.totalorder %s22, 1
      %p176 = scmp.ne.s32.totalorder %s171, %s173
      %p177 = scmp.eq.s32.totalorder %s22, 0
      %p178 = por %p176, %p177
      %p179 = scmp.ne.s32.totalorder %s171, %s173
      %p180 = scmp.eq.s32.totalorder %s27, 1
      %p181 = por %p179, %p180
      %p182 = scmp.ne.s32.totalorder %s173, %s174
      %p183 = scmp.eq.s32.totalorder %s27, 0
      %p184 = por %p182, %p183
      %p185 = scmp.ne.s32.totalorder %s173, %s174
      %p186 = scmp.eq.s32.totalorder %s28, 1
      %p187 = por %p185, %p186
      %p189 = scmp.ne.s32.totalorder %s174, %s188
      %p190 = scmp.eq.s32.totalorder %s28, 0
      %p191 = por %p189, %p190
      %s193 = sadd.s32 %s192, 1
      %p196 = scmp.eq.s32.totalorder %s22, 1
      %p197 = scmp.ne.s32.totalorder %s192, %s194
      %p198 = scmp.eq.s32.totalorder %s22, 0
      %p199 = por %p197, %p198
      %p200 = scmp.ne.s32.totalorder %s192, %s194
      %p201 = scmp.eq.s32.totalorder %s27, 1
      %p202 = por %p200, %p201
      %p203 = scmp.ne.s32.totalorder %s194, %s195
      %p204 = scmp.eq.s32.totalorder %s27, 0
      %p205 = por %p203, %p204
      %p206 = scmp.ne.s32.totalorder %s194, %s195
      %p207 = scmp.eq.s32.totalorder %s28, 1
      %p208 = por %p206, %p207
      %p210 = scmp.ne.s32.totalorder %s195, %s209
      %p211 = scmp.eq.s32.totalorder %s28, 0
      %p212 = por %p210, %p211
      %s214 = sadd.s32 %s213, 1
      %p217 = scmp.eq.s32.totalorder %s22, 1
      %p218 = scmp.ne.s32.totalorder %s213, %s215
      %p219 = scmp.eq.s32.totalorder %s22, 0
      %p220 = por %p218, %p219
      %p221 = scmp.ne.s32.totalorder %s213, %s215
      %p222 = scmp.eq.s32.totalorder %s27, 1
      %p223 = por %p221, %p222
      %p224 = scmp.ne.s32.totalorder %s215, %s216
      %p225 = scmp.eq.s32.totalorder %s27, 0
      %p226 = por %p224, %p225
      %p227 = scmp.ne.s32.totalorder %s215, %s216
      %p228 = scmp.eq.s32.totalorder %s28, 1
      %p229 = por %p227, %p228
      %p231 = scmp.ne.s32.totalorder %s216, %s230
      %p232 = scmp.eq.s32.totalorder %s28, 0
      %p233 = por %p231, %p232
      %s235 = sadd.s32 %s234, 1
      %p238 = scmp.eq.s32.totalorder %s22, 1
      %p239 = scmp.ne.s32.totalorder %s234, %s236
      %p240 = scmp.eq.s32.totalorder %s22, 0
      %p241 = por %p239, %p240
      %p242 = scmp.ne.s32.totalorder %s234, %s236
      %p243 = scmp.eq.s32.totalorder %s27, 1
      %p244 = por %p242, %p243
      %p245 = scmp.ne.s32.totalorder %s236, %s237
      %p246 = scmp.eq.s32.totalorder %s27, 0
      %p247 = por %p245, %p246
      %p248 = scmp.ne.s32.totalorder %s236, %s237
      %p249 = scmp.eq.s32.totalorder %s28, 1
      %p250 = por %p248, %p249
      %p252 = scmp.ne.s32.totalorder %s237, %s251
      %p253 = scmp.eq.s32.totalorder %s28, 0
      %p254 = por %p252, %p253
      %s256 = sadd.s32 %s255, 1
      %p259 = scmp.eq.s32.totalorder %s22, 1
      %p260 = scmp.ne.s32.totalorder %s255, %s257
      %p261 = scmp.eq.s32.totalorder %s22, 0
      %p262 = por %p260, %p261
      %p263 = scmp.ne.s32.totalorder %s255, %s257
      %p264 = scmp.eq.s32.totalorder %s27, 1
      %p265 = por %p263, %p264
      %p266 = scmp.ne.s32.totalorder %s257, %s258
      %p267 = scmp.eq.s32.totalorder %s27, 0
      %p268 = por %p266, %p267
      %p269 = scmp.ne.s32.totalorder %s257, %s258
      %p270 = scmp.eq.s32.totalorder %s28, 1
      %p271 = por %p269, %p270
      %p273 = scmp.ne.s32.totalorder %s258, %s272
      %p274 = scmp.eq.s32.totalorder %s28, 0
      %p275 = por %p273, %p274
      %s276 = ssub.s32 %s22, %s29
      %p277 = scmp.eq.s32.totalorder %s276, 0
      %s279 = sadd.s32 %s278, 1
      %s280 = scalar_select %p277, %s278, %s279
      %p283 = pneg %p277
      %p284 = scmp.eq.s32.totalorder %s22, 1
      %p285 = por %p283, %p284
      %p286 = scmp.ne.s32.totalorder %s278, %s281
      %p287 = scmp.eq.s32.totalorder %s22, 0
      %p288 = por %p286, %p287
      %p289 = scmp.ne.s32.totalorder %s278, %s281
      %p290 = scmp.eq.s32.totalorder %s27, 1
      %p291 = por %p289, %p290
      %p292 = scmp.ne.s32.totalorder %s281, %s282
      %p293 = scmp.eq.s32.totalorder %s27, 0
      %p294 = por %p292, %p293
      %p295 = scmp.ne.s32.totalorder %s281, %s282
      %p296 = scmp.eq.s32.totalorder %s28, 1
      %p297 = por %p295, %p296
      %p299 = scmp.ne.s32.totalorder %s282, %s298
      %p300 = scmp.eq.s32.totalorder %s28, 0
      %p301 = por %p299, %p300
      %p302 = scmp.le.s32.totalorder 1, %s22
      %p303 = scmp.lt.s32.totalorder %s22, 3
      %p304 = pnand %p302, %p303
      %p305 = pneg %p304
      // Predicated region
      $region9: #{tpu_custom_call.1} parent=5 // pred_check
        _
      $region10: #{tpu_custom_call.1} parent=5 // pred_check_branch
        %307 = sbr.rel (%p304) target = $region12
      $region11: #{tpu_custom_call.1} parent=5 // pred_region
        %s308 = ssub.s32 %s22, 1
        // Predicated region
        $region13: #{tpu_custom_call.1} parent=11 // pred_check
          %p309 = pneg %p121
        $region14: #{tpu_custom_call.1} parent=11 // pred_check_branch
          %311 = sbr.rel (%p309) target = $region16
        $region15: #{tpu_custom_call.1} parent=11 // pred_region
          _
        $region16: #{tpu_custom_call.1} parent=11 // pred_fallthru
          _
        // Predicated region
        $region17: #{tpu_custom_call.1} parent=11 // pred_check
          %p312 = pneg %p142
        $region18: #{tpu_custom_call.1} parent=11 // pred_check_branch
          %314 = sbr.rel (%p312) target = $region20
        $region19: #{tpu_custom_call.1} parent=11 // pred_region
          _
        $region20: #{tpu_custom_call.1} parent=11 // pred_fallthru
          _
        // Predicated region
        $region21: #{tpu_custom_call.1} parent=11 // pred_check
          %p315 = pneg %p163
        $region22: #{tpu_custom_call.1} parent=11 // pred_check_branch
          %317 = sbr.rel (%p315) target = $region24
        $region23: #{tpu_custom_call.1} parent=11 // pred_region
          _
        $region24: #{tpu_custom_call.1} parent=11 // pred_fallthru
          _
        // Predicated region
        $region25: #{tpu_custom_call.1} parent=11 // pred_check
          %p318 = pneg %p184
        $region26: #{tpu_custom_call.1} parent=11 // pred_check_branch
          %320 = sbr.rel (%p318) target = $region28
        $region27: #{tpu_custom_call.1} parent=11 // pred_region
          _
        $region28: #{tpu_custom_call.1} parent=11 // pred_fallthru
          _
        // Predicated region
        $region29: #{tpu_custom_call.1} parent=11 // pred_check
          %p321 = pneg %p205
        $region30: #{tpu_custom_call.1} parent=11 // pred_check_branch
          %323 = sbr.rel (%p321) target = $region32
        $region31: #{tpu_custom_call.1} parent=11 // pred_region
          _
        $region32: #{tpu_custom_call.1} parent=11 // pred_fallthru
          _
        // Predicated region
        $region33: #{tpu_custom_call.1} parent=11 // pred_check
          %p324 = pneg %p226
        $region34: #{tpu_custom_call.1} parent=11 // pred_check_branch
          %326 = sbr.rel (%p324) target = $region36
        $region35: #{tpu_custom_call.1} parent=11 // pred_region
          _
        $region36: #{tpu_custom_call.1} parent=11 // pred_fallthru
          _
        // Predicated region
        $region37: #{tpu_custom_call.1} parent=11 // pred_check
          %p327 = pneg %p247
        $region38: #{tpu_custom_call.1} parent=11 // pred_check_branch
          %329 = sbr.rel (%p327) target = $region40
        $region39: #{tpu_custom_call.1} parent=11 // pred_region
          _
        $region40: #{tpu_custom_call.1} parent=11 // pred_fallthru
          _
        // Predicated region
        $region41: #{tpu_custom_call.1} parent=11 // pred_check
          %p330 = pneg %p268
        $region42: #{tpu_custom_call.1} parent=11 // pred_check_branch
          %332 = sbr.rel (%p330) target = $region44
        $region43: #{tpu_custom_call.1} parent=11 // pred_region
          _
        $region44: #{tpu_custom_call.1} parent=11 // pred_fallthru
          _
      $region12: #{tpu_custom_call.1} parent=5 // pred_fallthru
        _
      %p333 = scmp.lt.s32.totalorder %s22, 2
      // Predicated region
      $region45: #{tpu_custom_call.1} parent=5 // pred_check
        %p334 = pneg %p333
      $region46: #{tpu_custom_call.1} parent=5 // pred_check_branch
        %336 = sbr.rel (%p334) target = $region48
      $region47: #{tpu_custom_call.1} parent=5 // pred_region
        // Predicated region
        $region49: #{tpu_custom_call.1} parent=47 // pred_check
          %p337 = pneg %p42
        $region50: #{tpu_custom_call.1} parent=47 // pred_check_branch
          %339 = sbr.rel (%p337) target = $region52
        $region51: #{tpu_custom_call.1} parent=47 // pred_region
          %s340 = smul.u32 4, %s22
          %p341 = scmp.lt.s32.totalorder %s340, 7
          %s342 = scalar_select %p341, %s340, 7
          %s343 = scalar_lea.vmem %s0, %s342
          %s344 = smul.u32 4, %s22
        $region52: #{tpu_custom_call.1} parent=47 // pred_fallthru
          _
        // Predicated region
        $region53: #{tpu_custom_call.1} parent=47 // pred_check
          %p345 = pneg %p68
        $region54: #{tpu_custom_call.1} parent=47 // pred_check_branch
          %347 = sbr.rel (%p345) target = $region56
        $region55: #{tpu_custom_call.1} parent=47 // pred_region
          %s348 = smul.u32 4, %s22
          %p349 = scmp.lt.s32.totalorder %s348, 7
          %s350 = scalar_select %p349, %s348, 7
          %s351 = scalar_lea.vmem %s1, %s350
          %s352 = smul.u32 4, %s22
        $region56: #{tpu_custom_call.1} parent=47 // pred_fallthru
          _
        // Predicated region
        $region57: #{tpu_custom_call.1} parent=47 // pred_check
          %p353 = pneg %p94
        $region58: #{tpu_custom_call.1} parent=47 // pred_check_branch
          %355 = sbr.rel (%p353) target = $region60
        $region59: #{tpu_custom_call.1} parent=47 // pred_region
          %s356 = smul.u32 4, %s22
          %p357 = scmp.lt.s32.totalorder %s356, 7
          %s358 = scalar_select %p357, %s356, 7
          %s359 = scalar_lea.vmem %s2, %s358
          %s360 = smul.u32 4, %s22
        $region60: #{tpu_custom_call.1} parent=47 // pred_fallthru
          _
      $region48: #{tpu_custom_call.1} parent=5 // pred_fallthru
        _
      %p361 = scmp.le.s32.totalorder 1, %s22
      %p362 = scmp.lt.s32.totalorder %s22, 3
      %p363 = pnand %p361, %p362
      %p364 = pneg %p363
      // Predicated region
      $region61: #{tpu_custom_call.1} parent=5 // pred_check
        _
      $region62: #{tpu_custom_call.1} parent=5 // pred_check_branch
        %366 = sbr.rel (%p363) target = $region64
      $region63: #{tpu_custom_call.1} parent=5 // pred_region
        %s367 = ssub.s32 %s22, 1
        %s368 = smul.u32 4, %s27
        %p369 = scmp.lt.s32.totalorder %s368, 7
        %s370 = scalar_select %p369, %s368, 7
        %s371 = scalar_lea.vmem %s0, %s370
        %p372 = pneg %p48
        %p373 = pneg %p45
        %s374 = smul.u32 4, %s27
        %p375 = scmp.lt.s32.totalorder %s374, 7
        %s376 = scalar_select %p375, %s374, 7
        %s377 = scalar_lea.vmem %s1, %s376
        %p378 = pneg %p74
        %p379 = pneg %p71
        %s380 = smul.u32 4, %s27
        %p381 = scmp.lt.s32.totalorder %s380, 7
        %s382 = scalar_select %p381, %s380, 7
        %s383 = scalar_lea.vmem %s2, %s382
        %p384 = pneg %p100
        %p385 = pneg %p97
        %p386 = pneg %p121
        %p387 = pneg %p118
        %p388 = pneg %p142
        %p389 = pneg %p139
        %p390 = pneg %p163
        %p391 = pneg %p160
        %p392 = pneg %p184
        %p393 = pneg %p181
        %p394 = pneg %p205
        %p395 = pneg %p202
        %p396 = pneg %p226
        %p397 = pneg %p223
        %p398 = pneg %p247
        %p399 = pneg %p244
        %p400 = pneg %p268
        %p401 = pneg %p265
        %p402 = pneg %p294
        %p403 = pneg %p291
        %s404 = sand.u32 %s281, 1
        %s405 = scalar_lea.sflag [#allocation4], %s404
        %s406 = sand.u32 %s281, 1
        %s407 = smul.addr %s406, 4
        %s408 = scalar_lea.vmem [#allocation3], %s407
        %s409 = smul.u32 4, %s27
        %p410 = scmp.lt.s32.totalorder %s409, 7
        %s411 = scalar_select %p410, %s409, 7
        %s412 = scalar_lea.vmem %s0, %s411
        %s413 = smul.u32 4, %s27
        %s414 = smul.u32 4, %s27
        %p415 = scmp.lt.s32.totalorder %s414, 7
        %s416 = scalar_select %p415, %s414, 7
        %s417 = scalar_lea.vmem %s1, %s416
        %s418 = smul.u32 4, %s27
        %s419 = smul.u32 4, %s27
        %p420 = scmp.lt.s32.totalorder %s419, 7
        %s421 = scalar_select %p420, %s419, 7
        %s422 = scalar_lea.vmem %s2, %s421
        %s423 = smul.u32 4, %s27
        %s424 = smul.u32 4, %s27
        %v425 = vld [vmem:[%s3] sm:$0xff]
        %v426 = vld [vmem:[%s3 + $0x8] sm:$0xff]
        %v427 = vld [vmem:[%s3 + $0x10] sm:$0xff]
        %v428 = vld [vmem:[%s3 + $0x18] sm:$0xff]
        %v429 = vld [vmem:[%s4] sm:$0xff]
        %v430 = vld [vmem:[%s4 + $0x8] sm:$0xff]
        %v431 = vld [vmem:[%s4 + $0x10] sm:$0xff]
        %v432 = vld [vmem:[%s4 + $0x18] sm:$0xff]
        %v433 = vld [vmem:[%s5] sm:$0xff]
        %v434 = vld [vmem:[%s5 + $0x8] sm:$0xff]
        %v435 = vld [vmem:[%s5 + $0x10] sm:$0xff]
        %v436 = vld [vmem:[%s5 + $0x18] sm:$0xff]
        %v437 = vld [vmem:[%s6] sm:$0xff]
        %v438 = vld [vmem:[%s6 + $0x8] sm:$0xff]
        %v439 = vld [vmem:[%s6 + $0x10] sm:$0xff]
        %v440 = vld [vmem:[%s6 + $0x18] sm:$0xff]
        %v441 = vld [vmem:[%s7] sm:$0xff]
        %v442 = vld [vmem:[%s7 + $0x8] sm:$0xff]
        %v443 = vld [vmem:[%s7 + $0x10] sm:$0xff]
        %v444 = vld [vmem:[%s7 + $0x18] sm:$0xff]
        %v445 = vld [vmem:[%s8] sm:$0xff]
        %v446 = vld [vmem:[%s8 + $0x8] sm:$0xff]
        %v447 = vld [vmem:[%s8 + $0x10] sm:$0xff]
        %v448 = vld [vmem:[%s8 + $0x18] sm:$0xff]
        %v449 = vld [vmem:[%s9] sm:$0x1]
        %v450 = vld [vmem:[#allocation2] sm:$0x1]
        %v451 = vlaneseq
        %v452 = vshrl.u32 %v451, 7
        %v453 = vsub.s32 0, %v452
        %v454 = vrot.slane %v449, %v453
        %456 = vbcast.lane.b32.xlu0 %v454, 256
        %v457 = vpop.permute.xlu0 %456
        %s459 = sor.u32 256, 8
        %460 = vbcast.lane.b32.xlu0 %v454, %s459
        %v461 = vpop.permute.xlu0 %460
        %s463 = sor.u32 256, 16
        %464 = vbcast.lane.b32.xlu0 %v454, %s463
        %v465 = vpop.permute.xlu0 %464
        %s467 = sor.u32 256, 24
        %468 = vbcast.lane.b32.xlu0 %v454, %s467
        %v469 = vpop.permute.xlu0 %468
        %v470 = vld [vmem:[%s412] sm:$0x1]
        %v471 = vld [vmem:[%s417] sm:$0x1]
        %v472 = vld [vmem:[%s422] sm:$0x1]
        %474 = vset.pattern.permute.xlu0 0
        %475 = vperm.xlu0 %474, %v425
        %v476 = vpop.permute.xlu0 %475
        %479 = vset.pattern.permute.xlu0 0
        %480 = vperm.xlu0 %479, %v426
        %v481 = vpop.permute.xlu0 %480
        %484 = vset.pattern.permute.xlu0 0
        %485 = vperm.xlu0 %484, %v427
        %v486 = vpop.permute.xlu0 %485
        %489 = vset.pattern.permute.xlu0 0
        %490 = vperm.xlu0 %489, %v428
        %v491 = vpop.permute.xlu0 %490
        %v494 = vlaneseq
        %v495 = vshrl.u32 %v494, 7
        %v496 = vsub.s32 0, %v495
        %v497 = vrot.slane %v470, %v496
        %v499 = vmul.f32 %v476, %v497
        %v500 = vmul.f32 %v481, %v497
        %v501 = vmul.f32 %v486, %v497
        %v502 = vmul.f32 %v491, %v497
        %503 = vset.pattern.permute.xlu0 1
        %504 = vperm.xlu0 %503, %v425
        %v505 = vpop.permute.xlu0 %504
        %507 = vset.pattern.permute.xlu0 1
        %508 = vperm.xlu0 %507, %v426
        %v509 = vpop.permute.xlu0 %508
        %511 = vset.pattern.permute.xlu0 1
        %512 = vperm.xlu0 %511, %v427
        %v513 = vpop.permute.xlu0 %512
        %515 = vset.pattern.permute.xlu0 1
        %516 = vperm.xlu0 %515, %v428
        %v517 = vpop.permute.xlu0 %516
        %v520 = vlaneseq
        %v521 = vshrl.u32 %v520, 7
        %v522 = vsub.s32 0, %v521
        %v523 = vrot.slane %v471, %v522
        %v525 = vmul.f32 %v505, %v523
        %v526 = vmul.f32 %v509, %v523
        %v527 = vmul.f32 %v513, %v523
        %v528 = vmul.f32 %v517, %v523
        %v529 = vadd.f32 %v499, %v525
        %v530 = vadd.f32 %v500, %v526
        %v531 = vadd.f32 %v501, %v527
        %v532 = vadd.f32 %v502, %v528
        %533 = vset.pattern.permute.xlu0 2
        %534 = vperm.xlu0 %533, %v425
        %v535 = vpop.permute.xlu0 %534
        %537 = vset.pattern.permute.xlu0 2
        %538 = vperm.xlu0 %537, %v426
        %v539 = vpop.permute.xlu0 %538
        %541 = vset.pattern.permute.xlu0 2
        %542 = vperm.xlu0 %541, %v427
        %v543 = vpop.permute.xlu0 %542
        %545 = vset.pattern.permute.xlu0 2
        %546 = vperm.xlu0 %545, %v428
        %v547 = vpop.permute.xlu0 %546
        %v550 = vlaneseq
        %v551 = vshrl.u32 %v550, 7
        %v552 = vsub.s32 0, %v551
        %v553 = vrot.slane %v472, %v552
        %v555 = vmul.f32 %v535, %v553
        %v556 = vmul.f32 %v539, %v553
        %v557 = vmul.f32 %v543, %v553
        %v558 = vmul.f32 %v547, %v553
        %v559 = vadd.f32 %v529, %v555
        %v560 = vadd.f32 %v530, %v556
        %v561 = vadd.f32 %v531, %v557
        %v562 = vadd.f32 %v532, %v558
        %564 = vset.pattern.permute.xlu0 0
        %565 = vperm.xlu0 %564, %v429
        %v566 = vpop.permute.xlu0 %565
        %569 = vset.pattern.permute.xlu0 0
        %570 = vperm.xlu0 %569, %v430
        %v571 = vpop.permute.xlu0 %570
        %574 = vset.pattern.permute.xlu0 0
        %575 = vperm.xlu0 %574, %v431
        %v576 = vpop.permute.xlu0 %575
        %579 = vset.pattern.permute.xlu0 0
        %580 = vperm.xlu0 %579, %v432
        %v581 = vpop.permute.xlu0 %580
        %v583 = vadd.f32 %v559, %v566
        %v584 = vadd.f32 %v560, %v571
        %v585 = vadd.f32 %v561, %v576
        %v586 = vadd.f32 %v562, %v581
        %v587 = vand.u32 2147483647, %v583
        %vm588 = vcmp.le.f32.partialorder %v587, 0.7853982
        %vm589 = vcmp.lt.s32.totalorder %v583, 0
        %v590 = vand.u32 %v583, 2139095040
        %v591 = vshrl.u32 %v590, 23
        %v592 = vsub.s32 %v591, 127
        %v593 = vand.u32 2147483647, %v583
        %v594 = vand.u32 %v593, 8388607
        %v595 = vor.u32 %v594, 8388608
        %v596 = vsub.s32 0, %v595
        %v597 = vadd.s32 %v592, 1
        %vm598 = vcmp.gt.s32.totalorder %v597, 0
        %v599 = vsel %vm598, %v597, 0
        %v600 = vshrl.u32 %v599, 5
        %v601 = vand.u32 %v599, 31
        %v602 = vsub.s32 32, %v601
        %v603 = vshrl.u32 683565275, %v602
        %v604 = vshll.u32 683565275, %v601
        %v605 = vshrl.u32 2475754826, %v602
        %v606 = vor.u32 %v604, %v605
        %v607 = vshll.u32 2475754826, %v601
        %v608 = vshrl.u32 2131351028, %v602
        %v609 = vor.u32 %v607, %v608
        %v610 = vshll.u32 2131351028, %v601
        %v611 = vshrl.u32 2102212464, %v602
        %v612 = vor.u32 %v610, %v611
        %v613 = vshll.u32 2102212464, %v601
        %v614 = vshrl.u32 920167782, %v602
        %v615 = vor.u32 %v613, %v614
        %v616 = vshll.u32 920167782, %v601
        %v617 = vshrl.u32 1326507024, %v602
        %v618 = vor.u32 %v616, %v617
        %vm619 = vcmp.lt.s32.totalorder %v600, 1
        %vm620 = vcmp.lt.s32.totalorder %v600, 2
        %vm621 = vcmp.lt.s32.totalorder %v600, 3
        %vm622 = vcmp.lt.s32.totalorder %v600, 4
        %v623 = vsel %vm619, %v603, %v606
        %v624 = vsel %vm622, %v612, 2102212464
        %v625 = vsel %vm621, %v609, %v624
        %v626 = vsel %vm620, %v623, %v625
        %v627 = vsel %vm619, %v606, %v609
        %v628 = vsel %vm622, %v615, 920167782
        %v629 = vsel %vm621, %v612, %v628
        %v630 = vsel %vm620, %v627, %v629
        %v631 = vsel %vm619, %v609, %v612
        %v632 = vsel %vm622, %v618, 1326507024
        %v633 = vsel %vm621, %v615, %v632
        %v634 = vsel %vm620, %v631, %v633
        %v635 = vshll.u32 %v595, 8
        %v636 = vmul.u32.u64.compose %v635, %v634
        %v637 = vextract.low.u32 %v636
        %v638 = vextract.high.u32 %v636
        %v639 = vmul.u32.u64.compose %v635, %v630
        %v640 = vextract.low.u32 %v639
        %v641 = vextract.high.u32 %v639
        %v642 = vmul.u32 %v635, %v626
        %v643 = vadd.s32 %v638, %v640
        %vm644 = vc.u32 %v638, %v640
        %v645 = vadd.s32 %v641, 1
        %v646 = vsel %vm644, %v645, %v641
        %v647 = vadd.s32 %v642, %v646
        %v648 = vadd.s32 %v647, 536870912
        %v649 = vshrl.u32 %v648, 30
        %v650 = vshll.u32 %v649, 30
        %v651 = vsub.s32 %v647, %v650
        %vm652 = vcmp.lt.s32.totalorder %v651, 0
        %v653 = vsub.s32 0, %v651
        %v654 = vsel %vm652, %v653, %v651
        %v655 = vclz %v654
        %v656 = vsub.s32 %v655, 2
        %vm657 = vcmp.gt.s32.totalorder 0, %v656
        %v658 = vsel %vm657, 0, %v656
        %v659 = vsub.s32 32, %v658
        %v660 = vshll.u32 %v651, %v658
        %v661 = vshrl.u32 %v643, %v659
        %v662 = vor.u32 %v660, %v661
        %v663 = vsub.s32 4294967266, %v658
        %v664 = vadd.s32 %v663, 127
        %v665 = vshll.u32 %v664, 23
        %v666 = vor.u32 4788187, %v665
        %v667 = vand.u32 2147483647, %v666
        %v669 = vcvt.s32.f32 %v662
        %v670 = vmul.f32 %v669, %v667
        %v671 = vxor.u32 %v670, 2147483648
        %v672 = vsel %vm589, %v671, %v670
        %v673 = vsub.s32 4, %v649
        %v674 = vsel %vm589, %v673, %v649
        %v675 = vsel %vm588, %v583, %v672
        %v676 = vsel %vm588, 0, %v674
        %v677 = vcosq.f32.pop %v675
        %v678 = vsinq.f32.pop %v675
        %vm679 = vweird.f32 %v583
        %v680 = vadd.s32 %v676, 3
        %v681 = vand.u32 %v680, 3
        %vm682 = vcmp.lt.s32.totalorder %v681, 2
        %vm683 = vcmp.eq.s32.totalorder %v681, 0
        %v684 = vxor.u32 %v678, 2147483648
        %v685 = vsel %vm683, %v677, %v684
        %vm686 = vcmp.eq.s32.totalorder %v681, 2
        %v687 = vxor.u32 %v677, 2147483648
        %v688 = vsel %vm686, %v687, %v678
        %v689 = vsel %vm682, %v685, %v688
        %v690 = vsel %vm679, nan, %v689
        %v691 = vand.u32 2147483647, %v584
        %vm692 = vcmp.le.f32.partialorder %v691, 0.7853982
        %vm693 = vcmp.lt.s32.totalorder %v584, 0
        %v694 = vand.u32 %v584, 2139095040
        %v695 = vshrl.u32 %v694, 23
        %v696 = vsub.s32 %v695, 127
        %v697 = vand.u32 2147483647, %v584
        %v698 = vand.u32 %v697, 8388607
        %v699 = vor.u32 %v698, 8388608
        %v700 = vsub.s32 0, %v699
        %v701 = vadd.s32 %v696, 1
        %vm702 = vcmp.gt.s32.totalorder %v701, 0
        %v703 = vsel %vm702, %v701, 0
        %v704 = vshrl.u32 %v703, 5
        %v705 = vand.u32 %v703, 31
        %v706 = vsub.s32 32, %v705
        %v707 = vshrl.u32 683565275, %v706
        %v708 = vshll.u32 683565275, %v705
        %v709 = vshrl.u32 2475754826, %v706
        %v710 = vor.u32 %v708, %v709
        %v711 = vshll.u32 2475754826, %v705
        %v712 = vshrl.u32 2131351028, %v706
        %v713 = vor.u32 %v711, %v712
        %v714 = vshll.u32 2131351028, %v705
        %v715 = vshrl.u32 2102212464, %v706
        %v716 = vor.u32 %v714, %v715
        %v717 = vshll.u32 2102212464, %v705
        %v718 = vshrl.u32 920167782, %v706
        %v719 = vor.u32 %v717, %v718
        %v720 = vshll.u32 920167782, %v705
        %v721 = vshrl.u32 1326507024, %v706
        %v722 = vor.u32 %v720, %v721
        %vm723 = vcmp.lt.s32.totalorder %v704, 1
        %vm724 = vcmp.lt.s32.totalorder %v704, 2
        %vm725 = vcmp.lt.s32.totalorder %v704, 3
        %vm726 = vcmp.lt.s32.totalorder %v704, 4
        %v727 = vsel %vm723, %v707, %v710
        %v728 = vsel %vm726, %v716, 2102212464
        %v729 = vsel %vm725, %v713, %v728
        %v730 = vsel %vm724, %v727, %v729
        %v731 = vsel %vm723, %v710, %v713
        %v732 = vsel %vm726, %v719, 920167782
        %v733 = vsel %vm725, %v716, %v732
        %v734 = vsel %vm724, %v731, %v733
        %v735 = vsel %vm723, %v713, %v716
        %v736 = vsel %vm726, %v722, 1326507024
        %v737 = vsel %vm725, %v719, %v736
        %v738 = vsel %vm724, %v735, %v737
        %v739 = vshll.u32 %v699, 8
        %v740 = vmul.u32.u64.compose %v739, %v738
        %v741 = vextract.low.u32 %v740
        %v742 = vextract.high.u32 %v740
        %v743 = vmul.u32.u64.compose %v739, %v734
        %v744 = vextract.low.u32 %v743
        %v745 = vextract.high.u32 %v743
        %v746 = vmul.u32 %v739, %v730
        %v747 = vadd.s32 %v742, %v744
        %vm748 = vc.u32 %v742, %v744
        %v749 = vadd.s32 %v745, 1
        %v750 = vsel %vm748, %v749, %v745
        %v751 = vadd.s32 %v746, %v750
        %v752 = vadd.s32 %v751, 536870912
        %v753 = vshrl.u32 %v752, 30
        %v754 = vshll.u32 %v753, 30
        %v755 = vsub.s32 %v751, %v754
        %vm756 = vcmp.lt.s32.totalorder %v755, 0
        %v757 = vsub.s32 0, %v755
        %v758 = vsel %vm756, %v757, %v755
        %v759 = vclz %v758
        %v760 = vsub.s32 %v759, 2
        %vm761 = vcmp.gt.s32.totalorder 0, %v760
        %v762 = vsel %vm761, 0, %v760
        %v763 = vsub.s32 32, %v762
        %v764 = vshll.u32 %v755, %v762
        %v765 = vshrl.u32 %v747, %v763
        %v766 = vor.u32 %v764, %v765
        %v767 = vsub.s32 4294967266, %v762
        %v768 = vadd.s32 %v767, 127
        %v769 = vshll.u32 %v768, 23
        %v770 = vor.u32 4788187, %v769
        %v771 = vand.u32 2147483647, %v770
        %v773 = vcvt.s32.f32 %v766
        %v774 = vmul.f32 %v773, %v771
        %v775 = vxor.u32 %v774, 2147483648
        %v776 = vsel %vm693, %v775, %v774
        %v777 = vsub.s32 4, %v753
        %v778 = vsel %vm693, %v777, %v753
        %v779 = vsel %vm692, %v584, %v776
        %v780 = vsel %vm692, 0, %v778
        %v781 = vcosq.f32.pop %v779
        %v782 = vsinq.f32.pop %v779
        %vm783 = vweird.f32 %v584
        %v784 = vadd.s32 %v780, 3
        %v785 = vand.u32 %v784, 3
        %vm786 = vcmp.lt.s32.totalorder %v785, 2
        %vm787 = vcmp.eq.s32.totalorder %v785, 0
        %v788 = vxor.u32 %v782, 2147483648
        %v789 = vsel %vm787, %v781, %v788
        %vm790 = vcmp.eq.s32.totalorder %v785, 2
        %v791 = vxor.u32 %v781, 2147483648
        %v792 = vsel %vm790, %v791, %v782
        %v793 = vsel %vm786, %v789, %v792
        %v794 = vsel %vm783, nan, %v793
        %v795 = vand.u32 2147483647, %v585
        %vm796 = vcmp.le.f32.partialorder %v795, 0.7853982
        %vm797 = vcmp.lt.s32.totalorder %v585, 0
        %v798 = vand.u32 %v585, 2139095040
        %v799 = vshrl.u32 %v798, 23
        %v800 = vsub.s32 %v799, 127
        %v801 = vand.u32 2147483647, %v585
        %v802 = vand.u32 %v801, 8388607
        %v803 = vor.u32 %v802, 8388608
        %v804 = vsub.s32 0, %v803
        %v805 = vadd.s32 %v800, 1
        %vm806 = vcmp.gt.s32.totalorder %v805, 0
        %v807 = vsel %vm806, %v805, 0
        %v808 = vshrl.u32 %v807, 5
        %v809 = vand.u32 %v807, 31
        %v810 = vsub.s32 32, %v809
        %v811 = vshrl.u32 683565275, %v810
        %v812 = vshll.u32 683565275, %v809
        %v813 = vshrl.u32 2475754826, %v810
        %v814 = vor.u32 %v812, %v813
        %v815 = vshll.u32 2475754826, %v809
        %v816 = vshrl.u32 2131351028, %v810
        %v817 = vor.u32 %v815, %v816
        %v818 = vshll.u32 2131351028, %v809
        %v819 = vshrl.u32 2102212464, %v810
        %v820 = vor.u32 %v818, %v819
        %v821 = vshll.u32 2102212464, %v809
        %v822 = vshrl.u32 920167782, %v810
        %v823 = vor.u32 %v821, %v822
        %v824 = vshll.u32 920167782, %v809
        %v825 = vshrl.u32 1326507024, %v810
        %v826 = vor.u32 %v824, %v825
        %vm827 = vcmp.lt.s32.totalorder %v808, 1
        %vm828 = vcmp.lt.s32.totalorder %v808, 2
        %vm829 = vcmp.lt.s32.totalorder %v808, 3
        %vm830 = vcmp.lt.s32.totalorder %v808, 4
        %v831 = vsel %vm827, %v811, %v814
        %v832 = vsel %vm830, %v820, 2102212464
        %v833 = vsel %vm829, %v817, %v832
        %v834 = vsel %vm828, %v831, %v833
        %v835 = vsel %vm827, %v814, %v817
        %v836 = vsel %vm830, %v823, 920167782
        %v837 = vsel %vm829, %v820, %v836
        %v838 = vsel %vm828, %v835, %v837
        %v839 = vsel %vm827, %v817, %v820
        %v840 = vsel %vm830, %v826, 1326507024
        %v841 = vsel %vm829, %v823, %v840
        %v842 = vsel %vm828, %v839, %v841
        %v843 = vshll.u32 %v803, 8
        %v844 = vmul.u32.u64.compose %v843, %v842
        %v845 = vextract.low.u32 %v844
        %v846 = vextract.high.u32 %v844
        %v847 = vmul.u32.u64.compose %v843, %v838
        %v848 = vextract.low.u32 %v847
        %v849 = vextract.high.u32 %v847
        %v850 = vmul.u32 %v843, %v834
        %v851 = vadd.s32 %v846, %v848
        %vm852 = vc.u32 %v846, %v848
        %v853 = vadd.s32 %v849, 1
        %v854 = vsel %vm852, %v853, %v849
        %v855 = vadd.s32 %v850, %v854
        %v856 = vadd.s32 %v855, 536870912
        %v857 = vshrl.u32 %v856, 30
        %v858 = vshll.u32 %v857, 30
        %v859 = vsub.s32 %v855, %v858
        %vm860 = vcmp.lt.s32.totalorder %v859, 0
        %v861 = vsub.s32 0, %v859
        %v862 = vsel %vm860, %v861, %v859
        %v863 = vclz %v862
        %v864 = vsub.s32 %v863, 2
        %vm865 = vcmp.gt.s32.totalorder 0, %v864
        %v866 = vsel %vm865, 0, %v864
        %v867 = vsub.s32 32, %v866
        %v868 = vshll.u32 %v859, %v866
        %v869 = vshrl.u32 %v851, %v867
        %v870 = vor.u32 %v868, %v869
        %v871 = vsub.s32 4294967266, %v866
        %v872 = vadd.s32 %v871, 127
        %v873 = vshll.u32 %v872, 23
        %v874 = vor.u32 4788187, %v873
        %v875 = vand.u32 2147483647, %v874
        %v877 = vcvt.s32.f32 %v870
        %v878 = vmul.f32 %v877, %v875
        %v879 = vxor.u32 %v878, 2147483648
        %v880 = vsel %vm797, %v879, %v878
        %v881 = vsub.s32 4, %v857
        %v882 = vsel %vm797, %v881, %v857
        %v883 = vsel %vm796, %v585, %v880
        %v884 = vsel %vm796, 0, %v882
        %v885 = vcosq.f32.pop %v883
        %v886 = vsinq.f32.pop %v883
        %vm887 = vweird.f32 %v585
        %v888 = vadd.s32 %v884, 3
        %v889 = vand.u32 %v888, 3
        %vm890 = vcmp.lt.s32.totalorder %v889, 2
        %vm891 = vcmp.eq.s32.totalorder %v889, 0
        %v892 = vxor.u32 %v886, 2147483648
        %v893 = vsel %vm891, %v885, %v892
        %vm894 = vcmp.eq.s32.totalorder %v889, 2
        %v895 = vxor.u32 %v885, 2147483648
        %v896 = vsel %vm894, %v895, %v886
        %v897 = vsel %vm890, %v893, %v896
        %v898 = vsel %vm887, nan, %v897
        %v899 = vand.u32 2147483647, %v586
        %vm900 = vcmp.le.f32.partialorder %v899, 0.7853982
        %vm901 = vcmp.lt.s32.totalorder %v586, 0
        %v902 = vand.u32 %v586, 2139095040
        %v903 = vshrl.u32 %v902, 23
        %v904 = vsub.s32 %v903, 127
        %v905 = vand.u32 2147483647, %v586
        %v906 = vand.u32 %v905, 8388607
        %v907 = vor.u32 %v906, 8388608
        %v908 = vsub.s32 0, %v907
        %v909 = vadd.s32 %v904, 1
        %vm910 = vcmp.gt.s32.totalorder %v909, 0
        %v911 = vsel %vm910, %v909, 0
        %v912 = vshrl.u32 %v911, 5
        %v913 = vand.u32 %v911, 31
        %v914 = vsub.s32 32, %v913
        %v915 = vshrl.u32 683565275, %v914
        %v916 = vshll.u32 683565275, %v913
        %v917 = vshrl.u32 2475754826, %v914
        %v918 = vor.u32 %v916, %v917
        %v919 = vshll.u32 2475754826, %v913
        %v920 = vshrl.u32 2131351028, %v914
        %v921 = vor.u32 %v919, %v920
        %v922 = vshll.u32 2131351028, %v913
        %v923 = vshrl.u32 2102212464, %v914
        %v924 = vor.u32 %v922, %v923
        %v925 = vshll.u32 2102212464, %v913
        %v926 = vshrl.u32 920167782, %v914
        %v927 = vor.u32 %v925, %v926
        %v928 = vshll.u32 920167782, %v913
        %v929 = vshrl.u32 1326507024, %v914
        %v930 = vor.u32 %v928, %v929
        %vm931 = vcmp.lt.s32.totalorder %v912, 1
        %vm932 = vcmp.lt.s32.totalorder %v912, 2
        %vm933 = vcmp.lt.s32.totalorder %v912, 3
        %vm934 = vcmp.lt.s32.totalorder %v912, 4
        %v935 = vsel %vm931, %v915, %v918
        %v936 = vsel %vm934, %v924, 2102212464
        %v937 = vsel %vm933, %v921, %v936
        %v938 = vsel %vm932, %v935, %v937
        %v939 = vsel %vm931, %v918, %v921
        %v940 = vsel %vm934, %v927, 920167782
        %v941 = vsel %vm933, %v924, %v940
        %v942 = vsel %vm932, %v939, %v941
        %v943 = vsel %vm931, %v921, %v924
        %v944 = vsel %vm934, %v930, 1326507024
        %v945 = vsel %vm933, %v927, %v944
        %v946 = vsel %vm932, %v943, %v945
        %v947 = vshll.u32 %v907, 8
        %v948 = vmul.u32.u64.compose %v947, %v946
        %v949 = vextract.low.u32 %v948
        %v950 = vextract.high.u32 %v948
        %v951 = vmul.u32.u64.compose %v947, %v942
        %v952 = vextract.low.u32 %v951
        %v953 = vextract.high.u32 %v951
        %v954 = vmul.u32 %v947, %v938
        %v955 = vadd.s32 %v950, %v952
        %vm956 = vc.u32 %v950, %v952
        %v957 = vadd.s32 %v953, 1
        %v958 = vsel %vm956, %v957, %v953
        %v959 = vadd.s32 %v954, %v958
        %v960 = vadd.s32 %v959, 536870912
        %v961 = vshrl.u32 %v960, 30
        %v962 = vshll.u32 %v961, 30
        %v963 = vsub.s32 %v959, %v962
        %vm964 = vcmp.lt.s32.totalorder %v963, 0
        %v965 = vsub.s32 0, %v963
        %v966 = vsel %vm964, %v965, %v963
        %v967 = vclz %v966
        %v968 = vsub.s32 %v967, 2
        %vm969 = vcmp.gt.s32.totalorder 0, %v968
        %v970 = vsel %vm969, 0, %v968
        %v971 = vsub.s32 32, %v970
        %v972 = vshll.u32 %v963, %v970
        %v973 = vshrl.u32 %v955, %v971
        %v974 = vor.u32 %v972, %v973
        %v975 = vsub.s32 4294967266, %v970
        %v976 = vadd.s32 %v975, 127
        %v977 = vshll.u32 %v976, 23
        %v978 = vor.u32 4788187, %v977
        %v979 = vand.u32 2147483647, %v978
        %v981 = vcvt.s32.f32 %v974
        %v982 = vmul.f32 %v981, %v979
        %v983 = vxor.u32 %v982, 2147483648
        %v984 = vsel %vm901, %v983, %v982
        %v985 = vsub.s32 4, %v961
        %v986 = vsel %vm901, %v985, %v961
        %v987 = vsel %vm900, %v586, %v984
        %v988 = vsel %vm900, 0, %v986
        %v989 = vcosq.f32.pop %v987
        %v990 = vsinq.f32.pop %v987
        %vm991 = vweird.f32 %v586
        %v992 = vadd.s32 %v988, 3
        %v993 = vand.u32 %v992, 3
        %vm994 = vcmp.lt.s32.totalorder %v993, 2
        %vm995 = vcmp.eq.s32.totalorder %v993, 0
        %v996 = vxor.u32 %v990, 2147483648
        %v997 = vsel %vm995, %v989, %v996
        %vm998 = vcmp.eq.s32.totalorder %v993, 2
        %v999 = vxor.u32 %v989, 2147483648
        %v1000 = vsel %vm998, %v999, %v990
        %v1001 = vsel %vm994, %v997, %v1000
        %v1002 = vsel %vm991, nan, %v1001
        %1004 = vset.pattern.permute.xlu0 0
        %1005 = vperm.xlu0 %1004, %v437
        %v1006 = vpop.permute.xlu0 %1005
        %1009 = vset.pattern.permute.xlu0 0
        %1010 = vperm.xlu0 %1009, %v438
        %v1011 = vpop.permute.xlu0 %1010
        %1014 = vset.pattern.permute.xlu0 0
        %1015 = vperm.xlu0 %1014, %v439
        %v1016 = vpop.permute.xlu0 %1015
        %1019 = vset.pattern.permute.xlu0 0
        %1020 = vperm.xlu0 %1019, %v440
        %v1021 = vpop.permute.xlu0 %1020
        %vm1023 = vcmask 261120
        %v1025 = vsel %vm1023, %v433, 0
        %v1028 = vsel %vm1023, %v434, 0
        %v1031 = vsel %vm1023, %v435, 0
        %v1034 = vsel %vm1023, %v436, 0
        %1036 = vmatprep.subr.mxu0 0.0
        %1037 = vmatpush1.msra.mxu0 %v690
        %1038 = vmatprep.subr.mxu0 0.0
        %1039 = vmatpush1.msra.mxu0 %v794
        %1040 = vmatprep.subr.mxu0 0.0
        %1041 = vmatpush1.msra.mxu0 %v898
        %1042 = vmatprep.subr.mxu0 0.0
        %1043 = vmatpush1.msra.mxu0 %v1002
        %1044 = vmatprep.subr.mxu0 0.0
        %1045 = vmatpush1.msra.mxu0 0.0
        %1046 = vmatprep.subr.mxu0 0.0
        %1047 = vmatpush1.msra.mxu0 0.0
        %1048 = vmatprep.subr.mxu0 0.0
        %1049 = vmatpush1.msra.mxu0 0.0
        %1050 = vmatprep.subr.mxu0 0.0
        %1051 = vmatpush1.msra.mxu0 0.0
        %1052 = vmatprep.subr.mxu0 0.0
        %1053 = vmatpush1.msra.mxu0 0.0
        %1054 = vmatprep.subr.mxu0 0.0
        %1055 = vmatpush1.msra.mxu0 0.0
        %1056 = vmatprep.subr.mxu0 0.0
        %1057 = vmatpush1.msra.mxu0 0.0
        %1058 = vmatprep.subr.mxu0 0.0
        %1059 = vmatpush1.msra.mxu0 0.0
        %1060 = vmatprep.subr.mxu0 0.0
        %1061 = vmatpush1.msra.mxu0 0.0
        %1062 = vmatprep.subr.mxu0 0.0
        %1063 = vmatpush1.msra.mxu0 0.0
        %1064 = vmatprep.subr.mxu0 0.0
        %1065 = vmatpush1.msra.mxu0 0.0
        %1066 = vmatprep.subr.mxu0 0.0
        %1067 = vmatpush1.msra.mxu0 0.0
        %1068 = vmatprep.subr.mxu0 0.0
        %1069 = vmatpush1.msra.mxu0 0.0
        %1070 = vmatprep.subr.mxu0 0.0
        %1071 = vmatpush1.msra.mxu0 0.0
        %1072 = vmatprep.subr.mxu0 0.0
        %1073 = vmatpush1.msra.mxu0 0.0
        %1074 = vmatprep.subr.mxu0 0.0
        %1075 = vmatpush1.msra.mxu0 0.0
        %1076 = vmatprep.subr.mxu0 0.0
        %1077 = vmatpush1.msra.mxu0 0.0
        %1078 = vmatprep.subr.mxu0 0.0
        %1079 = vmatpush1.msra.mxu0 0.0
        %1080 = vmatprep.subr.mxu0 0.0
        %1081 = vmatpush1.msra.mxu0 0.0
        %1082 = vmatprep.subr.mxu0 0.0
        %1083 = vmatpush1.msra.mxu0 0.0
        %1084 = vmatprep.subr.mxu0 0.0
        %1085 = vmatpush1.msra.mxu0 0.0
        %1086 = vmatprep.subr.mxu0 0.0
        %1087 = vmatpush1.msra.mxu0 0.0
        %1088 = vmatprep.subr.mxu0 0.0
        %1089 = vmatpush1.msra.mxu0 0.0
        %1090 = vmatprep.subr.mxu0 0.0
        %1091 = vmatpush1.msra.mxu0 0.0
        %1092 = vmatprep.subr.mxu0 0.0
        %1093 = vmatpush1.msra.mxu0 0.0
        %1094 = vmatprep.subr.mxu0 0.0
        %1095 = vmatpush1.msra.mxu0 0.0
        %1096 = vmatprep.subr.mxu0 0.0
        %1097 = vmatpush1.msra.mxu0 0.0
        %1098 = vmatprep.subr.mxu0 0.0
        %1099 = vmatpush1.msra.mxu0 0.0
        %1100 = vmatprep.mubr.f32.mxu0 0.0
        %1101 = vmatmul.mubr.f32.gmra.mrb[0].mxu0 %v1025
        %v1102 = vpop.f32.mrb[0].mxu0
        %v1103 = vadd.f32 %v1006, %v1102
        %v1104 = vpop.f32.mrb[0].mxu0
        %1105 = vmatprep.mubr.f32.mxu0 0.0
        %1106 = vmatmul.mubr.f32.gmra.mrb[0].mxu0 %v1028
        %v1107 = vpop.f32.mrb[0].mxu0
        %v1108 = vadd.f32 %v1011, %v1107
        %v1109 = vpop.f32.mrb[0].mxu0
        %1110 = vmatprep.mubr.f32.mxu0 0.0
        %1111 = vmatmul.mubr.f32.gmra.mrb[0].mxu0 %v1031
        %v1112 = vpop.f32.mrb[0].mxu0
        %v1113 = vadd.f32 %v1016, %v1112
        %v1114 = vpop.f32.mrb[0].mxu0
        %1115 = vmatprep.mubr.f32.mxu0 0.0
        %1116 = vmatmul.mubr.f32.gmra.mrb[0].mxu0 %v1034
        %v1117 = vpop.f32.mrb[0].mxu0
        %v1118 = vadd.f32 %v1021, %v1117
        %v1119 = vpop.f32.mrb[0].mxu0
        %1120 = vdwg.mxu0
        %v1121 = vtanh.pop %v1103
        %v1122 = vtanh.pop %v1108
        %v1123 = vtanh.pop %v1113
        %v1124 = vtanh.pop %v1118
        %1126 = vset.pattern.permute.xlu0 0
        %1127 = vperm.xlu0 %1126, %v445
        %v1128 = vpop.permute.xlu0 %1127
        %1131 = vset.pattern.permute.xlu0 0
        %1132 = vperm.xlu0 %1131, %v446
        %v1133 = vpop.permute.xlu0 %1132
        %1136 = vset.pattern.permute.xlu0 0
        %1137 = vperm.xlu0 %1136, %v447
        %v1138 = vpop.permute.xlu0 %1137
        %1141 = vset.pattern.permute.xlu0 0
        %1142 = vperm.xlu0 %1141, %v448
        %v1143 = vpop.permute.xlu0 %1142
        %v1146 = vsel %vm1023, %v441, 0
        %v1149 = vsel %vm1023, %v442, 0
        %v1152 = vsel %vm1023, %v443, 0
        %v1155 = vsel %vm1023, %v444, 0
        %1157 = vmatprep.subr.mxu0 0.0
        %1158 = vmatpush1.msra.mxu0 %v1121
        %1159 = vmatprep.subr.mxu0 0.0
        %1160 = vmatpush1.msra.mxu0 %v1122
        %1161 = vmatprep.subr.mxu0 0.0
        %1162 = vmatpush1.msra.mxu0 %v1123
        %1163 = vmatprep.subr.mxu0 0.0
        %1164 = vmatpush1.msra.mxu0 %v1124
        %1165 = vmatprep.subr.mxu0 0.0
        %1166 = vmatpush1.msra.mxu0 0.0
        %1167 = vmatprep.subr.mxu0 0.0
        %1168 = vmatpush1.msra.mxu0 0.0
        %1169 = vmatprep.subr.mxu0 0.0
        %1170 = vmatpush1.msra.mxu0 0.0
        %1171 = vmatprep.subr.mxu0 0.0
        %1172 = vmatpush1.msra.mxu0 0.0
        %1173 = vmatprep.subr.mxu0 0.0
        %1174 = vmatpush1.msra.mxu0 0.0
        %1175 = vmatprep.subr.mxu0 0.0
        %1176 = vmatpush1.msra.mxu0 0.0
        %1177 = vmatprep.subr.mxu0 0.0
        %1178 = vmatpush1.msra.mxu0 0.0
        %1179 = vmatprep.subr.mxu0 0.0
        %1180 = vmatpush1.msra.mxu0 0.0
        %1181 = vmatprep.subr.mxu0 0.0
        %1182 = vmatpush1.msra.mxu0 0.0
        %1183 = vmatprep.subr.mxu0 0.0
        %1184 = vmatpush1.msra.mxu0 0.0
        %1185 = vmatprep.subr.mxu0 0.0
        %1186 = vmatpush1.msra.mxu0 0.0
        %1187 = vmatprep.subr.mxu0 0.0
        %1188 = vmatpush1.msra.mxu0 0.0
        %1189 = vmatprep.subr.mxu0 0.0
        %1190 = vmatpush1.msra.mxu0 0.0
        %1191 = vmatprep.subr.mxu0 0.0
        %1192 = vmatpush1.msra.mxu0 0.0
        %1193 = vmatprep.subr.mxu0 0.0
        %1194 = vmatpush1.msra.mxu0 0.0
        %1195 = vmatprep.subr.mxu0 0.0
        %1196 = vmatpush1.msra.mxu0 0.0
        %1197 = vmatprep.subr.mxu0 0.0
        %1198 = vmatpush1.msra.mxu0 0.0
        %1199 = vmatprep.subr.mxu0 0.0
        %1200 = vmatpush1.msra.mxu0 0.0
        %1201 = vmatprep.subr.mxu0 0.0
        %1202 = vmatpush1.msra.mxu0 0.0
        %1203 = vmatprep.subr.mxu0 0.0
        %1204 = vmatpush1.msra.mxu0 0.0
        %1205 = vmatprep.subr.mxu0 0.0
        %1206 = vmatpush1.msra.mxu0 0.0
        %1207 = vmatprep.subr.mxu0 0.0
        %1208 = vmatpush1.msra.mxu0 0.0
        %1209 = vmatprep.subr.mxu0 0.0
        %1210 = vmatpush1.msra.mxu0 0.0
        %1211 = vmatprep.subr.mxu0 0.0
        %1212 = vmatpush1.msra.mxu0 0.0
        %1213 = vmatprep.subr.mxu0 0.0
        %1214 = vmatpush1.msra.mxu0 0.0
        %1215 = vmatprep.subr.mxu0 0.0
        %1216 = vmatpush1.msra.mxu0 0.0
        %1217 = vmatprep.subr.mxu0 0.0
        %1218 = vmatpush1.msra.mxu0 0.0
        %1219 = vmatprep.subr.mxu0 0.0
        %1220 = vmatpush1.msra.mxu0 0.0
        %1221 = vmatprep.mubr.f32.mxu0 0.0
        %1222 = vmatmul.mubr.f32.gmra.mrb[0].mxu0 %v1146
        %v1223 = vpop.f32.mrb[0].mxu0
        %v1224 = vadd.f32 %v1128, %v1223
        %v1225 = vpop.f32.mrb[0].mxu0
        %1226 = vmatprep.mubr.f32.mxu0 0.0
        %1227 = vmatmul.mubr.f32.gmra.mrb[0].mxu0 %v1149
        %v1228 = vpop.f32.mrb[0].mxu0
        %v1229 = vadd.f32 %v1133, %v1228
        %v1230 = vpop.f32.mrb[0].mxu0
        %1231 = vmatprep.mubr.f32.mxu0 0.0
        %1232 = vmatmul.mubr.f32.gmra.mrb[0].mxu0 %v1152
        %v1233 = vpop.f32.mrb[0].mxu0
        %v1234 = vadd.f32 %v1138, %v1233
        %v1235 = vpop.f32.mrb[0].mxu0
        %1236 = vmatprep.mubr.f32.mxu0 0.0
        %1237 = vmatmul.mubr.f32.gmra.mrb[0].mxu0 %v1155
        %v1238 = vpop.f32.mrb[0].mxu0
        %v1239 = vadd.f32 %v1143, %v1238
        %v1240 = vpop.f32.mrb[0].mxu0
        %1241 = vdwg.mxu0
        %v1242 = vtanh.pop %v1224
        %v1243 = vtanh.pop %v1229
        %v1244 = vtanh.pop %v1234
        %v1245 = vtanh.pop %v1239
        %v1246 = vmul.f32 %v457, %v1242
        %v1247 = vmul.f32 %v461, %v1243
        %v1248 = vmul.f32 %v465, %v1244
        %v1249 = vmul.f32 %v469, %v1245
        %v1250 = vadd.f32 %v1246, %v1247
        %v1251 = vadd.f32 %v1250, %v1248
        %v1252 = vadd.f32 %v1251, %v1249
        %v1253 = vrot.slane %v1252, 4
        %v1254 = vadd.f32 %v1252, %v1253
        %v1255 = vrot.slane %v1254, 2
        %v1256 = vadd.f32 %v1254, %v1255
        %v1257 = vrot.slane %v1256, 1
        %v1258 = vadd.f32 %v1256, %v1257
        %1260 = vset.pattern.permute.xlu0 0
        %1261 = vperm.xlu0 %1260, %v450
        %v1262 = vpop.permute.xlu0 %1261
        %v1264 = vlaneseq
        %v1265 = vshrl.u32 %v1264, 7
        %v1266 = vsub.s32 0, %v1265
        %v1267 = vrot.slane %v1262, %v1266
        %v1268 = vadd.f32 %v1258, %v1267
        %v1269 = vlaneseq
        %vm1270 = vcmp.ge.s32.totalorder %v1269, 0
        %vm1271 = vcmp.lt.s32.totalorder %v1269, 128
        %vm1272 = vmand %vm1270, %vm1271
        %1273 = vst.msk [vmem:[%s408] sm:$0x1] %vm1272, %v1268
        %s1274 = scalar_lea.vmem %s412, 1
        %v1275 = vld [vmem:[%s1274] sm:$0x1]
        %s1276 = scalar_lea.vmem %s417, 1
        %v1277 = vld [vmem:[%s1276] sm:$0x1]
        %s1278 = scalar_lea.vmem %s422, 1
        %v1279 = vld [vmem:[%s1278] sm:$0x1]
        %v1281 = vlaneseq
        %v1282 = vshrl.u32 %v1281, 7
        %v1283 = vsub.s32 0, %v1282
        %v1284 = vrot.slane %v1275, %v1283
        %v1286 = vmul.f32 %v476, %v1284
        %v1287 = vmul.f32 %v481, %v1284
        %v1288 = vmul.f32 %v486, %v1284
        %v1289 = vmul.f32 %v491, %v1284
        %v1291 = vlaneseq
        %v1292 = vshrl.u32 %v1291, 7
        %v1293 = vsub.s32 0, %v1292
        %v1294 = vrot.slane %v1277, %v1293
        %v1296 = vmul.f32 %v505, %v1294
        %v1297 = vmul.f32 %v509, %v1294
        %v1298 = vmul.f32 %v513, %v1294
        %v1299 = vmul.f32 %v517, %v1294
        %v1300 = vadd.f32 %v1286, %v1296
        %v1301 = vadd.f32 %v1287, %v1297
        %v1302 = vadd.f32 %v1288, %v1298
        %v1303 = vadd.f32 %v1289, %v1299
        %v1305 = vlaneseq
        %v1306 = vshrl.u32 %v1305, 7
        %v1307 = vsub.s32 0, %v1306
        %v1308 = vrot.slane %v1279, %v1307
        %v1310 = vmul.f32 %v535, %v1308
        %v1311 = vmul.f32 %v539, %v1308
        %v1312 = vmul.f32 %v543, %v1308
        %v1313 = vmul.f32 %v547, %v1308
        %v1314 = vadd.f32 %v1300, %v1310
        %v1315 = vadd.f32 %v1301, %v1311
        %v1316 = vadd.f32 %v1302, %v1312
        %v1317 = vadd.f32 %v1303, %v1313
        %v1318 = vadd.f32 %v1314, %v566
        %v1319 = vadd.f32 %v1315, %v571
        %v1320 = vadd.f32 %v1316, %v576
        %v1321 = vadd.f32 %v1317, %v581
        %v1322 = vand.u32 2147483647, %v1318
        %vm1323 = vcmp.le.f32.partialorder %v1322, 0.7853982
        %vm1324 = vcmp.lt.s32.totalorder %v1318, 0
        %v1325 = vand.u32 %v1318, 2139095040
        %v1326 = vshrl.u32 %v1325, 23
        %v1327 = vsub.s32 %v1326, 127
        %v1328 = vand.u32 2147483647, %v1318
        %v1329 = vand.u32 %v1328, 8388607
        %v1330 = vor.u32 %v1329, 8388608
        %v1331 = vsub.s32 0, %v1330
        %v1332 = vadd.s32 %v1327, 1
        %vm1333 = vcmp.gt.s32.totalorder %v1332, 0
        %v1334 = vsel %vm1333, %v1332, 0
        %v1335 = vshrl.u32 %v1334, 5
        %v1336 = vand.u32 %v1334, 31
        %v1337 = vsub.s32 32, %v1336
        %v1338 = vshrl.u32 683565275, %v1337
        %v1339 = vshll.u32 683565275, %v1336
        %v1340 = vshrl.u32 2475754826, %v1337
        %v1341 = vor.u32 %v1339, %v1340
        %v1342 = vshll.u32 2475754826, %v1336
        %v1343 = vshrl.u32 2131351028, %v1337
        %v1344 = vor.u32 %v1342, %v1343
        %v1345 = vshll.u32 2131351028, %v1336
        %v1346 = vshrl.u32 2102212464, %v1337
        %v1347 = vor.u32 %v1345, %v1346
        %v1348 = vshll.u32 2102212464, %v1336
        %v1349 = vshrl.u32 920167782, %v1337
        %v1350 = vor.u32 %v1348, %v1349
        %v1351 = vshll.u32 920167782, %v1336
        %v1352 = vshrl.u32 1326507024, %v1337
        %v1353 = vor.u32 %v1351, %v1352
        %vm1354 = vcmp.lt.s32.totalorder %v1335, 1
        %vm1355 = vcmp.lt.s32.totalorder %v1335, 2
        %vm1356 = vcmp.lt.s32.totalorder %v1335, 3
        %vm1357 = vcmp.lt.s32.totalorder %v1335, 4
        %v1358 = vsel %vm1354, %v1338, %v1341
        %v1359 = vsel %vm1357, %v1347, 2102212464
        %v1360 = vsel %vm1356, %v1344, %v1359
        %v1361 = vsel %vm1355, %v1358, %v1360
        %v1362 = vsel %vm1354, %v1341, %v1344
        %v1363 = vsel %vm1357, %v1350, 920167782
        %v1364 = vsel %vm1356, %v1347, %v1363
        %v1365 = vsel %vm1355, %v1362, %v1364
        %v1366 = vsel %vm1354, %v1344, %v1347
        %v1367 = vsel %vm1357, %v1353, 1326507024
        %v1368 = vsel %vm1356, %v1350, %v1367
        %v1369 = vsel %vm1355, %v1366, %v1368
        %v1370 = vshll.u32 %v1330, 8
        %v1371 = vmul.u32.u64.compose %v1370, %v1369
        %v1372 = vextract.low.u32 %v1371
        %v1373 = vextract.high.u32 %v1371
        %v1374 = vmul.u32.u64.compose %v1370, %v1365
        %v1375 = vextract.low.u32 %v1374
        %v1376 = vextract.high.u32 %v1374
        %v1377 = vmul.u32 %v1370, %v1361
        %v1378 = vadd.s32 %v1373, %v1375
        %vm1379 = vc.u32 %v1373, %v1375
        %v1380 = vadd.s32 %v1376, 1
        %v1381 = vsel %vm1379, %v1380, %v1376
        %v1382 = vadd.s32 %v1377, %v1381
        %v1383 = vadd.s32 %v1382, 536870912
        %v1384 = vshrl.u32 %v1383, 30
        %v1385 = vshll.u32 %v1384, 30
        %v1386 = vsub.s32 %v1382, %v1385
        %vm1387 = vcmp.lt.s32.totalorder %v1386, 0
        %v1388 = vsub.s32 0, %v1386
        %v1389 = vsel %vm1387, %v1388, %v1386
        %v1390 = vclz %v1389
        %v1391 = vsub.s32 %v1390, 2
        %vm1392 = vcmp.gt.s32.totalorder 0, %v1391
        %v1393 = vsel %vm1392, 0, %v1391
        %v1394 = vsub.s32 32, %v1393
        %v1395 = vshll.u32 %v1386, %v1393
        %v1396 = vshrl.u32 %v1378, %v1394
        %v1397 = vor.u32 %v1395, %v1396
        %v1398 = vsub.s32 4294967266, %v1393
        %v1399 = vadd.s32 %v1398, 127
        %v1400 = vshll.u32 %v1399, 23
        %v1401 = vor.u32 4788187, %v1400
        %v1402 = vand.u32 2147483647, %v1401
        %v1404 = vcvt.s32.f32 %v1397
        %v1405 = vmul.f32 %v1404, %v1402
        %v1406 = vxor.u32 %v1405, 2147483648
        %v1407 = vsel %vm1324, %v1406, %v1405
        %v1408 = vsub.s32 4, %v1384
        %v1409 = vsel %vm1324, %v1408, %v1384
        %v1410 = vsel %vm1323, %v1318, %v1407
        %v1411 = vsel %vm1323, 0, %v1409
        %v1412 = vcosq.f32.pop %v1410
        %v1413 = vsinq.f32.pop %v1410
        %vm1414 = vweird.f32 %v1318
        %v1415 = vadd.s32 %v1411, 3
        %v1416 = vand.u32 %v1415, 3
        %vm1417 = vcmp.lt.s32.totalorder %v1416, 2
        %vm1418 = vcmp.eq.s32.totalorder %v1416, 0
        %v1419 = vxor.u32 %v1413, 2147483648
        %v1420 = vsel %vm1418, %v1412, %v1419
        %vm1421 = vcmp.eq.s32.totalorder %v1416, 2
        %v1422 = vxor.u32 %v1412, 2147483648
        %v1423 = vsel %vm1421, %v1422, %v1413
        %v1424 = vsel %vm1417, %v1420, %v1423
        %v1425 = vsel %vm1414, nan, %v1424
        %v1426 = vand.u32 2147483647, %v1319
        %vm1427 = vcmp.le.f32.partialorder %v1426, 0.7853982
        %vm1428 = vcmp.lt.s32.totalorder %v1319, 0
        %v1429 = vand.u32 %v1319, 2139095040
        %v1430 = vshrl.u32 %v1429, 23
        %v1431 = vsub.s32 %v1430, 127
        %v1432 = vand.u32 2147483647, %v1319
        %v1433 = vand.u32 %v1432, 8388607
        %v1434 = vor.u32 %v1433, 8388608
        %v1435 = vsub.s32 0, %v1434
        %v1436 = vadd.s32 %v1431, 1
        %vm1437 = vcmp.gt.s32.totalorder %v1436, 0
        %v1438 = vsel %vm1437, %v1436, 0
        %v1439 = vshrl.u32 %v1438, 5
        %v1440 = vand.u32 %v1438, 31
        %v1441 = vsub.s32 32, %v1440
        %v1442 = vshrl.u32 683565275, %v1441
        %v1443 = vshll.u32 683565275, %v1440
        %v1444 = vshrl.u32 2475754826, %v1441
        %v1445 = vor.u32 %v1443, %v1444
        %v1446 = vshll.u32 2475754826, %v1440
        %v1447 = vshrl.u32 2131351028, %v1441
        %v1448 = vor.u32 %v1446, %v1447
        %v1449 = vshll.u32 2131351028, %v1440
        %v1450 = vshrl.u32 2102212464, %v1441
        %v1451 = vor.u32 %v1449, %v1450
        %v1452 = vshll.u32 2102212464, %v1440
        %v1453 = vshrl.u32 920167782, %v1441
        %v1454 = vor.u32 %v1452, %v1453
        %v1455 = vshll.u32 920167782, %v1440
        %v1456 = vshrl.u32 1326507024, %v1441
        %v1457 = vor.u32 %v1455, %v1456
        %vm1458 = vcmp.lt.s32.totalorder %v1439, 1
        %vm1459 = vcmp.lt.s32.totalorder %v1439, 2
        %vm1460 = vcmp.lt.s32.totalorder %v1439, 3
        %vm1461 = vcmp.lt.s32.totalorder %v1439, 4
        %v1462 = vsel %vm1458, %v1442, %v1445
        %v1463 = vsel %vm1461, %v1451, 2102212464
        %v1464 = vsel %vm1460, %v1448, %v1463
        %v1465 = vsel %vm1459, %v1462, %v1464
        %v1466 = vsel %vm1458, %v1445, %v1448
        %v1467 = vsel %vm1461, %v1454, 920167782
        %v1468 = vsel %vm1460, %v1451, %v1467
        %v1469 = vsel %vm1459, %v1466, %v1468
        %v1470 = vsel %vm1458, %v1448, %v1451
        %v1471 = vsel %vm1461, %v1457, 1326507024
        %v1472 = vsel %vm1460, %v1454, %v1471
        %v1473 = vsel %vm1459, %v1470, %v1472
        %v1474 = vshll.u32 %v1434, 8
        %v1475 = vmul.u32.u64.compose %v1474, %v1473
        %v1476 = vextract.low.u32 %v1475
        %v1477 = vextract.high.u32 %v1475
        %v1478 = vmul.u32.u64.compose %v1474, %v1469
        %v1479 = vextract.low.u32 %v1478
        %v1480 = vextract.high.u32 %v1478
        %v1481 = vmul.u32 %v1474, %v1465
        %v1482 = vadd.s32 %v1477, %v1479
        %vm1483 = vc.u32 %v1477, %v1479
        %v1484 = vadd.s32 %v1480, 1
        %v1485 = vsel %vm1483, %v1484, %v1480
        %v1486 = vadd.s32 %v1481, %v1485
        %v1487 = vadd.s32 %v1486, 536870912
        %v1488 = vshrl.u32 %v1487, 30
        %v1489 = vshll.u32 %v1488, 30
        %v1490 = vsub.s32 %v1486, %v1489
        %vm1491 = vcmp.lt.s32.totalorder %v1490, 0
        %v1492 = vsub.s32 0, %v1490
        %v1493 = vsel %vm1491, %v1492, %v1490
        %v1494 = vclz %v1493
        %v1495 = vsub.s32 %v1494, 2
        %vm1496 = vcmp.gt.s32.totalorder 0, %v1495
        %v1497 = vsel %vm1496, 0, %v1495
        %v1498 = vsub.s32 32, %v1497
        %v1499 = vshll.u32 %v1490, %v1497
        %v1500 = vshrl.u32 %v1482, %v1498
        %v1501 = vor.u32 %v1499, %v1500
        %v1502 = vsub.s32 4294967266, %v1497
        %v1503 = vadd.s32 %v1502, 127
        %v1504 = vshll.u32 %v1503, 23
        %v1505 = vor.u32 4788187, %v1504
        %v1506 = vand.u32 2147483647, %v1505
        %v1508 = vcvt.s32.f32 %v1501
        %v1509 = vmul.f32 %v1508, %v1506
        %v1510 = vxor.u32 %v1509, 2147483648
        %v1511 = vsel %vm1428, %v1510, %v1509
        %v1512 = vsub.s32 4, %v1488
        %v1513 = vsel %vm1428, %v1512, %v1488
        %v1514 = vsel %vm1427, %v1319, %v1511
        %v1515 = vsel %vm1427, 0, %v1513
        %v1516 = vcosq.f32.pop %v1514
        %v1517 = vsinq.f32.pop %v1514
        %vm1518 = vweird.f32 %v1319
        %v1519 = vadd.s32 %v1515, 3
        %v1520 = vand.u32 %v1519, 3
        %vm1521 = vcmp.lt.s32.totalorder %v1520, 2
        %vm1522 = vcmp.eq.s32.totalorder %v1520, 0
        %v1523 = vxor.u32 %v1517, 2147483648
        %v1524 = vsel %vm1522, %v1516, %v1523
        %vm1525 = vcmp.eq.s32.totalorder %v1520, 2
        %v1526 = vxor.u32 %v1516, 2147483648
        %v1527 = vsel %vm1525, %v1526, %v1517
        %v1528 = vsel %vm1521, %v1524, %v1527
        %v1529 = vsel %vm1518, nan, %v1528
        %v1530 = vand.u32 2147483647, %v1320
        %vm1531 = vcmp.le.f32.partialorder %v1530, 0.7853982
        %vm1532 = vcmp.lt.s32.totalorder %v1320, 0
        %v1533 = vand.u32 %v1320, 2139095040
        %v1534 = vshrl.u32 %v1533, 23
        %v1535 = vsub.s32 %v1534, 127
        %v1536 = vand.u32 2147483647, %v1320
        %v1537 = vand.u32 %v1536, 8388607
        %v1538 = vor.u32 %v1537, 8388608
        %v1539 = vsub.s32 0, %v1538
        %v1540 = vadd.s32 %v1535, 1
        %vm1541 = vcmp.gt.s32.totalorder %v1540, 0
        %v1542 = vsel %vm1541, %v1540, 0
        %v1543 = vshrl.u32 %v1542, 5
        %v1544 = vand.u32 %v1542, 31
        %v1545 = vsub.s32 32, %v1544
        %v1546 = vshrl.u32 683565275, %v1545
        %v1547 = vshll.u32 683565275, %v1544
        %v1548 = vshrl.u32 2475754826, %v1545
        %v1549 = vor.u32 %v1547, %v1548
        %v1550 = vshll.u32 2475754826, %v1544
        %v1551 = vshrl.u32 2131351028, %v1545
        %v1552 = vor.u32 %v1550, %v1551
        %v1553 = vshll.u32 2131351028, %v1544
        %v1554 = vshrl.u32 2102212464, %v1545
        %v1555 = vor.u32 %v1553, %v1554
        %v1556 = vshll.u32 2102212464, %v1544
        %v1557 = vshrl.u32 920167782, %v1545
        %v1558 = vor.u32 %v1556, %v1557
        %v1559 = vshll.u32 920167782, %v1544
        %v1560 = vshrl.u32 1326507024, %v1545
        %v1561 = vor.u32 %v1559, %v1560
        %vm1562 = vcmp.lt.s32.totalorder %v1543, 1
        %vm1563 = vcmp.lt.s32.totalorder %v1543, 2
        %vm1564 = vcmp.lt.s32.totalorder %v1543, 3
        %vm1565 = vcmp.lt.s32.totalorder %v1543, 4
        %v1566 = vsel %vm1562, %v1546, %v1549
        %v1567 = vsel %vm1565, %v1555, 2102212464
        %v1568 = vsel %vm1564, %v1552, %v1567
        %v1569 = vsel %vm1563, %v1566, %v1568
        %v1570 = vsel %vm1562, %v1549, %v1552
        %v1571 = vsel %vm1565, %v1558, 920167782
        %v1572 = vsel %vm1564, %v1555, %v1571
        %v1573 = vsel %vm1563, %v1570, %v1572
        %v1574 = vsel %vm1562, %v1552, %v1555
        %v1575 = vsel %vm1565, %v1561, 1326507024
        %v1576 = vsel %vm1564, %v1558, %v1575
        %v1577 = vsel %vm1563, %v1574, %v1576
        %v1578 = vshll.u32 %v1538, 8
        %v1579 = vmul.u32.u64.compose %v1578, %v1577
        %v1580 = vextract.low.u32 %v1579
        %v1581 = vextract.high.u32 %v1579
        %v1582 = vmul.u32.u64.compose %v1578, %v1573
        %v1583 = vextract.low.u32 %v1582
        %v1584 = vextract.high.u32 %v1582
        %v1585 = vmul.u32 %v1578, %v1569
        %v1586 = vadd.s32 %v1581, %v1583
        %vm1587 = vc.u32 %v1581, %v1583
        %v1588 = vadd.s32 %v1584, 1
        %v1589 = vsel %vm1587, %v1588, %v1584
        %v1590 = vadd.s32 %v1585, %v1589
        %v1591 = vadd.s32 %v1590, 536870912
        %v1592 = vshrl.u32 %v1591, 30
        %v1593 = vshll.u32 %v1592, 30
        %v1594 = vsub.s32 %v1590, %v1593
        %vm1595 = vcmp.lt.s32.totalorder %v1594, 0
        %v1596 = vsub.s32 0, %v1594
        %v1597 = vsel %vm1595, %v1596, %v1594
        %v1598 = vclz %v1597
        %v1599 = vsub.s32 %v1598, 2
        %vm1600 = vcmp.gt.s32.totalorder 0, %v1599
        %v1601 = vsel %vm1600, 0, %v1599
        %v1602 = vsub.s32 32, %v1601
        %v1603 = vshll.u32 %v1594, %v1601
        %v1604 = vshrl.u32 %v1586, %v1602
        %v1605 = vor.u32 %v1603, %v1604
        %v1606 = vsub.s32 4294967266, %v1601
        %v1607 = vadd.s32 %v1606, 127
        %v1608 = vshll.u32 %v1607, 23
        %v1609 = vor.u32 4788187, %v1608
        %v1610 = vand.u32 2147483647, %v1609
        %v1612 = vcvt.s32.f32 %v1605
        %v1613 = vmul.f32 %v1612, %v1610
        %v1614 = vxor.u32 %v1613, 2147483648
        %v1615 = vsel %vm1532, %v1614, %v1613
        %v1616 = vsub.s32 4, %v1592
        %v1617 = vsel %vm1532, %v1616, %v1592
        %v1618 = vsel %vm1531, %v1320, %v1615
        %v1619 = vsel %vm1531, 0, %v1617
        %v1620 = vcosq.f32.pop %v1618
        %v1621 = vsinq.f32.pop %v1618
        %vm1622 = vweird.f32 %v1320
        %v1623 = vadd.s32 %v1619, 3
        %v1624 = vand.u32 %v1623, 3
        %vm1625 = vcmp.lt.s32.totalorder %v1624, 2
        %vm1626 = vcmp.eq.s32.totalorder %v1624, 0
        %v1627 = vxor.u32 %v1621, 2147483648
        %v1628 = vsel %vm1626, %v1620, %v1627
        %vm1629 = vcmp.eq.s32.totalorder %v1624, 2
        %v1630 = vxor.u32 %v1620, 2147483648
        %v1631 = vsel %vm1629, %v1630, %v1621
        %v1632 = vsel %vm1625, %v1628, %v1631
        %v1633 = vsel %vm1622, nan, %v1632
        %v1634 = vand.u32 2147483647, %v1321
        %vm1635 = vcmp.le.f32.partialorder %v1634, 0.7853982
        %vm1636 = vcmp.lt.s32.totalorder %v1321, 0
        %v1637 = vand.u32 %v1321, 2139095040
        %v1638 = vshrl.u32 %v1637, 23
        %v1639 = vsub.s32 %v1638, 127
        %v1640 = vand.u32 2147483647, %v1321
        %v1641 = vand.u32 %v1640, 8388607
        %v1642 = vor.u32 %v1641, 8388608
        %v1643 = vsub.s32 0, %v1642
        %v1644 = vadd.s32 %v1639, 1
        %vm1645 = vcmp.gt.s32.totalorder %v1644, 0
        %v1646 = vsel %vm1645, %v1644, 0
        %v1647 = vshrl.u32 %v1646, 5
        %v1648 = vand.u32 %v1646, 31
        %v1649 = vsub.s32 32, %v1648
        %v1650 = vshrl.u32 683565275, %v1649
        %v1651 = vshll.u32 683565275, %v1648
        %v1652 = vshrl.u32 2475754826, %v1649
        %v1653 = vor.u32 %v1651, %v1652
        %v1654 = vshll.u32 2475754826, %v1648
        %v1655 = vshrl.u32 2131351028, %v1649
        %v1656 = vor.u32 %v1654, %v1655
        %v1657 = vshll.u32 2131351028, %v1648
        %v1658 = vshrl.u32 2102212464, %v1649
        %v1659 = vor.u32 %v1657, %v1658
        %v1660 = vshll.u32 2102212464, %v1648
        %v1661 = vshrl.u32 920167782, %v1649
        %v1662 = vor.u32 %v1660, %v1661
        %v1663 = vshll.u32 920167782, %v1648
        %v1664 = vshrl.u32 1326507024, %v1649
        %v1665 = vor.u32 %v1663, %v1664
        %vm1666 = vcmp.lt.s32.totalorder %v1647, 1
        %vm1667 = vcmp.lt.s32.totalorder %v1647, 2
        %vm1668 = vcmp.lt.s32.totalorder %v1647, 3
        %vm1669 = vcmp.lt.s32.totalorder %v1647, 4
        %v1670 = vsel %vm1666, %v1650, %v1653
        %v1671 = vsel %vm1669, %v1659, 2102212464
        %v1672 = vsel %vm1668, %v1656, %v1671
        %v1673 = vsel %vm1667, %v1670, %v1672
        %v1674 = vsel %vm1666, %v1653, %v1656
        %v1675 = vsel %vm1669, %v1662, 920167782
        %v1676 = vsel %vm1668, %v1659, %v1675
        %v1677 = vsel %vm1667, %v1674, %v1676
        %v1678 = vsel %vm1666, %v1656, %v1659
        %v1679 = vsel %vm1669, %v1665, 1326507024
        %v1680 = vsel %vm1668, %v1662, %v1679
        %v1681 = vsel %vm1667, %v1678, %v1680
        %v1682 = vshll.u32 %v1642, 8
        %v1683 = vmul.u32.u64.compose %v1682, %v1681
        %v1684 = vextract.low.u32 %v1683
        %v1685 = vextract.high.u32 %v1683
        %v1686 = vmul.u32.u64.compose %v1682, %v1677
        %v1687 = vextract.low.u32 %v1686
        %v1688 = vextract.high.u32 %v1686
        %v1689 = vmul.u32 %v1682, %v1673
        %v1690 = vadd.s32 %v1685, %v1687
        %vm1691 = vc.u32 %v1685, %v1687
        %v1692 = vadd.s32 %v1688, 1
        %v1693 = vsel %vm1691, %v1692, %v1688
        %v1694 = vadd.s32 %v1689, %v1693
        %v1695 = vadd.s32 %v1694, 536870912
        %v1696 = vshrl.u32 %v1695, 30
        %v1697 = vshll.u32 %v1696, 30
        %v1698 = vsub.s32 %v1694, %v1697
        %vm1699 = vcmp.lt.s32.totalorder %v1698, 0
        %v1700 = vsub.s32 0, %v1698
        %v1701 = vsel %vm1699, %v1700, %v1698
        %v1702 = vclz %v1701
        %v1703 = vsub.s32 %v1702, 2
        %vm1704 = vcmp.gt.s32.totalorder 0, %v1703
        %v1705 = vsel %vm1704, 0, %v1703
        %v1706 = vsub.s32 32, %v1705
        %v1707 = vshll.u32 %v1698, %v1705
        %v1708 = vshrl.u32 %v1690, %v1706
        %v1709 = vor.u32 %v1707, %v1708
        %v1710 = vsub.s32 4294967266, %v1705
        %v1711 = vadd.s32 %v1710, 127
        %v1712 = vshll.u32 %v1711, 23
        %v1713 = vor.u32 4788187, %v1712
        %v1714 = vand.u32 2147483647, %v1713
        %v1716 = vcvt.s32.f32 %v1709
        %v1717 = vmul.f32 %v1716, %v1714
        %v1718 = vxor.u32 %v1717, 2147483648
        %v1719 = vsel %vm1636, %v1718, %v1717
        %v1720 = vsub.s32 4, %v1696
        %v1721 = vsel %vm1636, %v1720, %v1696
        %v1722 = vsel %vm1635, %v1321, %v1719
        %v1723 = vsel %vm1635, 0, %v1721
        %v1724 = vcosq.f32.pop %v1722
        %v1725 = vsinq.f32.pop %v1722
        %vm1726 = vweird.f32 %v1321
        %v1727 = vadd.s32 %v1723, 3
        %v1728 = vand.u32 %v1727, 3
        %vm1729 = vcmp.lt.s32.totalorder %v1728, 2
        %vm1730 = vcmp.eq.s32.totalorder %v1728, 0
        %v1731 = vxor.u32 %v1725, 2147483648
        %v1732 = vsel %vm1730, %v1724, %v1731
        %vm1733 = vcmp.eq.s32.totalorder %v1728, 2
        %v1734 = vxor.u32 %v1724, 2147483648
        %v1735 = vsel %vm1733, %v1734, %v1725
        %v1736 = vsel %vm1729, %v1732, %v1735
        %v1737 = vsel %vm1726, nan, %v1736
        %1738 = vmatprep.subr.mxu0 0.0
        %1739 = vmatpush1.msra.mxu0 %v1425
        %1740 = vmatprep.subr.mxu0 0.0
        %1741 = vmatpush1.msra.mxu0 %v1529
        %1742 = vmatprep.subr.mxu0 0.0
        %1743 = vmatpush1.msra.mxu0 %v1633
        %1744 = vmatprep.subr.mxu0 0.0
        %1745 = vmatpush1.msra.mxu0 %v1737
        %1746 = vmatprep.subr.mxu0 0.0
        %1747 = vmatpush1.msra.mxu0 0.0
        %1748 = vmatprep.subr.mxu0 0.0
        %1749 = vmatpush1.msra.mxu0 0.0
        %1750 = vmatprep.subr.mxu0 0.0
        %1751 = vmatpush1.msra.mxu0 0.0
        %1752 = vmatprep.subr.mxu0 0.0
        %1753 = vmatpush1.msra.mxu0 0.0
        %1754 = vmatprep.subr.mxu0 0.0
        %1755 = vmatpush1.msra.mxu0 0.0
        %1756 = vmatprep.subr.mxu0 0.0
        %1757 = vmatpush1.msra.mxu0 0.0
        %1758 = vmatprep.subr.mxu0 0.0
        %1759 = vmatpush1.msra.mxu0 0.0
        %1760 = vmatprep.subr.mxu0 0.0
        %1761 = vmatpush1.msra.mxu0 0.0
        %1762 = vmatprep.subr.mxu0 0.0
        %1763 = vmatpush1.msra.mxu0 0.0
        %1764 = vmatprep.subr.mxu0 0.0
        %1765 = vmatpush1.msra.mxu0 0.0
        %1766 = vmatprep.subr.mxu0 0.0
        %1767 = vmatpush1.msra.mxu0 0.0
        %1768 = vmatprep.subr.mxu0 0.0
        %1769 = vmatpush1.msra.mxu0 0.0
        %1770 = vmatprep.subr.mxu0 0.0
        %1771 = vmatpush1.msra.mxu0 0.0
        %1772 = vmatprep.subr.mxu0 0.0
        %1773 = vmatpush1.msra.mxu0 0.0
        %1774 = vmatprep.subr.mxu0 0.0
        %1775 = vmatpush1.msra.mxu0 0.0
        %1776 = vmatprep.subr.mxu0 0.0
        %1777 = vmatpush1.msra.mxu0 0.0
        %1778 = vmatprep.subr.mxu0 0.0
        %1779 = vmatpush1.msra.mxu0 0.0
        %1780 = vmatprep.subr.mxu0 0.0
        %1781 = vmatpush1.msra.mxu0 0.0
        %1782 = vmatprep.subr.mxu0 0.0
        %1783 = vmatpush1.msra.mxu0 0.0
        %1784 = vmatprep.subr.mxu0 0.0
        %1785 = vmatpush1.msra.mxu0 0.0
        %1786 = vmatprep.subr.mxu0 0.0
        %1787 = vmatpush1.msra.mxu0 0.0
        %1788 = vmatprep.subr.mxu0 0.0
        %1789 = vmatpush1.msra.mxu0 0.0
        %1790 = vmatprep.subr.mxu0 0.0
        %1791 = vmatpush1.msra.mxu0 0.0
        %1792 = vmatprep.subr.mxu0 0.0
        %1793 = vmatpush1.msra.mxu0 0.0
        %1794 = vmatprep.subr.mxu0 0.0
        %1795 = vmatpush1.msra.mxu0 0.0
        %1796 = vmatprep.subr.mxu0 0.0
        %1797 = vmatpush1.msra.mxu0 0.0
        %1798 = vmatprep.subr.mxu0 0.0
        %1799 = vmatpush1.msra.mxu0 0.0
        %1800 = vmatprep.subr.mxu0 0.0
        %1801 = vmatpush1.msra.mxu0 0.0
        %1802 = vmatprep.mubr.f32.mxu0 0.0
        %1803 = vmatmul.mubr.f32.gmra.mrb[0].mxu0 %v1025
        %v1804 = vpop.f32.mrb[0].mxu0
        %v1805 = vadd.f32 %v1006, %v1804
        %v1806 = vpop.f32.mrb[0].mxu0
        %1807 = vmatprep.mubr.f32.mxu0 0.0
        %1808 = vmatmul.mubr.f32.gmra.mrb[0].mxu0 %v1028
        %v1809 = vpop.f32.mrb[0].mxu0
        %v1810 = vadd.f32 %v1011, %v1809
        %v1811 = vpop.f32.mrb[0].mxu0
        %1812 = vmatprep.mubr.f32.mxu0 0.0
        %1813 = vmatmul.mubr.f32.gmra.mrb[0].mxu0 %v1031
        %v1814 = vpop.f32.mrb[0].mxu0
        %v1815 = vadd.f32 %v1016, %v1814
        %v1816 = vpop.f32.mrb[0].mxu0
        %1817 = vmatprep.mubr.f32.mxu0 0.0
        %1818 = vmatmul.mubr.f32.gmra.mrb[0].mxu0 %v1034
        %v1819 = vpop.f32.mrb[0].mxu0
        %v1820 = vadd.f32 %v1021, %v1819
        %v1821 = vpop.f32.mrb[0].mxu0
        %1822 = vdwg.mxu0
        %v1823 = vtanh.pop %v1805
        %v1824 = vtanh.pop %v1810
        %v1825 = vtanh.pop %v1815
        %v1826 = vtanh.pop %v1820
        %1827 = vmatprep.subr.mxu0 0.0
        %1828 = vmatpush1.msra.mxu0 %v1823
        %1829 = vmatprep.subr.mxu0 0.0
        %1830 = vmatpush1.msra.mxu0 %v1824
        %1831 = vmatprep.subr.mxu0 0.0
        %1832 = vmatpush1.msra.mxu0 %v1825
        %1833 = vmatprep.subr.mxu0 0.0
        %1834 = vmatpush1.msra.mxu0 %v1826
        %1835 = vmatprep.subr.mxu0 0.0
        %1836 = vmatpush1.msra.mxu0 0.0
        %1837 = vmatprep.subr.mxu0 0.0
        %1838 = vmatpush1.msra.mxu0 0.0
        %1839 = vmatprep.subr.mxu0 0.0
        %1840 = vmatpush1.msra.mxu0 0.0
        %1841 = vmatprep.subr.mxu0 0.0
        %1842 = vmatpush1.msra.mxu0 0.0
        %1843 = vmatprep.subr.mxu0 0.0
        %1844 = vmatpush1.msra.mxu0 0.0
        %1845 = vmatprep.subr.mxu0 0.0
        %1846 = vmatpush1.msra.mxu0 0.0
        %1847 = vmatprep.subr.mxu0 0.0
        %1848 = vmatpush1.msra.mxu0 0.0
        %1849 = vmatprep.subr.mxu0 0.0
        %1850 = vmatpush1.msra.mxu0 0.0
        %1851 = vmatprep.subr.mxu0 0.0
        %1852 = vmatpush1.msra.mxu0 0.0
        %1853 = vmatprep.subr.mxu0 0.0
        %1854 = vmatpush1.msra.mxu0 0.0
        %1855 = vmatprep.subr.mxu0 0.0
        %1856 = vmatpush1.msra.mxu0 0.0
        %1857 = vmatprep.subr.mxu0 0.0
        %1858 = vmatpush1.msra.mxu0 0.0
        %1859 = vmatprep.subr.mxu0 0.0
        %1860 = vmatpush1.msra.mxu0 0.0
        %1861 = vmatprep.subr.mxu0 0.0
        %1862 = vmatpush1.msra.mxu0 0.0
        %1863 = vmatprep.subr.mxu0 0.0
        %1864 = vmatpush1.msra.mxu0 0.0
        %1865 = vmatprep.subr.mxu0 0.0
        %1866 = vmatpush1.msra.mxu0 0.0
        %1867 = vmatprep.subr.mxu0 0.0
        %1868 = vmatpush1.msra.mxu0 0.0
        %1869 = vmatprep.subr.mxu0 0.0
        %1870 = vmatpush1.msra.mxu0 0.0
        %1871 = vmatprep.subr.mxu0 0.0
        %1872 = vmatpush1.msra.mxu0 0.0
        %1873 = vmatprep.subr.mxu0 0.0
        %1874 = vmatpush1.msra.mxu0 0.0
        %1875 = vmatprep.subr.mxu0 0.0
        %1876 = vmatpush1.msra.mxu0 0.0
        %1877 = vmatprep.subr.mxu0 0.0
        %1878 = vmatpush1.msra.mxu0 0.0
        %1879 = vmatprep.subr.mxu0 0.0
        %1880 = vmatpush1.msra.mxu0 0.0
        %1881 = vmatprep.subr.mxu0 0.0
        %1882 = vmatpush1.msra.mxu0 0.0
        %1883 = vmatprep.subr.mxu0 0.0
        %1884 = vmatpush1.msra.mxu0 0.0
        %1885 = vmatprep.subr.mxu0 0.0
        %1886 = vmatpush1.msra.mxu0 0.0
        %1887 = vmatprep.subr.mxu0 0.0
        %1888 = vmatpush1.msra.mxu0 0.0
        %1889 = vmatprep.subr.mxu0 0.0
        %1890 = vmatpush1.msra.mxu0 0.0
        %1891 = vmatprep.mubr.f32.mxu0 0.0
        %1892 = vmatmul.mubr.f32.gmra.mrb[0].mxu0 %v1146
        %v1893 = vpop.f32.mrb[0].mxu0
        %v1894 = vadd.f32 %v1128, %v1893
        %v1895 = vpop.f32.mrb[0].mxu0
        %1896 = vmatprep.mubr.f32.mxu0 0.0
        %1897 = vmatmul.mubr.f32.gmra.mrb[0].mxu0 %v1149
        %v1898 = vpop.f32.mrb[0].mxu0
        %v1899 = vadd.f32 %v1133, %v1898
        %v1900 = vpop.f32.mrb[0].mxu0
        %1901 = vmatprep.mubr.f32.mxu0 0.0
        %1902 = vmatmul.mubr.f32.gmra.mrb[0].mxu0 %v1152
        %v1903 = vpop.f32.mrb[0].mxu0
        %v1904 = vadd.f32 %v1138, %v1903
        %v1905 = vpop.f32.mrb[0].mxu0
        %1906 = vmatprep.mubr.f32.mxu0 0.0
        %1907 = vmatmul.mubr.f32.gmra.mrb[0].mxu0 %v1155
        %v1908 = vpop.f32.mrb[0].mxu0
        %v1909 = vadd.f32 %v1143, %v1908
        %v1910 = vpop.f32.mrb[0].mxu0
        %1911 = vdwg.mxu0
        %v1912 = vtanh.pop %v1894
        %v1913 = vtanh.pop %v1899
        %v1914 = vtanh.pop %v1904
        %v1915 = vtanh.pop %v1909
        %v1916 = vmul.f32 %v457, %v1912
        %v1917 = vmul.f32 %v461, %v1913
        %v1918 = vmul.f32 %v465, %v1914
        %v1919 = vmul.f32 %v469, %v1915
        %v1920 = vadd.f32 %v1916, %v1917
        %v1921 = vadd.f32 %v1920, %v1918
        %v1922 = vadd.f32 %v1921, %v1919
        %v1923 = vrot.slane %v1922, 4
        %v1924 = vadd.f32 %v1922, %v1923
        %v1925 = vrot.slane %v1924, 2
        %v1926 = vadd.f32 %v1924, %v1925
        %v1927 = vrot.slane %v1926, 1
        %v1928 = vadd.f32 %v1926, %v1927
        %v1929 = vadd.f32 %v1928, %v1267
        %s1930 = scalar_lea.vmem %s408, 1 [#allocation3]
        %1931 = vst.msk [vmem:[%s1930] sm:$0x1] %vm1272, %v1929
        %s1932 = scalar_lea.vmem %s412, 2
        %v1933 = vld [vmem:[%s1932] sm:$0x1]
        %s1934 = scalar_lea.vmem %s417, 2
        %v1935 = vld [vmem:[%s1934] sm:$0x1]
        %s1936 = scalar_lea.vmem %s422, 2
        %v1937 = vld [vmem:[%s1936] sm:$0x1]
        %v1939 = vlaneseq
        %v1940 = vshrl.u32 %v1939, 7
        %v1941 = vsub.s32 0, %v1940
        %v1942 = vrot.slane %v1933, %v1941
        %v1944 = vmul.f32 %v476, %v1942
        %v1945 = vmul.f32 %v481, %v1942
        %v1946 = vmul.f32 %v486, %v1942
        %v1947 = vmul.f32 %v491, %v1942
        %v1949 = vlaneseq
        %v1950 = vshrl.u32 %v1949, 7
        %v1951 = vsub.s32 0, %v1950
        %v1952 = vrot.slane %v1935, %v1951
        %v1954 = vmul.f32 %v505, %v1952
        %v1955 = vmul.f32 %v509, %v1952
        %v1956 = vmul.f32 %v513, %v1952
        %v1957 = vmul.f32 %v517, %v1952
        %v1958 = vadd.f32 %v1944, %v1954
        %v1959 = vadd.f32 %v1945, %v1955
        %v1960 = vadd.f32 %v1946, %v1956
        %v1961 = vadd.f32 %v1947, %v1957
        %v1963 = vlaneseq
        %v1964 = vshrl.u32 %v1963, 7
        %v1965 = vsub.s32 0, %v1964
        %v1966 = vrot.slane %v1937, %v1965
        %v1968 = vmul.f32 %v535, %v1966
        %v1969 = vmul.f32 %v539, %v1966
        %v1970 = vmul.f32 %v543, %v1966
        %v1971 = vmul.f32 %v547, %v1966
        %v1972 = vadd.f32 %v1958, %v1968
        %v1973 = vadd.f32 %v1959, %v1969
        %v1974 = vadd.f32 %v1960, %v1970
        %v1975 = vadd.f32 %v1961, %v1971
        %v1976 = vadd.f32 %v1972, %v566
        %v1977 = vadd.f32 %v1973, %v571
        %v1978 = vadd.f32 %v1974, %v576
        %v1979 = vadd.f32 %v1975, %v581
        %v1980 = vand.u32 2147483647, %v1976
        %vm1981 = vcmp.le.f32.partialorder %v1980, 0.7853982
        %vm1982 = vcmp.lt.s32.totalorder %v1976, 0
        %v1983 = vand.u32 %v1976, 2139095040
        %v1984 = vshrl.u32 %v1983, 23
        %v1985 = vsub.s32 %v1984, 127
        %v1986 = vand.u32 2147483647, %v1976
        %v1987 = vand.u32 %v1986, 8388607
        %v1988 = vor.u32 %v1987, 8388608
        %v1989 = vsub.s32 0, %v1988
        %v1990 = vadd.s32 %v1985, 1
        %vm1991 = vcmp.gt.s32.totalorder %v1990, 0
        %v1992 = vsel %vm1991, %v1990, 0
        %v1993 = vshrl.u32 %v1992, 5
        %v1994 = vand.u32 %v1992, 31
        %v1995 = vsub.s32 32, %v1994
        %v1996 = vshrl.u32 683565275, %v1995
        %v1997 = vshll.u32 683565275, %v1994
        %v1998 = vshrl.u32 2475754826, %v1995
        %v1999 = vor.u32 %v1997, %v1998
        %v2000 = vshll.u32 2475754826, %v1994
        %v2001 = vshrl.u32 2131351028, %v1995
        %v2002 = vor.u32 %v2000, %v2001
        %v2003 = vshll.u32 2131351028, %v1994
        %v2004 = vshrl.u32 2102212464, %v1995
        %v2005 = vor.u32 %v2003, %v2004
        %v2006 = vshll.u32 2102212464, %v1994
        %v2007 = vshrl.u32 920167782, %v1995
        %v2008 = vor.u32 %v2006, %v2007
        %v2009 = vshll.u32 920167782, %v1994
        %v2010 = vshrl.u32 1326507024, %v1995
        %v2011 = vor.u32 %v2009, %v2010
        %vm2012 = vcmp.lt.s32.totalorder %v1993, 1
        %vm2013 = vcmp.lt.s32.totalorder %v1993, 2
        %vm2014 = vcmp.lt.s32.totalorder %v1993, 3
        %vm2015 = vcmp.lt.s32.totalorder %v1993, 4
        %v2016 = vsel %vm2012, %v1996, %v1999
        %v2017 = vsel %vm2015, %v2005, 2102212464
        %v2018 = vsel %vm2014, %v2002, %v2017
        %v2019 = vsel %vm2013, %v2016, %v2018
        %v2020 = vsel %vm2012, %v1999, %v2002
        %v2021 = vsel %vm2015, %v2008, 920167782
        %v2022 = vsel %vm2014, %v2005, %v2021
        %v2023 = vsel %vm2013, %v2020, %v2022
        %v2024 = vsel %vm2012, %v2002, %v2005
        %v2025 = vsel %vm2015, %v2011, 1326507024
        %v2026 = vsel %vm2014, %v2008, %v2025
        %v2027 = vsel %vm2013, %v2024, %v2026
        %v2028 = vshll.u32 %v1988, 8
        %v2029 = vmul.u32.u64.compose %v2028, %v2027
        %v2030 = vextract.low.u32 %v2029
        %v2031 = vextract.high.u32 %v2029
        %v2032 = vmul.u32.u64.compose %v2028, %v2023
        %v2033 = vextract.low.u32 %v2032
        %v2034 = vextract.high.u32 %v2032
        %v2035 = vmul.u32 %v2028, %v2019
        %v2036 = vadd.s32 %v2031, %v2033
        %vm2037 = vc.u32 %v2031, %v2033
        %v2038 = vadd.s32 %v2034, 1
        %v2039 = vsel %vm2037, %v2038, %v2034
        %v2040 = vadd.s32 %v2035, %v2039
        %v2041 = vadd.s32 %v2040, 536870912
        %v2042 = vshrl.u32 %v2041, 30
        %v2043 = vshll.u32 %v2042, 30
        %v2044 = vsub.s32 %v2040, %v2043
        %vm2045 = vcmp.lt.s32.totalorder %v2044, 0
        %v2046 = vsub.s32 0, %v2044
        %v2047 = vsel %vm2045, %v2046, %v2044
        %v2048 = vclz %v2047
        %v2049 = vsub.s32 %v2048, 2
        %vm2050 = vcmp.gt.s32.totalorder 0, %v2049
        %v2051 = vsel %vm2050, 0, %v2049
        %v2052 = vsub.s32 32, %v2051
        %v2053 = vshll.u32 %v2044, %v2051
        %v2054 = vshrl.u32 %v2036, %v2052
        %v2055 = vor.u32 %v2053, %v2054
        %v2056 = vsub.s32 4294967266, %v2051
        %v2057 = vadd.s32 %v2056, 127
        %v2058 = vshll.u32 %v2057, 23
        %v2059 = vor.u32 4788187, %v2058
        %v2060 = vand.u32 2147483647, %v2059
        %v2062 = vcvt.s32.f32 %v2055
        %v2063 = vmul.f32 %v2062, %v2060
        %v2064 = vxor.u32 %v2063, 2147483648
        %v2065 = vsel %vm1982, %v2064, %v2063
        %v2066 = vsub.s32 4, %v2042
        %v2067 = vsel %vm1982, %v2066, %v2042
        %v2068 = vsel %vm1981, %v1976, %v2065
        %v2069 = vsel %vm1981, 0, %v2067
        %v2070 = vcosq.f32.pop %v2068
        %v2071 = vsinq.f32.pop %v2068
        %vm2072 = vweird.f32 %v1976
        %v2073 = vadd.s32 %v2069, 3
        %v2074 = vand.u32 %v2073, 3
        %vm2075 = vcmp.lt.s32.totalorder %v2074, 2
        %vm2076 = vcmp.eq.s32.totalorder %v2074, 0
        %v2077 = vxor.u32 %v2071, 2147483648
        %v2078 = vsel %vm2076, %v2070, %v2077
        %vm2079 = vcmp.eq.s32.totalorder %v2074, 2
        %v2080 = vxor.u32 %v2070, 2147483648
        %v2081 = vsel %vm2079, %v2080, %v2071
        %v2082 = vsel %vm2075, %v2078, %v2081
        %v2083 = vsel %vm2072, nan, %v2082
        %v2084 = vand.u32 2147483647, %v1977
        %vm2085 = vcmp.le.f32.partialorder %v2084, 0.7853982
        %vm2086 = vcmp.lt.s32.totalorder %v1977, 0
        %v2087 = vand.u32 %v1977, 2139095040
        %v2088 = vshrl.u32 %v2087, 23
        %v2089 = vsub.s32 %v2088, 127
        %v2090 = vand.u32 2147483647, %v1977
        %v2091 = vand.u32 %v2090, 8388607
        %v2092 = vor.u32 %v2091, 8388608
        %v2093 = vsub.s32 0, %v2092
        %v2094 = vadd.s32 %v2089, 1
        %vm2095 = vcmp.gt.s32.totalorder %v2094, 0
        %v2096 = vsel %vm2095, %v2094, 0
        %v2097 = vshrl.u32 %v2096, 5
        %v2098 = vand.u32 %v2096, 31
        %v2099 = vsub.s32 32, %v2098
        %v2100 = vshrl.u32 683565275, %v2099
        %v2101 = vshll.u32 683565275, %v2098
        %v2102 = vshrl.u32 2475754826, %v2099
        %v2103 = vor.u32 %v2101, %v2102
        %v2104 = vshll.u32 2475754826, %v2098
        %v2105 = vshrl.u32 2131351028, %v2099
        %v2106 = vor.u32 %v2104, %v2105
        %v2107 = vshll.u32 2131351028, %v2098
        %v2108 = vshrl.u32 2102212464, %v2099
        %v2109 = vor.u32 %v2107, %v2108
        %v2110 = vshll.u32 2102212464, %v2098
        %v2111 = vshrl.u32 920167782, %v2099
        %v2112 = vor.u32 %v2110, %v2111
        %v2113 = vshll.u32 920167782, %v2098
        %v2114 = vshrl.u32 1326507024, %v2099
        %v2115 = vor.u32 %v2113, %v2114
        %vm2116 = vcmp.lt.s32.totalorder %v2097, 1
        %vm2117 = vcmp.lt.s32.totalorder %v2097, 2
        %vm2118 = vcmp.lt.s32.totalorder %v2097, 3
        %vm2119 = vcmp.lt.s32.totalorder %v2097, 4
        %v2120 = vsel %vm2116, %v2100, %v2103
        %v2121 = vsel %vm2119, %v2109, 2102212464
        %v2122 = vsel %vm2118, %v2106, %v2121
        %v2123 = vsel %vm2117, %v2120, %v2122
        %v2124 = vsel %vm2116, %v2103, %v2106
        %v2125 = vsel %vm2119, %v2112, 920167782
        %v2126 = vsel %vm2118, %v2109, %v2125
        %v2127 = vsel %vm2117, %v2124, %v2126
        %v2128 = vsel %vm2116, %v2106, %v2109
        %v2129 = vsel %vm2119, %v2115, 1326507024
        %v2130 = vsel %vm2118, %v2112, %v2129
        %v2131 = vsel %vm2117, %v2128, %v2130
        %v2132 = vshll.u32 %v2092, 8
        %v2133 = vmul.u32.u64.compose %v2132, %v2131
        %v2134 = vextract.low.u32 %v2133
        %v2135 = vextract.high.u32 %v2133
        %v2136 = vmul.u32.u64.compose %v2132, %v2127
        %v2137 = vextract.low.u32 %v2136
        %v2138 = vextract.high.u32 %v2136
        %v2139 = vmul.u32 %v2132, %v2123
        %v2140 = vadd.s32 %v2135, %v2137
        %vm2141 = vc.u32 %v2135, %v2137
        %v2142 = vadd.s32 %v2138, 1
        %v2143 = vsel %vm2141, %v2142, %v2138
        %v2144 = vadd.s32 %v2139, %v2143
        %v2145 = vadd.s32 %v2144, 536870912
        %v2146 = vshrl.u32 %v2145, 30
        %v2147 = vshll.u32 %v2146, 30
        %v2148 = vsub.s32 %v2144, %v2147
        %vm2149 = vcmp.lt.s32.totalorder %v2148, 0
        %v2150 = vsub.s32 0, %v2148
        %v2151 = vsel %vm2149, %v2150, %v2148
        %v2152 = vclz %v2151
        %v2153 = vsub.s32 %v2152, 2
        %vm2154 = vcmp.gt.s32.totalorder 0, %v2153
        %v2155 = vsel %vm2154, 0, %v2153
        %v2156 = vsub.s32 32, %v2155
        %v2157 = vshll.u32 %v2148, %v2155
        %v2158 = vshrl.u32 %v2140, %v2156
        %v2159 = vor.u32 %v2157, %v2158
        %v2160 = vsub.s32 4294967266, %v2155
        %v2161 = vadd.s32 %v2160, 127
        %v2162 = vshll.u32 %v2161, 23
        %v2163 = vor.u32 4788187, %v2162
        %v2164 = vand.u32 2147483647, %v2163
        %v2166 = vcvt.s32.f32 %v2159
        %v2167 = vmul.f32 %v2166, %v2164
        %v2168 = vxor.u32 %v2167, 2147483648
        %v2169 = vsel %vm2086, %v2168, %v2167
        %v2170 = vsub.s32 4, %v2146
        %v2171 = vsel %vm2086, %v2170, %v2146
        %v2172 = vsel %vm2085, %v1977, %v2169
        %v2173 = vsel %vm2085, 0, %v2171
        %v2174 = vcosq.f32.pop %v2172
        %v2175 = vsinq.f32.pop %v2172
        %vm2176 = vweird.f32 %v1977
        %v2177 = vadd.s32 %v2173, 3
        %v2178 = vand.u32 %v2177, 3
        %vm2179 = vcmp.lt.s32.totalorder %v2178, 2
        %vm2180 = vcmp.eq.s32.totalorder %v2178, 0
        %v2181 = vxor.u32 %v2175, 2147483648
        %v2182 = vsel %vm2180, %v2174, %v2181
        %vm2183 = vcmp.eq.s32.totalorder %v2178, 2
        %v2184 = vxor.u32 %v2174, 2147483648
        %v2185 = vsel %vm2183, %v2184, %v2175
        %v2186 = vsel %vm2179, %v2182, %v2185
        %v2187 = vsel %vm2176, nan, %v2186
        %v2188 = vand.u32 2147483647, %v1978
        %vm2189 = vcmp.le.f32.partialorder %v2188, 0.7853982
        %vm2190 = vcmp.lt.s32.totalorder %v1978, 0
        %v2191 = vand.u32 %v1978, 2139095040
        %v2192 = vshrl.u32 %v2191, 23
        %v2193 = vsub.s32 %v2192, 127
        %v2194 = vand.u32 2147483647, %v1978
        %v2195 = vand.u32 %v2194, 8388607
        %v2196 = vor.u32 %v2195, 8388608
        %v2197 = vsub.s32 0, %v2196
        %v2198 = vadd.s32 %v2193, 1
        %vm2199 = vcmp.gt.s32.totalorder %v2198, 0
        %v2200 = vsel %vm2199, %v2198, 0
        %v2201 = vshrl.u32 %v2200, 5
        %v2202 = vand.u32 %v2200, 31
        %v2203 = vsub.s32 32, %v2202
        %v2204 = vshrl.u32 683565275, %v2203
        %v2205 = vshll.u32 683565275, %v2202
        %v2206 = vshrl.u32 2475754826, %v2203
        %v2207 = vor.u32 %v2205, %v2206
        %v2208 = vshll.u32 2475754826, %v2202
        %v2209 = vshrl.u32 2131351028, %v2203
        %v2210 = vor.u32 %v2208, %v2209
        %v2211 = vshll.u32 2131351028, %v2202
        %v2212 = vshrl.u32 2102212464, %v2203
        %v2213 = vor.u32 %v2211, %v2212
        %v2214 = vshll.u32 2102212464, %v2202
        %v2215 = vshrl.u32 920167782, %v2203
        %v2216 = vor.u32 %v2214, %v2215
        %v2217 = vshll.u32 920167782, %v2202
        %v2218 = vshrl.u32 1326507024, %v2203
        %v2219 = vor.u32 %v2217, %v2218
        %vm2220 = vcmp.lt.s32.totalorder %v2201, 1
        %vm2221 = vcmp.lt.s32.totalorder %v2201, 2
        %vm2222 = vcmp.lt.s32.totalorder %v2201, 3
        %vm2223 = vcmp.lt.s32.totalorder %v2201, 4
        %v2224 = vsel %vm2220, %v2204, %v2207
        %v2225 = vsel %vm2223, %v2213, 2102212464
        %v2226 = vsel %vm2222, %v2210, %v2225
        %v2227 = vsel %vm2221, %v2224, %v2226
        %v2228 = vsel %vm2220, %v2207, %v2210
        %v2229 = vsel %vm2223, %v2216, 920167782
        %v2230 = vsel %vm2222, %v2213, %v2229
        %v2231 = vsel %vm2221, %v2228, %v2230
        %v2232 = vsel %vm2220, %v2210, %v2213
        %v2233 = vsel %vm2223, %v2219, 1326507024
        %v2234 = vsel %vm2222, %v2216, %v2233
        %v2235 = vsel %vm2221, %v2232, %v2234
        %v2236 = vshll.u32 %v2196, 8
        %v2237 = vmul.u32.u64.compose %v2236, %v2235
        %v2238 = vextract.low.u32 %v2237
        %v2239 = vextract.high.u32 %v2237
        %v2240 = vmul.u32.u64.compose %v2236, %v2231
        %v2241 = vextract.low.u32 %v2240
        %v2242 = vextract.high.u32 %v2240
        %v2243 = vmul.u32 %v2236, %v2227
        %v2244 = vadd.s32 %v2239, %v2241
        %vm2245 = vc.u32 %v2239, %v2241
        %v2246 = vadd.s32 %v2242, 1
        %v2247 = vsel %vm2245, %v2246, %v2242
        %v2248 = vadd.s32 %v2243, %v2247
        %v2249 = vadd.s32 %v2248, 536870912
        %v2250 = vshrl.u32 %v2249, 30
        %v2251 = vshll.u32 %v2250, 30
        %v2252 = vsub.s32 %v2248, %v2251
        %vm2253 = vcmp.lt.s32.totalorder %v2252, 0
        %v2254 = vsub.s32 0, %v2252
        %v2255 = vsel %vm2253, %v2254, %v2252
        %v2256 = vclz %v2255
        %v2257 = vsub.s32 %v2256, 2
        %vm2258 = vcmp.gt.s32.totalorder 0, %v2257
        %v2259 = vsel %vm2258, 0, %v2257
        %v2260 = vsub.s32 32, %v2259
        %v2261 = vshll.u32 %v2252, %v2259
        %v2262 = vshrl.u32 %v2244, %v2260
        %v2263 = vor.u32 %v2261, %v2262
        %v2264 = vsub.s32 4294967266, %v2259
        %v2265 = vadd.s32 %v2264, 127
        %v2266 = vshll.u32 %v2265, 23
        %v2267 = vor.u32 4788187, %v2266
        %v2268 = vand.u32 2147483647, %v2267
        %v2270 = vcvt.s32.f32 %v2263
        %v2271 = vmul.f32 %v2270, %v2268
        %v2272 = vxor.u32 %v2271, 2147483648
        %v2273 = vsel %vm2190, %v2272, %v2271
        %v2274 = vsub.s32 4, %v2250
        %v2275 = vsel %vm2190, %v2274, %v2250
        %v2276 = vsel %vm2189, %v1978, %v2273
        %v2277 = vsel %vm2189, 0, %v2275
        %v2278 = vcosq.f32.pop %v2276
        %v2279 = vsinq.f32.pop %v2276
        %vm2280 = vweird.f32 %v1978
        %v2281 = vadd.s32 %v2277, 3
        %v2282 = vand.u32 %v2281, 3
        %vm2283 = vcmp.lt.s32.totalorder %v2282, 2
        %vm2284 = vcmp.eq.s32.totalorder %v2282, 0
        %v2285 = vxor.u32 %v2279, 2147483648
        %v2286 = vsel %vm2284, %v2278, %v2285
        %vm2287 = vcmp.eq.s32.totalorder %v2282, 2
        %v2288 = vxor.u32 %v2278, 2147483648
        %v2289 = vsel %vm2287, %v2288, %v2279
        %v2290 = vsel %vm2283, %v2286, %v2289
        %v2291 = vsel %vm2280, nan, %v2290
        %v2292 = vand.u32 2147483647, %v1979
        %vm2293 = vcmp.le.f32.partialorder %v2292, 0.7853982
        %vm2294 = vcmp.lt.s32.totalorder %v1979, 0
        %v2295 = vand.u32 %v1979, 2139095040
        %v2296 = vshrl.u32 %v2295, 23
        %v2297 = vsub.s32 %v2296, 127
        %v2298 = vand.u32 2147483647, %v1979
        %v2299 = vand.u32 %v2298, 8388607
        %v2300 = vor.u32 %v2299, 8388608
        %v2301 = vsub.s32 0, %v2300
        %v2302 = vadd.s32 %v2297, 1
        %vm2303 = vcmp.gt.s32.totalorder %v2302, 0
        %v2304 = vsel %vm2303, %v2302, 0
        %v2305 = vshrl.u32 %v2304, 5
        %v2306 = vand.u32 %v2304, 31
        %v2307 = vsub.s32 32, %v2306
        %v2308 = vshrl.u32 683565275, %v2307
        %v2309 = vshll.u32 683565275, %v2306
        %v2310 = vshrl.u32 2475754826, %v2307
        %v2311 = vor.u32 %v2309, %v2310
        %v2312 = vshll.u32 2475754826, %v2306
        %v2313 = vshrl.u32 2131351028, %v2307
        %v2314 = vor.u32 %v2312, %v2313
        %v2315 = vshll.u32 2131351028, %v2306
        %v2316 = vshrl.u32 2102212464, %v2307
        %v2317 = vor.u32 %v2315, %v2316
        %v2318 = vshll.u32 2102212464, %v2306
        %v2319 = vshrl.u32 920167782, %v2307
        %v2320 = vor.u32 %v2318, %v2319
        %v2321 = vshll.u32 920167782, %v2306
        %v2322 = vshrl.u32 1326507024, %v2307
        %v2323 = vor.u32 %v2321, %v2322
        %vm2324 = vcmp.lt.s32.totalorder %v2305, 1
        %vm2325 = vcmp.lt.s32.totalorder %v2305, 2
        %vm2326 = vcmp.lt.s32.totalorder %v2305, 3
        %vm2327 = vcmp.lt.s32.totalorder %v2305, 4
        %v2328 = vsel %vm2324, %v2308, %v2311
        %v2329 = vsel %vm2327, %v2317, 2102212464
        %v2330 = vsel %vm2326, %v2314, %v2329
        %v2331 = vsel %vm2325, %v2328, %v2330
        %v2332 = vsel %vm2324, %v2311, %v2314
        %v2333 = vsel %vm2327, %v2320, 920167782
        %v2334 = vsel %vm2326, %v2317, %v2333
        %v2335 = vsel %vm2325, %v2332, %v2334
        %v2336 = vsel %vm2324, %v2314, %v2317
        %v2337 = vsel %vm2327, %v2323, 1326507024
        %v2338 = vsel %vm2326, %v2320, %v2337
        %v2339 = vsel %vm2325, %v2336, %v2338
        %v2340 = vshll.u32 %v2300, 8
        %v2341 = vmul.u32.u64.compose %v2340, %v2339
        %v2342 = vextract.low.u32 %v2341
        %v2343 = vextract.high.u32 %v2341
        %v2344 = vmul.u32.u64.compose %v2340, %v2335
        %v2345 = vextract.low.u32 %v2344
        %v2346 = vextract.high.u32 %v2344
        %v2347 = vmul.u32 %v2340, %v2331
        %v2348 = vadd.s32 %v2343, %v2345
        %vm2349 = vc.u32 %v2343, %v2345
        %v2350 = vadd.s32 %v2346, 1
        %v2351 = vsel %vm2349, %v2350, %v2346
        %v2352 = vadd.s32 %v2347, %v2351
        %v2353 = vadd.s32 %v2352, 536870912
        %v2354 = vshrl.u32 %v2353, 30
        %v2355 = vshll.u32 %v2354, 30
        %v2356 = vsub.s32 %v2352, %v2355
        %vm2357 = vcmp.lt.s32.totalorder %v2356, 0
        %v2358 = vsub.s32 0, %v2356
        %v2359 = vsel %vm2357, %v2358, %v2356
        %v2360 = vclz %v2359
        %v2361 = vsub.s32 %v2360, 2
        %vm2362 = vcmp.gt.s32.totalorder 0, %v2361
        %v2363 = vsel %vm2362, 0, %v2361
        %v2364 = vsub.s32 32, %v2363
        %v2365 = vshll.u32 %v2356, %v2363
        %v2366 = vshrl.u32 %v2348, %v2364
        %v2367 = vor.u32 %v2365, %v2366
        %v2368 = vsub.s32 4294967266, %v2363
        %v2369 = vadd.s32 %v2368, 127
        %v2370 = vshll.u32 %v2369, 23
        %v2371 = vor.u32 4788187, %v2370
        %v2372 = vand.u32 2147483647, %v2371
        %v2374 = vcvt.s32.f32 %v2367
        %v2375 = vmul.f32 %v2374, %v2372
        %v2376 = vxor.u32 %v2375, 2147483648
        %v2377 = vsel %vm2294, %v2376, %v2375
        %v2378 = vsub.s32 4, %v2354
        %v2379 = vsel %vm2294, %v2378, %v2354
        %v2380 = vsel %vm2293, %v1979, %v2377
        %v2381 = vsel %vm2293, 0, %v2379
        %v2382 = vcosq.f32.pop %v2380
        %v2383 = vsinq.f32.pop %v2380
        %vm2384 = vweird.f32 %v1979
        %v2385 = vadd.s32 %v2381, 3
        %v2386 = vand.u32 %v2385, 3
        %vm2387 = vcmp.lt.s32.totalorder %v2386, 2
        %vm2388 = vcmp.eq.s32.totalorder %v2386, 0
        %v2389 = vxor.u32 %v2383, 2147483648
        %v2390 = vsel %vm2388, %v2382, %v2389
        %vm2391 = vcmp.eq.s32.totalorder %v2386, 2
        %v2392 = vxor.u32 %v2382, 2147483648
        %v2393 = vsel %vm2391, %v2392, %v2383
        %v2394 = vsel %vm2387, %v2390, %v2393
        %v2395 = vsel %vm2384, nan, %v2394
        %2396 = vmatprep.subr.mxu0 0.0
        %2397 = vmatpush1.msra.mxu0 %v2083
        %2398 = vmatprep.subr.mxu0 0.0
        %2399 = vmatpush1.msra.mxu0 %v2187
        %2400 = vmatprep.subr.mxu0 0.0
        %2401 = vmatpush1.msra.mxu0 %v2291
        %2402 = vmatprep.subr.mxu0 0.0
        %2403 = vmatpush1.msra.mxu0 %v2395
        %2404 = vmatprep.subr.mxu0 0.0
        %2405 = vmatpush1.msra.mxu0 0.0
        %2406 = vmatprep.subr.mxu0 0.0
        %2407 = vmatpush1.msra.mxu0 0.0
        %2408 = vmatprep.subr.mxu0 0.0
        %2409 = vmatpush1.msra.mxu0 0.0
        %2410 = vmatprep.subr.mxu0 0.0
        %2411 = vmatpush1.msra.mxu0 0.0
        %2412 = vmatprep.subr.mxu0 0.0
        %2413 = vmatpush1.msra.mxu0 0.0
        %2414 = vmatprep.subr.mxu0 0.0
        %2415 = vmatpush1.msra.mxu0 0.0
        %2416 = vmatprep.subr.mxu0 0.0
        %2417 = vmatpush1.msra.mxu0 0.0
        %2418 = vmatprep.subr.mxu0 0.0
        %2419 = vmatpush1.msra.mxu0 0.0
        %2420 = vmatprep.subr.mxu0 0.0
        %2421 = vmatpush1.msra.mxu0 0.0
        %2422 = vmatprep.subr.mxu0 0.0
        %2423 = vmatpush1.msra.mxu0 0.0
        %2424 = vmatprep.subr.mxu0 0.0
        %2425 = vmatpush1.msra.mxu0 0.0
        %2426 = vmatprep.subr.mxu0 0.0
        %2427 = vmatpush1.msra.mxu0 0.0
        %2428 = vmatprep.subr.mxu0 0.0
        %2429 = vmatpush1.msra.mxu0 0.0
        %2430 = vmatprep.subr.mxu0 0.0
        %2431 = vmatpush1.msra.mxu0 0.0
        %2432 = vmatprep.subr.mxu0 0.0
        %2433 = vmatpush1.msra.mxu0 0.0
        %2434 = vmatprep.subr.mxu0 0.0
        %2435 = vmatpush1.msra.mxu0 0.0
        %2436 = vmatprep.subr.mxu0 0.0
        %2437 = vmatpush1.msra.mxu0 0.0
        %2438 = vmatprep.subr.mxu0 0.0
        %2439 = vmatpush1.msra.mxu0 0.0
        %2440 = vmatprep.subr.mxu0 0.0
        %2441 = vmatpush1.msra.mxu0 0.0
        %2442 = vmatprep.subr.mxu0 0.0
        %2443 = vmatpush1.msra.mxu0 0.0
        %2444 = vmatprep.subr.mxu0 0.0
        %2445 = vmatpush1.msra.mxu0 0.0
        %2446 = vmatprep.subr.mxu0 0.0
        %2447 = vmatpush1.msra.mxu0 0.0
        %2448 = vmatprep.subr.mxu0 0.0
        %2449 = vmatpush1.msra.mxu0 0.0
        %2450 = vmatprep.subr.mxu0 0.0
        %2451 = vmatpush1.msra.mxu0 0.0
        %2452 = vmatprep.subr.mxu0 0.0
        %2453 = vmatpush1.msra.mxu0 0.0
        %2454 = vmatprep.subr.mxu0 0.0
        %2455 = vmatpush1.msra.mxu0 0.0
        %2456 = vmatprep.subr.mxu0 0.0
        %2457 = vmatpush1.msra.mxu0 0.0
        %2458 = vmatprep.subr.mxu0 0.0
        %2459 = vmatpush1.msra.mxu0 0.0
        %2460 = vmatprep.mubr.f32.mxu0 0.0
        %2461 = vmatmul.mubr.f32.gmra.mrb[0].mxu0 %v1025
        %v2462 = vpop.f32.mrb[0].mxu0
        %v2463 = vadd.f32 %v1006, %v2462
        %v2464 = vpop.f32.mrb[0].mxu0
        %2465 = vmatprep.mubr.f32.mxu0 0.0
        %2466 = vmatmul.mubr.f32.gmra.mrb[0].mxu0 %v1028
        %v2467 = vpop.f32.mrb[0].mxu0
        %v2468 = vadd.f32 %v1011, %v2467
        %v2469 = vpop.f32.mrb[0].mxu0
        %2470 = vmatprep.mubr.f32.mxu0 0.0
        %2471 = vmatmul.mubr.f32.gmra.mrb[0].mxu0 %v1031
        %v2472 = vpop.f32.mrb[0].mxu0
        %v2473 = vadd.f32 %v1016, %v2472
        %v2474 = vpop.f32.mrb[0].mxu0
        %2475 = vmatprep.mubr.f32.mxu0 0.0
        %2476 = vmatmul.mubr.f32.gmra.mrb[0].mxu0 %v1034
        %v2477 = vpop.f32.mrb[0].mxu0
        %v2478 = vadd.f32 %v1021, %v2477
        %v2479 = vpop.f32.mrb[0].mxu0
        %2480 = vdwg.mxu0
        %v2481 = vtanh.pop %v2463
        %v2482 = vtanh.pop %v2468
        %v2483 = vtanh.pop %v2473
        %v2484 = vtanh.pop %v2478
        %2485 = vmatprep.subr.mxu0 0.0
        %2486 = vmatpush1.msra.mxu0 %v2481
        %2487 = vmatprep.subr.mxu0 0.0
        %2488 = vmatpush1.msra.mxu0 %v2482
        %2489 = vmatprep.subr.mxu0 0.0
        %2490 = vmatpush1.msra.mxu0 %v2483
        %2491 = vmatprep.subr.mxu0 0.0
        %2492 = vmatpush1.msra.mxu0 %v2484
        %2493 = vmatprep.subr.mxu0 0.0
        %2494 = vmatpush1.msra.mxu0 0.0
        %2495 = vmatprep.subr.mxu0 0.0
        %2496 = vmatpush1.msra.mxu0 0.0
        %2497 = vmatprep.subr.mxu0 0.0
        %2498 = vmatpush1.msra.mxu0 0.0
        %2499 = vmatprep.subr.mxu0 0.0
        %2500 = vmatpush1.msra.mxu0 0.0
        %2501 = vmatprep.subr.mxu0 0.0
        %2502 = vmatpush1.msra.mxu0 0.0
        %2503 = vmatprep.subr.mxu0 0.0
        %2504 = vmatpush1.msra.mxu0 0.0
        %2505 = vmatprep.subr.mxu0 0.0
        %2506 = vmatpush1.msra.mxu0 0.0
        %2507 = vmatprep.subr.mxu0 0.0
        %2508 = vmatpush1.msra.mxu0 0.0
        %2509 = vmatprep.subr.mxu0 0.0
        %2510 = vmatpush1.msra.mxu0 0.0
        %2511 = vmatprep.subr.mxu0 0.0
        %2512 = vmatpush1.msra.mxu0 0.0
        %2513 = vmatprep.subr.mxu0 0.0
        %2514 = vmatpush1.msra.mxu0 0.0
        %2515 = vmatprep.subr.mxu0 0.0
        %2516 = vmatpush1.msra.mxu0 0.0
        %2517 = vmatprep.subr.mxu0 0.0
        %2518 = vmatpush1.msra.mxu0 0.0
        %2519 = vmatprep.subr.mxu0 0.0
        %2520 = vmatpush1.msra.mxu0 0.0
        %2521 = vmatprep.subr.mxu0 0.0
        %2522 = vmatpush1.msra.mxu0 0.0
        %2523 = vmatprep.subr.mxu0 0.0
        %2524 = vmatpush1.msra.mxu0 0.0
        %2525 = vmatprep.subr.mxu0 0.0
        %2526 = vmatpush1.msra.mxu0 0.0
        %2527 = vmatprep.subr.mxu0 0.0
        %2528 = vmatpush1.msra.mxu0 0.0
        %2529 = vmatprep.subr.mxu0 0.0
        %2530 = vmatpush1.msra.mxu0 0.0
        %2531 = vmatprep.subr.mxu0 0.0
        %2532 = vmatpush1.msra.mxu0 0.0
        %2533 = vmatprep.subr.mxu0 0.0
        %2534 = vmatpush1.msra.mxu0 0.0
        %2535 = vmatprep.subr.mxu0 0.0
        %2536 = vmatpush1.msra.mxu0 0.0
        %2537 = vmatprep.subr.mxu0 0.0
        %2538 = vmatpush1.msra.mxu0 0.0
        %2539 = vmatprep.subr.mxu0 0.0
        %2540 = vmatpush1.msra.mxu0 0.0
        %2541 = vmatprep.subr.mxu0 0.0
        %2542 = vmatpush1.msra.mxu0 0.0
        %2543 = vmatprep.subr.mxu0 0.0
        %2544 = vmatpush1.msra.mxu0 0.0
        %2545 = vmatprep.subr.mxu0 0.0
        %2546 = vmatpush1.msra.mxu0 0.0
        %2547 = vmatprep.subr.mxu0 0.0
        %2548 = vmatpush1.msra.mxu0 0.0
        %2549 = vmatprep.mubr.f32.mxu0 0.0
        %2550 = vmatmul.mubr.f32.gmra.mrb[0].mxu0 %v1146
        %v2551 = vpop.f32.mrb[0].mxu0
        %v2552 = vadd.f32 %v1128, %v2551
        %v2553 = vpop.f32.mrb[0].mxu0
        %2554 = vmatprep.mubr.f32.mxu0 0.0
        %2555 = vmatmul.mubr.f32.gmra.mrb[0].mxu0 %v1149
        %v2556 = vpop.f32.mrb[0].mxu0
        %v2557 = vadd.f32 %v1133, %v2556
        %v2558 = vpop.f32.mrb[0].mxu0
        %2559 = vmatprep.mubr.f32.mxu0 0.0
        %2560 = vmatmul.mubr.f32.gmra.mrb[0].mxu0 %v1152
        %v2561 = vpop.f32.mrb[0].mxu0
        %v2562 = vadd.f32 %v1138, %v2561
        %v2563 = vpop.f32.mrb[0].mxu0
        %2564 = vmatprep.mubr.f32.mxu0 0.0
        %2565 = vmatmul.mubr.f32.gmra.mrb[0].mxu0 %v1155
        %v2566 = vpop.f32.mrb[0].mxu0
        %v2567 = vadd.f32 %v1143, %v2566
        %v2568 = vpop.f32.mrb[0].mxu0
        %2569 = vdwg.mxu0
        %v2570 = vtanh.pop %v2552
        %v2571 = vtanh.pop %v2557
        %v2572 = vtanh.pop %v2562
        %v2573 = vtanh.pop %v2567
        %v2574 = vmul.f32 %v457, %v2570
        %v2575 = vmul.f32 %v461, %v2571
        %v2576 = vmul.f32 %v465, %v2572
        %v2577 = vmul.f32 %v469, %v2573
        %v2578 = vadd.f32 %v2574, %v2575
        %v2579 = vadd.f32 %v2578, %v2576
        %v2580 = vadd.f32 %v2579, %v2577
        %v2581 = vrot.slane %v2580, 4
        %v2582 = vadd.f32 %v2580, %v2581
        %v2583 = vrot.slane %v2582, 2
        %v2584 = vadd.f32 %v2582, %v2583
        %v2585 = vrot.slane %v2584, 1
        %v2586 = vadd.f32 %v2584, %v2585
        %v2587 = vadd.f32 %v2586, %v1267
        %s2588 = scalar_lea.vmem %s408, 2 [#allocation3]
        %2589 = vst.msk [vmem:[%s2588] sm:$0x1] %vm1272, %v2587
        %s2590 = scalar_lea.vmem %s412, 3
        %v2591 = vld [vmem:[%s2590] sm:$0x1]
        %s2592 = scalar_lea.vmem %s417, 3
        %v2593 = vld [vmem:[%s2592] sm:$0x1]
        %s2594 = scalar_lea.vmem %s422, 3
        %v2595 = vld [vmem:[%s2594] sm:$0x1]
        %v2597 = vlaneseq
        %v2598 = vshrl.u32 %v2597, 7
        %v2599 = vsub.s32 0, %v2598
        %v2600 = vrot.slane %v2591, %v2599
        %v2602 = vmul.f32 %v476, %v2600
        %v2603 = vmul.f32 %v481, %v2600
        %v2604 = vmul.f32 %v486, %v2600
        %v2605 = vmul.f32 %v491, %v2600
        %v2607 = vlaneseq
        %v2608 = vshrl.u32 %v2607, 7
        %v2609 = vsub.s32 0, %v2608
        %v2610 = vrot.slane %v2593, %v2609
        %v2612 = vmul.f32 %v505, %v2610
        %v2613 = vmul.f32 %v509, %v2610
        %v2614 = vmul.f32 %v513, %v2610
        %v2615 = vmul.f32 %v517, %v2610
        %v2616 = vadd.f32 %v2602, %v2612
        %v2617 = vadd.f32 %v2603, %v2613
        %v2618 = vadd.f32 %v2604, %v2614
        %v2619 = vadd.f32 %v2605, %v2615
        %v2621 = vlaneseq
        %v2622 = vshrl.u32 %v2621, 7
        %v2623 = vsub.s32 0, %v2622
        %v2624 = vrot.slane %v2595, %v2623
        %v2626 = vmul.f32 %v535, %v2624
        %v2627 = vmul.f32 %v539, %v2624
        %v2628 = vmul.f32 %v543, %v2624
        %v2629 = vmul.f32 %v547, %v2624
        %v2630 = vadd.f32 %v2616, %v2626
        %v2631 = vadd.f32 %v2617, %v2627
        %v2632 = vadd.f32 %v2618, %v2628
        %v2633 = vadd.f32 %v2619, %v2629
        %v2634 = vadd.f32 %v2630, %v566
        %v2635 = vadd.f32 %v2631, %v571
        %v2636 = vadd.f32 %v2632, %v576
        %v2637 = vadd.f32 %v2633, %v581
        %v2638 = vand.u32 2147483647, %v2634
        %vm2639 = vcmp.le.f32.partialorder %v2638, 0.7853982
        %vm2640 = vcmp.lt.s32.totalorder %v2634, 0
        %v2641 = vand.u32 %v2634, 2139095040
        %v2642 = vshrl.u32 %v2641, 23
        %v2643 = vsub.s32 %v2642, 127
        %v2644 = vand.u32 2147483647, %v2634
        %v2645 = vand.u32 %v2644, 8388607
        %v2646 = vor.u32 %v2645, 8388608
        %v2647 = vsub.s32 0, %v2646
        %v2648 = vadd.s32 %v2643, 1
        %vm2649 = vcmp.gt.s32.totalorder %v2648, 0
        %v2650 = vsel %vm2649, %v2648, 0
        %v2651 = vshrl.u32 %v2650, 5
        %v2652 = vand.u32 %v2650, 31
        %v2653 = vsub.s32 32, %v2652
        %v2654 = vshrl.u32 683565275, %v2653
        %v2655 = vshll.u32 683565275, %v2652
        %v2656 = vshrl.u32 2475754826, %v2653
        %v2657 = vor.u32 %v2655, %v2656
        %v2658 = vshll.u32 2475754826, %v2652
        %v2659 = vshrl.u32 2131351028, %v2653
        %v2660 = vor.u32 %v2658, %v2659
        %v2661 = vshll.u32 2131351028, %v2652
        %v2662 = vshrl.u32 2102212464, %v2653
        %v2663 = vor.u32 %v2661, %v2662
        %v2664 = vshll.u32 2102212464, %v2652
        %v2665 = vshrl.u32 920167782, %v2653
        %v2666 = vor.u32 %v2664, %v2665
        %v2667 = vshll.u32 920167782, %v2652
        %v2668 = vshrl.u32 1326507024, %v2653
        %v2669 = vor.u32 %v2667, %v2668
        %vm2670 = vcmp.lt.s32.totalorder %v2651, 1
        %vm2671 = vcmp.lt.s32.totalorder %v2651, 2
        %vm2672 = vcmp.lt.s32.totalorder %v2651, 3
        %vm2673 = vcmp.lt.s32.totalorder %v2651, 4
        %v2674 = vsel %vm2670, %v2654, %v2657
        %v2675 = vsel %vm2673, %v2663, 2102212464
        %v2676 = vsel %vm2672, %v2660, %v2675
        %v2677 = vsel %vm2671, %v2674, %v2676
        %v2678 = vsel %vm2670, %v2657, %v2660
        %v2679 = vsel %vm2673, %v2666, 920167782
        %v2680 = vsel %vm2672, %v2663, %v2679
        %v2681 = vsel %vm2671, %v2678, %v2680
        %v2682 = vsel %vm2670, %v2660, %v2663
        %v2683 = vsel %vm2673, %v2669, 1326507024
        %v2684 = vsel %vm2672, %v2666, %v2683
        %v2685 = vsel %vm2671, %v2682, %v2684
        %v2686 = vshll.u32 %v2646, 8
        %v2687 = vmul.u32.u64.compose %v2686, %v2685
        %v2688 = vextract.low.u32 %v2687
        %v2689 = vextract.high.u32 %v2687
        %v2690 = vmul.u32.u64.compose %v2686, %v2681
        %v2691 = vextract.low.u32 %v2690
        %v2692 = vextract.high.u32 %v2690
        %v2693 = vmul.u32 %v2686, %v2677
        %v2694 = vadd.s32 %v2689, %v2691
        %vm2695 = vc.u32 %v2689, %v2691
        %v2696 = vadd.s32 %v2692, 1
        %v2697 = vsel %vm2695, %v2696, %v2692
        %v2698 = vadd.s32 %v2693, %v2697
        %v2699 = vadd.s32 %v2698, 536870912
        %v2700 = vshrl.u32 %v2699, 30
        %v2701 = vshll.u32 %v2700, 30
        %v2702 = vsub.s32 %v2698, %v2701
        %vm2703 = vcmp.lt.s32.totalorder %v2702, 0
        %v2704 = vsub.s32 0, %v2702
        %v2705 = vsel %vm2703, %v2704, %v2702
        %v2706 = vclz %v2705
        %v2707 = vsub.s32 %v2706, 2
        %vm2708 = vcmp.gt.s32.totalorder 0, %v2707
        %v2709 = vsel %vm2708, 0, %v2707
        %v2710 = vsub.s32 32, %v2709
        %v2711 = vshll.u32 %v2702, %v2709
        %v2712 = vshrl.u32 %v2694, %v2710
        %v2713 = vor.u32 %v2711, %v2712
        %v2714 = vsub.s32 4294967266, %v2709
        %v2715 = vadd.s32 %v2714, 127
        %v2716 = vshll.u32 %v2715, 23
        %v2717 = vor.u32 4788187, %v2716
        %v2718 = vand.u32 2147483647, %v2717
        %v2720 = vcvt.s32.f32 %v2713
        %v2721 = vmul.f32 %v2720, %v2718
        %v2722 = vxor.u32 %v2721, 2147483648
        %v2723 = vsel %vm2640, %v2722, %v2721
        %v2724 = vsub.s32 4, %v2700
        %v2725 = vsel %vm2640, %v2724, %v2700
        %v2726 = vsel %vm2639, %v2634, %v2723
        %v2727 = vsel %vm2639, 0, %v2725
        %v2728 = vcosq.f32.pop %v2726
        %v2729 = vsinq.f32.pop %v2726
        %vm2730 = vweird.f32 %v2634
        %v2731 = vadd.s32 %v2727, 3
        %v2732 = vand.u32 %v2731, 3
        %vm2733 = vcmp.lt.s32.totalorder %v2732, 2
        %vm2734 = vcmp.eq.s32.totalorder %v2732, 0
        %v2735 = vxor.u32 %v2729, 2147483648
        %v2736 = vsel %vm2734, %v2728, %v2735
        %vm2737 = vcmp.eq.s32.totalorder %v2732, 2
        %v2738 = vxor.u32 %v2728, 2147483648
        %v2739 = vsel %vm2737, %v2738, %v2729
        %v2740 = vsel %vm2733, %v2736, %v2739
        %v2741 = vsel %vm2730, nan, %v2740
        %v2742 = vand.u32 2147483647, %v2635
        %vm2743 = vcmp.le.f32.partialorder %v2742, 0.7853982
        %vm2744 = vcmp.lt.s32.totalorder %v2635, 0
        %v2745 = vand.u32 %v2635, 2139095040
        %v2746 = vshrl.u32 %v2745, 23
        %v2747 = vsub.s32 %v2746, 127
        %v2748 = vand.u32 2147483647, %v2635
        %v2749 = vand.u32 %v2748, 8388607
        %v2750 = vor.u32 %v2749, 8388608
        %v2751 = vsub.s32 0, %v2750
        %v2752 = vadd.s32 %v2747, 1
        %vm2753 = vcmp.gt.s32.totalorder %v2752, 0
        %v2754 = vsel %vm2753, %v2752, 0
        %v2755 = vshrl.u32 %v2754, 5
        %v2756 = vand.u32 %v2754, 31
        %v2757 = vsub.s32 32, %v2756
        %v2758 = vshrl.u32 683565275, %v2757
        %v2759 = vshll.u32 683565275, %v2756
        %v2760 = vshrl.u32 2475754826, %v2757
        %v2761 = vor.u32 %v2759, %v2760
        %v2762 = vshll.u32 2475754826, %v2756
        %v2763 = vshrl.u32 2131351028, %v2757
        %v2764 = vor.u32 %v2762, %v2763
        %v2765 = vshll.u32 2131351028, %v2756
        %v2766 = vshrl.u32 2102212464, %v2757
        %v2767 = vor.u32 %v2765, %v2766
        %v2768 = vshll.u32 2102212464, %v2756
        %v2769 = vshrl.u32 920167782, %v2757
        %v2770 = vor.u32 %v2768, %v2769
        %v2771 = vshll.u32 920167782, %v2756
        %v2772 = vshrl.u32 1326507024, %v2757
        %v2773 = vor.u32 %v2771, %v2772
        %vm2774 = vcmp.lt.s32.totalorder %v2755, 1
        %vm2775 = vcmp.lt.s32.totalorder %v2755, 2
        %vm2776 = vcmp.lt.s32.totalorder %v2755, 3
        %vm2777 = vcmp.lt.s32.totalorder %v2755, 4
        %v2778 = vsel %vm2774, %v2758, %v2761
        %v2779 = vsel %vm2777, %v2767, 2102212464
        %v2780 = vsel %vm2776, %v2764, %v2779
        %v2781 = vsel %vm2775, %v2778, %v2780
        %v2782 = vsel %vm2774, %v2761, %v2764
        %v2783 = vsel %vm2777, %v2770, 920167782
        %v2784 = vsel %vm2776, %v2767, %v2783
        %v2785 = vsel %vm2775, %v2782, %v2784
        %v2786 = vsel %vm2774, %v2764, %v2767
        %v2787 = vsel %vm2777, %v2773, 1326507024
        %v2788 = vsel %vm2776, %v2770, %v2787
        %v2789 = vsel %vm2775, %v2786, %v2788
        %v2790 = vshll.u32 %v2750, 8
        %v2791 = vmul.u32.u64.compose %v2790, %v2789
        %v2792 = vextract.low.u32 %v2791
        %v2793 = vextract.high.u32 %v2791
        %v2794 = vmul.u32.u64.compose %v2790, %v2785
        %v2795 = vextract.low.u32 %v2794
        %v2796 = vextract.high.u32 %v2794
        %v2797 = vmul.u32 %v2790, %v2781
        %v2798 = vadd.s32 %v2793, %v2795
        %vm2799 = vc.u32 %v2793, %v2795
        %v2800 = vadd.s32 %v2796, 1
        %v2801 = vsel %vm2799, %v2800, %v2796
        %v2802 = vadd.s32 %v2797, %v2801
        %v2803 = vadd.s32 %v2802, 536870912
        %v2804 = vshrl.u32 %v2803, 30
        %v2805 = vshll.u32 %v2804, 30
        %v2806 = vsub.s32 %v2802, %v2805
        %vm2807 = vcmp.lt.s32.totalorder %v2806, 0
        %v2808 = vsub.s32 0, %v2806
        %v2809 = vsel %vm2807, %v2808, %v2806
        %v2810 = vclz %v2809
        %v2811 = vsub.s32 %v2810, 2
        %vm2812 = vcmp.gt.s32.totalorder 0, %v2811
        %v2813 = vsel %vm2812, 0, %v2811
        %v2814 = vsub.s32 32, %v2813
        %v2815 = vshll.u32 %v2806, %v2813
        %v2816 = vshrl.u32 %v2798, %v2814
        %v2817 = vor.u32 %v2815, %v2816
        %v2818 = vsub.s32 4294967266, %v2813
        %v2819 = vadd.s32 %v2818, 127
        %v2820 = vshll.u32 %v2819, 23
        %v2821 = vor.u32 4788187, %v2820
        %v2822 = vand.u32 2147483647, %v2821
        %v2824 = vcvt.s32.f32 %v2817
        %v2825 = vmul.f32 %v2824, %v2822
        %v2826 = vxor.u32 %v2825, 2147483648
        %v2827 = vsel %vm2744, %v2826, %v2825
        %v2828 = vsub.s32 4, %v2804
        %v2829 = vsel %vm2744, %v2828, %v2804
        %v2830 = vsel %vm2743, %v2635, %v2827
        %v2831 = vsel %vm2743, 0, %v2829
        %v2832 = vcosq.f32.pop %v2830
        %v2833 = vsinq.f32.pop %v2830
        %vm2834 = vweird.f32 %v2635
        %v2835 = vadd.s32 %v2831, 3
        %v2836 = vand.u32 %v2835, 3
        %vm2837 = vcmp.lt.s32.totalorder %v2836, 2
        %vm2838 = vcmp.eq.s32.totalorder %v2836, 0
        %v2839 = vxor.u32 %v2833, 2147483648
        %v2840 = vsel %vm2838, %v2832, %v2839
        %vm2841 = vcmp.eq.s32.totalorder %v2836, 2
        %v2842 = vxor.u32 %v2832, 2147483648
        %v2843 = vsel %vm2841, %v2842, %v2833
        %v2844 = vsel %vm2837, %v2840, %v2843
        %v2845 = vsel %vm2834, nan, %v2844
        %v2846 = vand.u32 2147483647, %v2636
        %vm2847 = vcmp.le.f32.partialorder %v2846, 0.7853982
        %vm2848 = vcmp.lt.s32.totalorder %v2636, 0
        %v2849 = vand.u32 %v2636, 2139095040
        %v2850 = vshrl.u32 %v2849, 23
        %v2851 = vsub.s32 %v2850, 127
        %v2852 = vand.u32 2147483647, %v2636
        %v2853 = vand.u32 %v2852, 8388607
        %v2854 = vor.u32 %v2853, 8388608
        %v2855 = vsub.s32 0, %v2854
        %v2856 = vadd.s32 %v2851, 1
        %vm2857 = vcmp.gt.s32.totalorder %v2856, 0
        %v2858 = vsel %vm2857, %v2856, 0
        %v2859 = vshrl.u32 %v2858, 5
        %v2860 = vand.u32 %v2858, 31
        %v2861 = vsub.s32 32, %v2860
        %v2862 = vshrl.u32 683565275, %v2861
        %v2863 = vshll.u32 683565275, %v2860
        %v2864 = vshrl.u32 2475754826, %v2861
        %v2865 = vor.u32 %v2863, %v2864
        %v2866 = vshll.u32 2475754826, %v2860
        %v2867 = vshrl.u32 2131351028, %v2861
        %v2868 = vor.u32 %v2866, %v2867
        %v2869 = vshll.u32 2131351028, %v2860
        %v2870 = vshrl.u32 2102212464, %v2861
        %v2871 = vor.u32 %v2869, %v2870
        %v2872 = vshll.u32 2102212464, %v2860
        %v2873 = vshrl.u32 920167782, %v2861
        %v2874 = vor.u32 %v2872, %v2873
        %v2875 = vshll.u32 920167782, %v2860
        %v2876 = vshrl.u32 1326507024, %v2861
        %v2877 = vor.u32 %v2875, %v2876
        %vm2878 = vcmp.lt.s32.totalorder %v2859, 1
        %vm2879 = vcmp.lt.s32.totalorder %v2859, 2
        %vm2880 = vcmp.lt.s32.totalorder %v2859, 3
        %vm2881 = vcmp.lt.s32.totalorder %v2859, 4
        %v2882 = vsel %vm2878, %v2862, %v2865
        %v2883 = vsel %vm2881, %v2871, 2102212464
        %v2884 = vsel %vm2880, %v2868, %v2883
        %v2885 = vsel %vm2879, %v2882, %v2884
        %v2886 = vsel %vm2878, %v2865, %v2868
        %v2887 = vsel %vm2881, %v2874, 920167782
        %v2888 = vsel %vm2880, %v2871, %v2887
        %v2889 = vsel %vm2879, %v2886, %v2888
        %v2890 = vsel %vm2878, %v2868, %v2871
        %v2891 = vsel %vm2881, %v2877, 1326507024
        %v2892 = vsel %vm2880, %v2874, %v2891
        %v2893 = vsel %vm2879, %v2890, %v2892
        %v2894 = vshll.u32 %v2854, 8
        %v2895 = vmul.u32.u64.compose %v2894, %v2893
        %v2896 = vextract.low.u32 %v2895
        %v2897 = vextract.high.u32 %v2895
        %v2898 = vmul.u32.u64.compose %v2894, %v2889
        %v2899 = vextract.low.u32 %v2898
        %v2900 = vextract.high.u32 %v2898
        %v2901 = vmul.u32 %v2894, %v2885
        %v2902 = vadd.s32 %v2897, %v2899
        %vm2903 = vc.u32 %v2897, %v2899
        %v2904 = vadd.s32 %v2900, 1
        %v2905 = vsel %vm2903, %v2904, %v2900
        %v2906 = vadd.s32 %v2901, %v2905
        %v2907 = vadd.s32 %v2906, 536870912
        %v2908 = vshrl.u32 %v2907, 30
        %v2909 = vshll.u32 %v2908, 30
        %v2910 = vsub.s32 %v2906, %v2909
        %vm2911 = vcmp.lt.s32.totalorder %v2910, 0
        %v2912 = vsub.s32 0, %v2910
        %v2913 = vsel %vm2911, %v2912, %v2910
        %v2914 = vclz %v2913
        %v2915 = vsub.s32 %v2914, 2
        %vm2916 = vcmp.gt.s32.totalorder 0, %v2915
        %v2917 = vsel %vm2916, 0, %v2915
        %v2918 = vsub.s32 32, %v2917
        %v2919 = vshll.u32 %v2910, %v2917
        %v2920 = vshrl.u32 %v2902, %v2918
        %v2921 = vor.u32 %v2919, %v2920
        %v2922 = vsub.s32 4294967266, %v2917
        %v2923 = vadd.s32 %v2922, 127
        %v2924 = vshll.u32 %v2923, 23
        %v2925 = vor.u32 4788187, %v2924
        %v2926 = vand.u32 2147483647, %v2925
        %v2928 = vcvt.s32.f32 %v2921
        %v2929 = vmul.f32 %v2928, %v2926
        %v2930 = vxor.u32 %v2929, 2147483648
        %v2931 = vsel %vm2848, %v2930, %v2929
        %v2932 = vsub.s32 4, %v2908
        %v2933 = vsel %vm2848, %v2932, %v2908
        %v2934 = vsel %vm2847, %v2636, %v2931
        %v2935 = vsel %vm2847, 0, %v2933
        %v2936 = vcosq.f32.pop %v2934
        %v2937 = vsinq.f32.pop %v2934
        %vm2938 = vweird.f32 %v2636
        %v2939 = vadd.s32 %v2935, 3
        %v2940 = vand.u32 %v2939, 3
        %vm2941 = vcmp.lt.s32.totalorder %v2940, 2
        %vm2942 = vcmp.eq.s32.totalorder %v2940, 0
        %v2943 = vxor.u32 %v2937, 2147483648
        %v2944 = vsel %vm2942, %v2936, %v2943
        %vm2945 = vcmp.eq.s32.totalorder %v2940, 2
        %v2946 = vxor.u32 %v2936, 2147483648
        %v2947 = vsel %vm2945, %v2946, %v2937
        %v2948 = vsel %vm2941, %v2944, %v2947
        %v2949 = vsel %vm2938, nan, %v2948
        %v2950 = vand.u32 2147483647, %v2637
        %vm2951 = vcmp.le.f32.partialorder %v2950, 0.7853982
        %vm2952 = vcmp.lt.s32.totalorder %v2637, 0
        %v2953 = vand.u32 %v2637, 2139095040
        %v2954 = vshrl.u32 %v2953, 23
        %v2955 = vsub.s32 %v2954, 127
        %v2956 = vand.u32 2147483647, %v2637
        %v2957 = vand.u32 %v2956, 8388607
        %v2958 = vor.u32 %v2957, 8388608
        %v2959 = vsub.s32 0, %v2958
        %v2960 = vadd.s32 %v2955, 1
        %vm2961 = vcmp.gt.s32.totalorder %v2960, 0
        %v2962 = vsel %vm2961, %v2960, 0
        %v2963 = vshrl.u32 %v2962, 5
        %v2964 = vand.u32 %v2962, 31
        %v2965 = vsub.s32 32, %v2964
        %v2966 = vshrl.u32 683565275, %v2965
        %v2967 = vshll.u32 683565275, %v2964
        %v2968 = vshrl.u32 2475754826, %v2965
        %v2969 = vor.u32 %v2967, %v2968
        %v2970 = vshll.u32 2475754826, %v2964
        %v2971 = vshrl.u32 2131351028, %v2965
        %v2972 = vor.u32 %v2970, %v2971
        %v2973 = vshll.u32 2131351028, %v2964
        %v2974 = vshrl.u32 2102212464, %v2965
        %v2975 = vor.u32 %v2973, %v2974
        %v2976 = vshll.u32 2102212464, %v2964
        %v2977 = vshrl.u32 920167782, %v2965
        %v2978 = vor.u32 %v2976, %v2977
        %v2979 = vshll.u32 920167782, %v2964
        %v2980 = vshrl.u32 1326507024, %v2965
        %v2981 = vor.u32 %v2979, %v2980
        %vm2982 = vcmp.lt.s32.totalorder %v2963, 1
        %vm2983 = vcmp.lt.s32.totalorder %v2963, 2
        %vm2984 = vcmp.lt.s32.totalorder %v2963, 3
        %vm2985 = vcmp.lt.s32.totalorder %v2963, 4
        %v2986 = vsel %vm2982, %v2966, %v2969
        %v2987 = vsel %vm2985, %v2975, 2102212464
        %v2988 = vsel %vm2984, %v2972, %v2987
        %v2989 = vsel %vm2983, %v2986, %v2988
        %v2990 = vsel %vm2982, %v2969, %v2972
        %v2991 = vsel %vm2985, %v2978, 920167782
        %v2992 = vsel %vm2984, %v2975, %v2991
        %v2993 = vsel %vm2983, %v2990, %v2992
        %v2994 = vsel %vm2982, %v2972, %v2975
        %v2995 = vsel %vm2985, %v2981, 1326507024
        %v2996 = vsel %vm2984, %v2978, %v2995
        %v2997 = vsel %vm2983, %v2994, %v2996
        %v2998 = vshll.u32 %v2958, 8
        %v2999 = vmul.u32.u64.compose %v2998, %v2997
        %v3000 = vextract.low.u32 %v2999
        %v3001 = vextract.high.u32 %v2999
        %v3002 = vmul.u32.u64.compose %v2998, %v2993
        %v3003 = vextract.low.u32 %v3002
        %v3004 = vextract.high.u32 %v3002
        %v3005 = vmul.u32 %v2998, %v2989
        %v3006 = vadd.s32 %v3001, %v3003
        %vm3007 = vc.u32 %v3001, %v3003
        %v3008 = vadd.s32 %v3004, 1
        %v3009 = vsel %vm3007, %v3008, %v3004
        %v3010 = vadd.s32 %v3005, %v3009
        %v3011 = vadd.s32 %v3010, 536870912
        %v3012 = vshrl.u32 %v3011, 30
        %v3013 = vshll.u32 %v3012, 30
        %v3014 = vsub.s32 %v3010, %v3013
        %vm3015 = vcmp.lt.s32.totalorder %v3014, 0
        %v3016 = vsub.s32 0, %v3014
        %v3017 = vsel %vm3015, %v3016, %v3014
        %v3018 = vclz %v3017
        %v3019 = vsub.s32 %v3018, 2
        %vm3020 = vcmp.gt.s32.totalorder 0, %v3019
        %v3021 = vsel %vm3020, 0, %v3019
        %v3022 = vsub.s32 32, %v3021
        %v3023 = vshll.u32 %v3014, %v3021
        %v3024 = vshrl.u32 %v3006, %v3022
        %v3025 = vor.u32 %v3023, %v3024
        %v3026 = vsub.s32 4294967266, %v3021
        %v3027 = vadd.s32 %v3026, 127
        %v3028 = vshll.u32 %v3027, 23
        %v3029 = vor.u32 4788187, %v3028
        %v3030 = vand.u32 2147483647, %v3029
        %v3032 = vcvt.s32.f32 %v3025
        %v3033 = vmul.f32 %v3032, %v3030
        %v3034 = vxor.u32 %v3033, 2147483648
        %v3035 = vsel %vm2952, %v3034, %v3033
        %v3036 = vsub.s32 4, %v3012
        %v3037 = vsel %vm2952, %v3036, %v3012
        %v3038 = vsel %vm2951, %v2637, %v3035
        %v3039 = vsel %vm2951, 0, %v3037
        %v3040 = vcosq.f32.pop %v3038
        %v3041 = vsinq.f32.pop %v3038
        %vm3042 = vweird.f32 %v2637
        %v3043 = vadd.s32 %v3039, 3
        %v3044 = vand.u32 %v3043, 3
        %vm3045 = vcmp.lt.s32.totalorder %v3044, 2
        %vm3046 = vcmp.eq.s32.totalorder %v3044, 0
        %v3047 = vxor.u32 %v3041, 2147483648
        %v3048 = vsel %vm3046, %v3040, %v3047
        %vm3049 = vcmp.eq.s32.totalorder %v3044, 2
        %v3050 = vxor.u32 %v3040, 2147483648
        %v3051 = vsel %vm3049, %v3050, %v3041
        %v3052 = vsel %vm3045, %v3048, %v3051
        %v3053 = vsel %vm3042, nan, %v3052
        %3054 = vmatprep.subr.mxu0 0.0
        %3055 = vmatpush1.msra.mxu0 %v2741
        %3056 = vmatprep.subr.mxu0 0.0
        %3057 = vmatpush1.msra.mxu0 %v2845
        %3058 = vmatprep.subr.mxu0 0.0
        %3059 = vmatpush1.msra.mxu0 %v2949
        %3060 = vmatprep.subr.mxu0 0.0
        %3061 = vmatpush1.msra.mxu0 %v3053
        %3062 = vmatprep.subr.mxu0 0.0
        %3063 = vmatpush1.msra.mxu0 0.0
        %3064 = vmatprep.subr.mxu0 0.0
        %3065 = vmatpush1.msra.mxu0 0.0
        %3066 = vmatprep.subr.mxu0 0.0
        %3067 = vmatpush1.msra.mxu0 0.0
        %3068 = vmatprep.subr.mxu0 0.0
        %3069 = vmatpush1.msra.mxu0 0.0
        %3070 = vmatprep.subr.mxu0 0.0
        %3071 = vmatpush1.msra.mxu0 0.0
        %3072 = vmatprep.subr.mxu0 0.0
        %3073 = vmatpush1.msra.mxu0 0.0
        %3074 = vmatprep.subr.mxu0 0.0
        %3075 = vmatpush1.msra.mxu0 0.0
        %3076 = vmatprep.subr.mxu0 0.0
        %3077 = vmatpush1.msra.mxu0 0.0
        %3078 = vmatprep.subr.mxu0 0.0
        %3079 = vmatpush1.msra.mxu0 0.0
        %3080 = vmatprep.subr.mxu0 0.0
        %3081 = vmatpush1.msra.mxu0 0.0
        %3082 = vmatprep.subr.mxu0 0.0
        %3083 = vmatpush1.msra.mxu0 0.0
        %3084 = vmatprep.subr.mxu0 0.0
        %3085 = vmatpush1.msra.mxu0 0.0
        %3086 = vmatprep.subr.mxu0 0.0
        %3087 = vmatpush1.msra.mxu0 0.0
        %3088 = vmatprep.subr.mxu0 0.0
        %3089 = vmatpush1.msra.mxu0 0.0
        %3090 = vmatprep.subr.mxu0 0.0
        %3091 = vmatpush1.msra.mxu0 0.0
        %3092 = vmatprep.subr.mxu0 0.0
        %3093 = vmatpush1.msra.mxu0 0.0
        %3094 = vmatprep.subr.mxu0 0.0
        %3095 = vmatpush1.msra.mxu0 0.0
        %3096 = vmatprep.subr.mxu0 0.0
        %3097 = vmatpush1.msra.mxu0 0.0
        %3098 = vmatprep.subr.mxu0 0.0
        %3099 = vmatpush1.msra.mxu0 0.0
        %3100 = vmatprep.subr.mxu0 0.0
        %3101 = vmatpush1.msra.mxu0 0.0
        %3102 = vmatprep.subr.mxu0 0.0
        %3103 = vmatpush1.msra.mxu0 0.0
        %3104 = vmatprep.subr.mxu0 0.0
        %3105 = vmatpush1.msra.mxu0 0.0
        %3106 = vmatprep.subr.mxu0 0.0
        %3107 = vmatpush1.msra.mxu0 0.0
        %3108 = vmatprep.subr.mxu0 0.0
        %3109 = vmatpush1.msra.mxu0 0.0
        %3110 = vmatprep.subr.mxu0 0.0
        %3111 = vmatpush1.msra.mxu0 0.0
        %3112 = vmatprep.subr.mxu0 0.0
        %3113 = vmatpush1.msra.mxu0 0.0
        %3114 = vmatprep.subr.mxu0 0.0
        %3115 = vmatpush1.msra.mxu0 0.0
        %3116 = vmatprep.subr.mxu0 0.0
        %3117 = vmatpush1.msra.mxu0 0.0
        %3118 = vmatprep.mubr.f32.mxu0 0.0
        %3119 = vmatmul.mubr.f32.gmra.mrb[0].mxu0 %v1025
        %v3120 = vpop.f32.mrb[0].mxu0
        %v3121 = vadd.f32 %v1006, %v3120
        %v3122 = vpop.f32.mrb[0].mxu0
        %3123 = vmatprep.mubr.f32.mxu0 0.0
        %3124 = vmatmul.mubr.f32.gmra.mrb[0].mxu0 %v1028
        %v3125 = vpop.f32.mrb[0].mxu0
        %v3126 = vadd.f32 %v1011, %v3125
        %v3127 = vpop.f32.mrb[0].mxu0
        %3128 = vmatprep.mubr.f32.mxu0 0.0
        %3129 = vmatmul.mubr.f32.gmra.mrb[0].mxu0 %v1031
        %v3130 = vpop.f32.mrb[0].mxu0
        %v3131 = vadd.f32 %v1016, %v3130
        %v3132 = vpop.f32.mrb[0].mxu0
        %3133 = vmatprep.mubr.f32.mxu0 0.0
        %3134 = vmatmul.mubr.f32.gmra.mrb[0].mxu0 %v1034
        %v3135 = vpop.f32.mrb[0].mxu0
        %v3136 = vadd.f32 %v1021, %v3135
        %v3137 = vpop.f32.mrb[0].mxu0
        %3138 = vdwg.mxu0
        %v3139 = vtanh.pop %v3121
        %v3140 = vtanh.pop %v3126
        %v3141 = vtanh.pop %v3131
        %v3142 = vtanh.pop %v3136
        %3143 = vmatprep.subr.mxu0 0.0
        %3144 = vmatpush1.msra.mxu0 %v3139
        %3145 = vmatprep.subr.mxu0 0.0
        %3146 = vmatpush1.msra.mxu0 %v3140
        %3147 = vmatprep.subr.mxu0 0.0
        %3148 = vmatpush1.msra.mxu0 %v3141
        %3149 = vmatprep.subr.mxu0 0.0
        %3150 = vmatpush1.msra.mxu0 %v3142
        %3151 = vmatprep.subr.mxu0 0.0
        %3152 = vmatpush1.msra.mxu0 0.0
        %3153 = vmatprep.subr.mxu0 0.0
        %3154 = vmatpush1.msra.mxu0 0.0
        %3155 = vmatprep.subr.mxu0 0.0
        %3156 = vmatpush1.msra.mxu0 0.0
        %3157 = vmatprep.subr.mxu0 0.0
        %3158 = vmatpush1.msra.mxu0 0.0
        %3159 = vmatprep.subr.mxu0 0.0
        %3160 = vmatpush1.msra.mxu0 0.0
        %3161 = vmatprep.subr.mxu0 0.0
        %3162 = vmatpush1.msra.mxu0 0.0
        %3163 = vmatprep.subr.mxu0 0.0
        %3164 = vmatpush1.msra.mxu0 0.0
        %3165 = vmatprep.subr.mxu0 0.0
        %3166 = vmatpush1.msra.mxu0 0.0
        %3167 = vmatprep.subr.mxu0 0.0
        %3168 = vmatpush1.msra.mxu0 0.0
        %3169 = vmatprep.subr.mxu0 0.0
        %3170 = vmatpush1.msra.mxu0 0.0
        %3171 = vmatprep.subr.mxu0 0.0
        %3172 = vmatpush1.msra.mxu0 0.0
        %3173 = vmatprep.subr.mxu0 0.0
        %3174 = vmatpush1.msra.mxu0 0.0
        %3175 = vmatprep.subr.mxu0 0.0
        %3176 = vmatpush1.msra.mxu0 0.0
        %3177 = vmatprep.subr.mxu0 0.0
        %3178 = vmatpush1.msra.mxu0 0.0
        %3179 = vmatprep.subr.mxu0 0.0
        %3180 = vmatpush1.msra.mxu0 0.0
        %3181 = vmatprep.subr.mxu0 0.0
        %3182 = vmatpush1.msra.mxu0 0.0
        %3183 = vmatprep.subr.mxu0 0.0
        %3184 = vmatpush1.msra.mxu0 0.0
        %3185 = vmatprep.subr.mxu0 0.0
        %3186 = vmatpush1.msra.mxu0 0.0
        %3187 = vmatprep.subr.mxu0 0.0
        %3188 = vmatpush1.msra.mxu0 0.0
        %3189 = vmatprep.subr.mxu0 0.0
        %3190 = vmatpush1.msra.mxu0 0.0
        %3191 = vmatprep.subr.mxu0 0.0
        %3192 = vmatpush1.msra.mxu0 0.0
        %3193 = vmatprep.subr.mxu0 0.0
        %3194 = vmatpush1.msra.mxu0 0.0
        %3195 = vmatprep.subr.mxu0 0.0
        %3196 = vmatpush1.msra.mxu0 0.0
        %3197 = vmatprep.subr.mxu0 0.0
        %3198 = vmatpush1.msra.mxu0 0.0
        %3199 = vmatprep.subr.mxu0 0.0
        %3200 = vmatpush1.msra.mxu0 0.0
        %3201 = vmatprep.subr.mxu0 0.0
        %3202 = vmatpush1.msra.mxu0 0.0
        %3203 = vmatprep.subr.mxu0 0.0
        %3204 = vmatpush1.msra.mxu0 0.0
        %3205 = vmatprep.subr.mxu0 0.0
        %3206 = vmatpush1.msra.mxu0 0.0
        %3207 = vmatprep.mubr.f32.mxu0 0.0
        %3208 = vmatmul.mubr.f32.gmra.mrb[0].mxu0 %v1146
        %v3209 = vpop.f32.mrb[0].mxu0
        %v3210 = vadd.f32 %v1128, %v3209
        %v3211 = vpop.f32.mrb[0].mxu0
        %3212 = vmatprep.mubr.f32.mxu0 0.0
        %3213 = vmatmul.mubr.f32.gmra.mrb[0].mxu0 %v1149
        %v3214 = vpop.f32.mrb[0].mxu0
        %v3215 = vadd.f32 %v1133, %v3214
        %v3216 = vpop.f32.mrb[0].mxu0
        %3217 = vmatprep.mubr.f32.mxu0 0.0
        %3218 = vmatmul.mubr.f32.gmra.mrb[0].mxu0 %v1152
        %v3219 = vpop.f32.mrb[0].mxu0
        %v3220 = vadd.f32 %v1138, %v3219
        %v3221 = vpop.f32.mrb[0].mxu0
        %3222 = vmatprep.mubr.f32.mxu0 0.0
        %3223 = vmatmul.mubr.f32.gmra.mrb[0].mxu0 %v1155
        %v3224 = vpop.f32.mrb[0].mxu0
        %v3225 = vadd.f32 %v1143, %v3224
        %v3226 = vpop.f32.mrb[0].mxu0
        %3227 = vdwg.mxu0
        %v3228 = vtanh.pop %v3210
        %v3229 = vtanh.pop %v3215
        %v3230 = vtanh.pop %v3220
        %v3231 = vtanh.pop %v3225
        %v3232 = vmul.f32 %v457, %v3228
        %v3233 = vmul.f32 %v461, %v3229
        %v3234 = vmul.f32 %v465, %v3230
        %v3235 = vmul.f32 %v469, %v3231
        %v3236 = vadd.f32 %v3232, %v3233
        %v3237 = vadd.f32 %v3236, %v3234
        %v3238 = vadd.f32 %v3237, %v3235
        %v3239 = vrot.slane %v3238, 4
        %v3240 = vadd.f32 %v3238, %v3239
        %v3241 = vrot.slane %v3240, 2
        %v3242 = vadd.f32 %v3240, %v3241
        %v3243 = vrot.slane %v3242, 1
        %v3244 = vadd.f32 %v3242, %v3243
        %v3245 = vadd.f32 %v3244, %v1267
        %s3246 = scalar_lea.vmem %s408, 3 [#allocation3]
        %3247 = vst.msk [vmem:[%s3246] sm:$0x1] %vm1272, %v3245
        %s3248 = sand.u32 %s281, 1
        %s3249 = scalar_lea.sflag [#allocation4], %s3248
        %s3250 = sand.u32 %s281, 1
        %s3251 = smul.addr %s3250, 4
        %s3252 = scalar_lea.vmem [#allocation3], %s3251
        // Predicated region
        $region65: #{tpu_custom_call.1} parent=63 // pred_check
          %p3253 = pneg %p291
        $region66: #{tpu_custom_call.1} parent=63 // pred_check_branch
          %3255 = sbr.rel (%p3253) target = $region68
        $region67: #{tpu_custom_call.1} parent=63 // pred_region
          %s3256 = smul.u32 4, %s27
          %s3258 = ssub.s32 64, 64
          %3259 = vsyncadd %s3249, %s3258
          %s3260 = smul.addr %s3256, 16
          %s3261 = scalar_lea.hbm %s11, %s3260
          %s3263 = sshll.u32 %s3252, 4
          %s3264 = int_to_ptr.vmem [resolvable:$true] %s3263
          %3266 = dma.vmem_to_hbm [thread:$0]  %s3264, 64, %s3261, %s3249
        $region68: #{tpu_custom_call.1} parent=63 // pred_fallthru
          _
      $region64: #{tpu_custom_call.1} parent=5 // pred_fallthru
        _
      %p3267 = scmp.le.s32.totalorder 2, %s22
      // Predicated region
      $region69: #{tpu_custom_call.1} parent=5 // pred_check
        %p3268 = pneg %p3267
      $region70: #{tpu_custom_call.1} parent=5 // pred_check_branch
        %3270 = sbr.rel (%p3268) target = $region72
      $region71: #{tpu_custom_call.1} parent=5 // pred_region
        %s3271 = ssub.s32 %s22, 2
        // Predicated region
        $region73: #{tpu_custom_call.1} parent=71 // pred_check
          %p3272 = pneg %p297
        $region74: #{tpu_custom_call.1} parent=71 // pred_check_branch
          %3274 = sbr.rel (%p3272) target = $region76
        $region75: #{tpu_custom_call.1} parent=71 // pred_region
          %s3275 = sand.u32 %s282, 1
          %s3276 = scalar_lea.sflag [#allocation4], %s3275
          %s3277 = sand.u32 %s282, 1
          %s3278 = smul.addr %s3277, 4
          %s3279 = scalar_lea.vmem [#allocation3], %s3278
          %3280 = dma.done %s3276, 64
        $region76: #{tpu_custom_call.1} parent=71 // pred_fallthru
          _
      $region72: #{tpu_custom_call.1} parent=5 // pred_fallthru
        _
    $region6: #{tpu_custom_call.1} parent=1 // loop_footer
      %s26 = sadd.s32 1, %s22
    $region7: #{tpu_custom_call.1} parent=1 // loop_footer_branch
      %21 = sbr.rel target = $region3
    $region8: #{tpu_custom_call.1} parent=1 // loop_exit
      _
    %3281 = vsyncpa [#allocation4], 1
    %s3282 = scalar_lea.sflag [#allocation4], 1
    %3283 = vsyncpa %s3282, 1

</llo_original>
